<compile_context>
chip_gen: v6e
topology: v6e:2x2x1
jax: 0.10.0
libtpu: 0.0.40
codegen_flags: <defaults>
</compile_context>

<pallas_src>
import jax
import jax.numpy as jnp
from jax.experimental import pallas as pl
from jax.experimental.pallas import tpu as pltpu

_IN = 28 * 28      # 784
_H1 = 512
_H2 = 256
_OUT_PAD = 128     # lane-dense padded width of the final (logically 1-wide) layer


def _disc_kernel(x_ref, w1_ref, b1_ref, w2_ref, b2_ref, w3_ref, b3_ref, o_ref):
    # Layer 1: (TB,784)bf16 @ (784,512)bf16 -> f32 acc, bias + LeakyReLU in f32
    h1 = jnp.dot(x_ref[...], w1_ref[...], preferred_element_type=jnp.float32)
    h1 = h1 + b1_ref[...]
    h1 = jnp.where(h1 > 0, h1, 0.2 * h1)

    # Layer 2: (TB,512)bf16 @ (512,256)bf16 -> f32
    h2 = jnp.dot(h1.astype(jnp.bfloat16), w2_ref[...],
                 preferred_element_type=jnp.float32)
    h2 = h2 + b2_ref[...]
    h2 = jnp.where(h2 > 0, h2, 0.2 * h2)

    # Layer 3 (lane-dense padded): (TB,256)bf16 @ (256,128)bf16 -> f32
    h3 = jnp.dot(h2.astype(jnp.bfloat16), w3_ref[...],
                 preferred_element_type=jnp.float32)
    h3 = h3 + b3_ref[...]

    # Sigmoid on the EUP path; only column 0 is meaningful (sliced in wrapper).
    o_ref[...] = jax.nn.sigmoid(h3).astype(o_ref.dtype)


def discriminator_forward(img, params, *, tb=256):
    """img: (B, 1, 28, 28) float-like NCHW. Returns (B, 1) validity in [0, 1]."""
    w1, b1, w2, b2, w3, b3 = params
    B = img.shape[0]

    # Flatten like torch .view(B, -1); bf16 operands for the MXU.
    x = img.reshape(B, -1).astype(jnp.bfloat16)

    # Pad batch up to a multiple of the MXU-native tile.
    n_tiles = pl.cdiv(B, tb)
    b_pad = n_tiles * tb
    if b_pad != B:
        x = jnp.pad(x, ((0, b_pad - B), (0, 0)))

    # Pad the 256->1 layer to 256->128 (zeros) for a lane-dense output block.
    w3p = jnp.zeros((_H2, _OUT_PAD), w3.dtype).at[:, :1].set(w3)
    b3p = jnp.zeros((1, _OUT_PAD), b3.dtype).at[:, :1].set(b3)

    flops = int(2 * b_pad * (_IN * _H1 + _H1 * _H2 + _H2 * _OUT_PAD))
    bytes_accessed = int(
        x.size * 2                                   # bf16 activations in
        + (w1.size + w2.size + w3p.size) * 2         # bf16 weights
        + (b1.size + b2.size + b3p.size) * 4         # f32 biases
        + b_pad * _OUT_PAD * 4                       # f32 output
    )

    out = pl.pallas_call(
        _disc_kernel,
        out_shape=jax.ShapeDtypeStruct((b_pad, _OUT_PAD), jnp.float32),
        grid_spec=pltpu.PrefetchScalarGridSpec(
            num_scalar_prefetch=0,
            grid=(n_tiles,),
            in_specs=[
                pl.BlockSpec((tb, _IN), lambda i: (i, 0)),          # x tile
                pl.BlockSpec((_IN, _H1), lambda i: (0, 0)),         # w1 (resident)
                pl.BlockSpec((1, _H1), lambda i: (0, 0)),           # b1
                pl.BlockSpec((_H1, _H2), lambda i: (0, 0)),         # w2
                pl.BlockSpec((1, _H2), lambda i: (0, 0)),           # b2
                pl.BlockSpec((_H2, _OUT_PAD), lambda i: (0, 0)),    # w3 (padded)
                pl.BlockSpec((1, _OUT_PAD), lambda i: (0, 0)),      # b3 (padded)
            ],
            out_specs=pl.BlockSpec((tb, _OUT_PAD), lambda i: (i, 0)),
        ),
        compiler_params=pltpu.CompilerParams(
            dimension_semantics=("parallel",),
        ),
        cost_estimate=pl.CostEstimate(
            flops=flops,
            transcendentals=int(b_pad * _OUT_PAD),
            bytes_accessed=bytes_accessed,
        ),
    )(x, w1, b1, w2, b2, w3p, b3p)

    # Strip batch padding and the lane padding of the final layer.
    return out[:B, :1]


def init_params(key):
    """Deterministic init matching nn.Linear shapes.

    Weights stored as (in, out) bf16 (kernel computes x @ W, equivalent to
    torch's x @ W.T with W (out, in)); biases stored as (1, out) f32.
    """
    k1, k2, k3, k4, k5, k6 = jax.random.split(key, 6)

    def _uniform(k, shape, fan_in, dtype):
        bound = 1.0 / jnp.sqrt(fan_in)
        return jax.random.uniform(k, shape, jnp.float32, -bound, bound).astype(dtype)

    w1 = _uniform(k1, (_IN, _H1), 784.0, jnp.bfloat16)
    b1 = _uniform(k2, (1, _H1), 784.0, jnp.float32)
    w2 = _uniform(k3, (_H1, _H2), 512.0, jnp.bfloat16)
    b2 = _uniform(k4, (1, _H2), 512.0, jnp.float32)
    w3 = _uniform(k5, (_H2, 1), 256.0, jnp.bfloat16)
    b3 = _uniform(k6, (1, 1), 256.0, jnp.float32)
    return (w1, b1, w2, b2, w3, b3)


def _reference_forward(img, params):
    """Pure-JAX f32 reference for correctness checking."""
    w1, b1, w2, b2, w3, b3 = params
    x = img.reshape(img.shape[0], -1).astype(jnp.float32)
    h1 = x @ w1.astype(jnp.float32) + b1
    h1 = jnp.where(h1 > 0, h1, 0.2 * h1)
    h2 = h1 @ w2.astype(jnp.float32) + b2
    h2 = jnp.where(h2 > 0, h2, 0.2 * h2)
    h3 = h2 @ w3.astype(jnp.float32) + b3
    return jax.nn.sigmoid(h3)


if __name__ == "__main__":
    key = jax.random.PRNGKey(0)
    k_img, k_params = jax.random.split(key)

    B = 8
    img = jax.random.normal(k_img, (B, 1, 28, 28), dtype=jnp.float32)  # NCHW
    params = init_params(k_params)

    out = discriminator_forward(img, params)
    out = jax.block_until_ready(out)

    ref = _reference_forward(img, params)
    assert out.shape == (B, 1), out.shape
    # bf16 matmul operands vs f32 reference: allow ~1e-2 abs error on a [0,1] output.
    max_err = jnp.max(jnp.abs(out - ref))
    assert jnp.all(jnp.isfinite(out)), "non-finite output"
    assert max_err < 2e-2, f"max abs err {max_err}"

    print("KERNEL_OK")
</pallas_src>

<mosaic_0001>
module attributes {stable_mosaic.version = 11 : i64} {
  func.func @_disc_kernel(%arg0: i32, %arg1: memref<256x784xbf16, #tpu.memory_space<vmem>>, %arg2: memref<784x512xbf16, #tpu.memory_space<vmem>>, %arg3: memref<1x512xf32, #tpu.memory_space<vmem>>, %arg4: memref<512x256xbf16, #tpu.memory_space<vmem>>, %arg5: memref<1x256xf32, #tpu.memory_space<vmem>>, %arg6: memref<256x128xbf16, #tpu.memory_space<vmem>>, %arg7: memref<1x128xf32, #tpu.memory_space<vmem>>, %arg8: memref<256x128xf32, #tpu.memory_space<vmem>>) attributes {dimension_semantics = [#tpu.dimension_semantics<parallel>], iteration_bounds = array<i64: 1>, scalar_prefetch = 0 : i64, scratch_operands = 0 : i64, tpu.core_type = #tpu.core_type<tc>, window_params = [{transform_indices = @transform_0, window_bounds = array<i64: 256, 784>}, {pipeline_mode = #tpu.pipeline_mode<synchronous>, transform_indices = @transform_1, window_bounds = array<i64: 784, 512>}, {pipeline_mode = #tpu.pipeline_mode<synchronous>, transform_indices = @transform_2, window_bounds = array<i64: 1, 512>}, {pipeline_mode = #tpu.pipeline_mode<synchronous>, transform_indices = @transform_3, window_bounds = array<i64: 512, 256>}, {pipeline_mode = #tpu.pipeline_mode<synchronous>, transform_indices = @transform_4, window_bounds = array<i64: 1, 256>}, {pipeline_mode = #tpu.pipeline_mode<synchronous>, transform_indices = @transform_5, window_bounds = array<i64: 256, 128>}, {pipeline_mode = #tpu.pipeline_mode<synchronous>, transform_indices = @transform_6, window_bounds = array<i64: 1, 128>}, {transform_indices = @transform_7, window_bounds = array<i64: 256, 128>}]} {
    %c0 = arith.constant 0 : index
    %c0_0 = arith.constant 0 : index
    %0 = vector.load %arg1[%c0, %c0_0] : memref<256x784xbf16, #tpu.memory_space<vmem>>, vector<256x784xbf16>
    %c0_1 = arith.constant 0 : index
    %c0_2 = arith.constant 0 : index
    %1 = vector.load %arg2[%c0_1, %c0_2] : memref<784x512xbf16, #tpu.memory_space<vmem>>, vector<784x512xbf16>
    %cst = arith.constant dense<0.000000e+00> : vector<256x512xf32>
    %2 = tpu.matmul %0, %1, %cst {dimension_numbers = #tpu.dot_dimension_numbers<[1], [0], [0], [1], [0, 0, 1, 1], [], []>} : vector<256x784xbf16>, vector<784x512xbf16>, vector<256x512xf32> -> vector<256x512xf32>
    %c0_3 = arith.constant 0 : index
    %c0_4 = arith.constant 0 : index
    %3 = vector.load %arg3[%c0_3, %c0_4] : memref<1x512xf32, #tpu.memory_space<vmem>>, vector<1x512xf32>
    %4 = vector.broadcast %3 : vector<1x512xf32> to vector<256x512xf32>
    %5 = arith.addf %2, %4 : vector<256x512xf32>
    %cst_5 = arith.constant 0.000000e+00 : f32
    %6 = vector.broadcast %cst_5 : f32 to vector<256x512xf32>
    %7 = arith.cmpf ogt, %5, %6 : vector<256x512xf32>
    %cst_6 = arith.constant 2.000000e-01 : f32
    %8 = vector.broadcast %cst_6 : f32 to vector<256x512xf32>
    %9 = arith.mulf %8, %5 : vector<256x512xf32>
    %10 = arith.select %7, %5, %9 : vector<256x512xi1>, vector<256x512xf32>
    %11 = arith.truncf %10 : vector<256x512xf32> to vector<256x512xbf16>
    %c0_7 = arith.constant 0 : index
    %c0_8 = arith.constant 0 : index
    %12 = vector.load %arg4[%c0_7, %c0_8] : memref<512x256xbf16, #tpu.memory_space<vmem>>, vector<512x256xbf16>
    %cst_9 = arith.constant dense<0.000000e+00> : vector<256x256xf32>
    %13 = tpu.matmul %11, %12, %cst_9 {dimension_numbers = #tpu.dot_dimension_numbers<[1], [0], [0], [1], [0, 0, 1, 1], [], []>} : vector<256x512xbf16>, vector<512x256xbf16>, vector<256x256xf32> -> vector<256x256xf32>
    %c0_10 = arith.constant 0 : index
    %c0_11 = arith.constant 0 : index
    %14 = vector.load %arg5[%c0_10, %c0_11] : memref<1x256xf32, #tpu.memory_space<vmem>>, vector<1x256xf32>
    %15 = vector.broadcast %14 : vector<1x256xf32> to vector<256x256xf32>
    %16 = arith.addf %13, %15 : vector<256x256xf32>
    %cst_12 = arith.constant 0.000000e+00 : f32
    %17 = vector.broadcast %cst_12 : f32 to vector<256x256xf32>
    %18 = arith.cmpf ogt, %16, %17 : vector<256x256xf32>
    %cst_13 = arith.constant 2.000000e-01 : f32
    %19 = vector.broadcast %cst_13 : f32 to vector<256x256xf32>
    %20 = arith.mulf %19, %16 : vector<256x256xf32>
    %21 = arith.select %18, %16, %20 : vector<256x256xi1>, vector<256x256xf32>
    %22 = arith.truncf %21 : vector<256x256xf32> to vector<256x256xbf16>
    %c0_14 = arith.constant 0 : index
    %c0_15 = arith.constant 0 : index
    %23 = vector.load %arg6[%c0_14, %c0_15] : memref<256x128xbf16, #tpu.memory_space<vmem>>, vector<256x128xbf16>
    %cst_16 = arith.constant dense<0.000000e+00> : vector<256x128xf32>
    %24 = tpu.matmul %22, %23, %cst_16 {dimension_numbers = #tpu.dot_dimension_numbers<[1], [0], [0], [1], [0, 0, 1, 1], [], []>} : vector<256x256xbf16>, vector<256x128xbf16>, vector<256x128xf32> -> vector<256x128xf32>
    %c0_17 = arith.constant 0 : index
    %c0_18 = arith.constant 0 : index
    %25 = vector.load %arg7[%c0_17, %c0_18] : memref<1x128xf32, #tpu.memory_space<vmem>>, vector<1x128xf32>
    %26 = vector.broadcast %25 : vector<1x128xf32> to vector<256x128xf32>
    %27 = arith.addf %24, %26 : vector<256x128xf32>
    %28 = arith.negf %27 : vector<256x128xf32>
    %29 = math.exp %28 : vector<256x128xf32>
    %cst_19 = arith.constant 1.000000e+00 : f32
    %30 = vector.broadcast %cst_19 : f32 to vector<256x128xf32>
    %31 = arith.addf %30, %29 : vector<256x128xf32>
    %32 = arith.divf %30, %31 : vector<256x128xf32>
    %c0_20 = arith.constant 0 : index
    %c0_21 = arith.constant 0 : index
    %33 = vector.load %arg8[%c0_20, %c0_21] : memref<256x128xf32, #tpu.memory_space<vmem>>, vector<256x128xf32>
    tpu.vector_store %arg8[%c0_20, %c0_21], %32 {strides = array<i32>} : memref<256x128xf32, #tpu.memory_space<vmem>>, vector<256x128xf32>,
    return
  }
  func.func @transform_0(%arg0: i32) -> (i32, i32) {
    %c0_i32 = arith.constant 0 : i32
    %c0_i32_0 = arith.constant 0 : i32
    return %arg0, %c0_i32 : i32, i32
  }
  func.func @transform_1(%arg0: i32) -> (i32, i32) {
    %c0_i32 = arith.constant 0 : i32
    %c0_i32_0 = arith.constant 0 : i32
    %c0_i32_1 = arith.constant 0 : i32
    return %c0_i32, %c0_i32_0 : i32, i32
  }
  func.func @transform_2(%arg0: i32) -> (i32, i32) {
    %c0_i32 = arith.constant 0 : i32
    %c0_i32_0 = arith.constant 0 : i32
    %c0_i32_1 = arith.constant 0 : i32
    return %c0_i32, %c0_i32_0 : i32, i32
  }
  func.func @transform_3(%arg0: i32) -> (i32, i32) {
    %c0_i32 = arith.constant 0 : i32
    %c0_i32_0 = arith.constant 0 : i32
    %c0_i32_1 = arith.constant 0 : i32
    return %c0_i32, %c0_i32_0 : i32, i32
  }
  func.func @transform_4(%arg0: i32) -> (i32, i32) {
    %c0_i32 = arith.constant 0 : i32
    %c0_i32_0 = arith.constant 0 : i32
    %c0_i32_1 = arith.constant 0 : i32
    return %c0_i32, %c0_i32_0 : i32, i32
  }
  func.func @transform_5(%arg0: i32) -> (i32, i32) {
    %c0_i32 = arith.constant 0 : i32
    %c0_i32_0 = arith.constant 0 : i32
    %c0_i32_1 = arith.constant 0 : i32
    return %c0_i32, %c0_i32_0 : i32, i32
  }
  func.func @transform_6(%arg0: i32) -> (i32, i32) {
    %c0_i32 = arith.constant 0 : i32
    %c0_i32_0 = arith.constant 0 : i32
    %c0_i32_1 = arith.constant 0 : i32
    return %c0_i32, %c0_i32_0 : i32, i32
  }
  func.func @transform_7(%arg0: i32) -> (i32, i32) {
    %c0_i32 = arith.constant 0 : i32
    %c0_i32_0 = arith.constant 0 : i32
    return %arg0, %c0_i32 : i32, i32
  }
}

</mosaic_0001>

<llo_original>
// kernel: tpu_custom_call.1
$region0: #{tpu_custom_call.1}
  #allocation0 [shape = 'u32[]', space=smem, size = 0x4, offset = 0x4, fixed_abs, tag = 'smem constant byte address 0x4 - core index']
  #allocation1 [shape = 'u32[144,128]{1,0:T(1,128)}', space=vmem, size = 0x12000, scoped, tag = 'internal scratch']
  %s0 = inlined_call_operand.vmem [shape: bf16[256,784], index: 0, kind: input, shape index: {}]
  %s1 = inlined_call_operand.vmem [shape: bf16[784,512], index: 1, kind: input, shape index: {}]
  %s2 = inlined_call_operand.vmem [shape: f32[1,512], index: 2, kind: input, shape index: {}]
  %s3 = inlined_call_operand.hbm [shape: bf16[512,256], index: 3, kind: input, shape index: {}]
  %s4 = inlined_call_operand.vmem [shape: f32[1,256], index: 4, kind: input, shape index: {}]
  %s5 = inlined_call_operand.hbm [shape: bf16[256,128], index: 5, kind: input, shape index: {}]
  %s6 = inlined_call_operand.vmem [shape: f32[1,128], index: 6, kind: input, shape index: {}]
  %s7 = inlined_call_operand.hbm [shape: f32[256,128], index: 7, kind: output, shape index: {}]
  %s8 = sld [smem:[#allocation0]]
  $region46: #{tpu_custom_call.1} parent=0
    _
  %s10 = ssub.s32 1, %s8
  %s11 = scalar_select 0, %s10, %s8
  $region1: #{tpu_custom_call.1} parent=0
    #allocation2 [shape = 'u8[262144]{0}', space=vmem, size = 0x40000, scoped, tag = 'input window, operand 3, single buffered']
    #allocation3 [shape = 's32[1]{0}', space=sflag, size = 0x4, scoped, tag = 'scoped memory for tpu_custom_call.1']
    #allocation4 [shape = 's32[1]{0}', space=sflag, size = 0x4, scoped, tag = 'scoped memory for tpu_custom_call.1']
    #allocation5 [shape = 'u8[65536]{0}', space=vmem, size = 0x10000, scoped, tag = 'input window, operand 5, single buffered']
    #allocation6 [shape = 's32[1]{0}', space=sflag, size = 0x4, scoped, tag = 'scoped memory for tpu_custom_call.1']
    #allocation7 [shape = 'u8[131072]{0}', space=vmem, size = 0x20000, scoped, tag = 'output window, operand 0, single buffered']
    %12 = vsyncpa [#allocation3], 0
    %13 = vsyncpa [#allocation6], 0
    %14 = vsyncpa [#allocation4], 0
    // Predicated region
    $region2: #{tpu_custom_call.1} parent=1 // pred_check
      _
    $region3: #{tpu_custom_call.1} parent=1 // pred_check_branch
      %16 = sbr.rel (0) target = $region5
    $region4: #{tpu_custom_call.1} parent=1 // pred_region
      _
    $region5: #{tpu_custom_call.1} parent=1 // pred_fallthru
      _
    // Predicated region
    $region6: #{tpu_custom_call.1} parent=1 // pred_check
      _
    $region7: #{tpu_custom_call.1} parent=1 // pred_check_branch
      %18 = sbr.rel (0) target = $region9
    $region8: #{tpu_custom_call.1} parent=1 // pred_region
      _
    $region9: #{tpu_custom_call.1} parent=1 // pred_fallthru
      _
    // Predicated region
    $region10: #{tpu_custom_call.1} parent=1 // pred_check
      _
    $region11: #{tpu_custom_call.1} parent=1 // pred_check_branch
      %20 = sbr.rel (0) target = $region13
    $region12: #{tpu_custom_call.1} parent=1 // pred_region
      _
    $region13: #{tpu_custom_call.1} parent=1 // pred_fallthru
      _
    // Predicated region
    $region14: #{tpu_custom_call.1} parent=1 // pred_check
      _
    $region15: #{tpu_custom_call.1} parent=1 // pred_check_branch
      %22 = sbr.rel (0) target = $region17
    $region16: #{tpu_custom_call.1} parent=1 // pred_region
      %s24 = ssub.s32 8192, 8192
      %25 = vsyncadd [#allocation3], %s24
      %s26 = sshll.u32 [#allocation2], 4
      %s27 = int_to_ptr.vmem [resolvable:$true] %s26
      %32 = dma.hbm_to_vmem [thread:$0]  %s3, 8192, %s27, [#allocation3], 128, 128, 8
    $region17: #{tpu_custom_call.1} parent=1 // pred_fallthru
      _
    // Predicated region
    $region18: #{tpu_custom_call.1} parent=1 // pred_check
      _
    $region19: #{tpu_custom_call.1} parent=1 // pred_check_branch
      %34 = sbr.rel (0) target = $region21
    $region20: #{tpu_custom_call.1} parent=1 // pred_region
      _
    $region21: #{tpu_custom_call.1} parent=1 // pred_fallthru
      _
    // Predicated region
    $region22: #{tpu_custom_call.1} parent=1 // pred_check
      _
    $region23: #{tpu_custom_call.1} parent=1 // pred_check_branch
      %36 = sbr.rel (0) target = $region25
    $region24: #{tpu_custom_call.1} parent=1 // pred_region
      %s38 = ssub.s32 2048, 2048
      %39 = vsyncadd [#allocation6], %s38
      %s40 = sshll.u32 [#allocation5], 4
      %s41 = int_to_ptr.vmem [resolvable:$true] %s40
      %46 = dma.hbm_to_vmem [thread:$0]  %s5, 2048, %s41, [#allocation6], 64, 64, 4
    $region25: #{tpu_custom_call.1} parent=1 // pred_fallthru
      _
    // Predicated region
    $region26: #{tpu_custom_call.1} parent=1 // pred_check
      _
    $region27: #{tpu_custom_call.1} parent=1 // pred_check_branch
      %48 = sbr.rel (0) target = $region29
    $region28: #{tpu_custom_call.1} parent=1 // pred_region
      _
    $region29: #{tpu_custom_call.1} parent=1 // pred_fallthru
      _
    // Predicated region
    $region30: #{tpu_custom_call.1} parent=1 // pred_check
      _
    $region31: #{tpu_custom_call.1} parent=1 // pred_check_branch
      %50 = sbr.rel (0) target = $region33
    $region32: #{tpu_custom_call.1} parent=1 // pred_region
      %51 = dma.done [#allocation3], 8192
    $region33: #{tpu_custom_call.1} parent=1 // pred_fallthru
      _
    // Predicated region
    $region34: #{tpu_custom_call.1} parent=1 // pred_check
      _
    $region35: #{tpu_custom_call.1} parent=1 // pred_check_branch
      %53 = sbr.rel (0) target = $region37
    $region36: #{tpu_custom_call.1} parent=1 // pred_region
      %54 = dma.done [#allocation6], 2048
    $region37: #{tpu_custom_call.1} parent=1 // pred_fallthru
      _
    %v56 = vld [vmem:[%s0] sm:$0xff]
    %v57 = vld [vmem:[%s0 + $0x8] sm:$0xff]
    %v58 = vld [vmem:[%s0 + $0x10] sm:$0xff]
    %v59 = vld [vmem:[%s0 + $0x18] sm:$0xf]
    %v60 = vld [vmem:[%s0 + $0x1c] sm:$0xff]
    %v61 = vld [vmem:[%s0 + $0x24] sm:$0xff]
    %v62 = vld [vmem:[%s0 + $0x2c] sm:$0xff]
    %v63 = vld [vmem:[%s0 + $0x34] sm:$0xf]
    %v64 = vld [vmem:[%s0 + $0x38] sm:$0xff]
    %v65 = vld [vmem:[%s0 + $0x40] sm:$0xff]
    %v66 = vld [vmem:[%s0 + $0x48] sm:$0xff]
    %v67 = vld [vmem:[%s0 + $0x50] sm:$0xf]
    %v68 = vld [vmem:[%s0 + $0x54] sm:$0xff]
    %v69 = vld [vmem:[%s0 + $0x5c] sm:$0xff]
    %v70 = vld [vmem:[%s0 + $0x64] sm:$0xff]
    %v71 = vld [vmem:[%s0 + $0x6c] sm:$0xf]
    %v72 = vld [vmem:[%s0 + $0x70] sm:$0xff]
    %v73 = vld [vmem:[%s0 + $0x78] sm:$0xff]
    %v74 = vld [vmem:[%s0 + $0x80] sm:$0xff]
    %v75 = vld [vmem:[%s0 + $0x88] sm:$0xf]
    %v76 = vld [vmem:[%s0 + $0x8c] sm:$0xff]
    %v77 = vld [vmem:[%s0 + $0x94] sm:$0xff]
    %v78 = vld [vmem:[%s0 + $0x9c] sm:$0xff]
    %v79 = vld [vmem:[%s0 + $0xa4] sm:$0xf]
    %v80 = vld [vmem:[%s0 + $0xa8] sm:$0xff]
    %v81 = vld [vmem:[%s0 + $0xb0] sm:$0xff]
    %v82 = vld [vmem:[%s0 + $0xb8] sm:$0xff]
    %v83 = vld [vmem:[%s0 + $0xc0] sm:$0xf]
    %v84 = vld [vmem:[%s0 + $0xc4] sm:$0xff]
    %v85 = vld [vmem:[%s0 + $0xcc] sm:$0xff]
    %v86 = vld [vmem:[%s0 + $0xd4] sm:$0xff]
    %v87 = vld [vmem:[%s0 + $0xdc] sm:$0xf]
    %v88 = vld [vmem:[%s0 + $0xe0] sm:$0xff]
    %v89 = vld [vmem:[%s0 + $0xe8] sm:$0xff]
    %v90 = vld [vmem:[%s0 + $0xf0] sm:$0xff]
    %v91 = vld [vmem:[%s0 + $0xf8] sm:$0xf]
    %v92 = vld [vmem:[%s0 + $0xfc] sm:$0xff]
    %v93 = vld [vmem:[%s0 + $0x104] sm:$0xff]
    %v94 = vld [vmem:[%s0 + $0x10c] sm:$0xff]
    %v95 = vld [vmem:[%s0 + $0x114] sm:$0xf]
    %v96 = vld [vmem:[%s0 + $0x118] sm:$0xff]
    %v97 = vld [vmem:[%s0 + $0x120] sm:$0xff]
    %v98 = vld [vmem:[%s0 + $0x128] sm:$0xff]
    %v99 = vld [vmem:[%s0 + $0x130] sm:$0xf]
    %v100 = vld [vmem:[%s0 + $0x134] sm:$0xff]
    %v101 = vld [vmem:[%s0 + $0x13c] sm:$0xff]
    %v102 = vld [vmem:[%s0 + $0x144] sm:$0xff]
    %v103 = vld [vmem:[%s0 + $0x14c] sm:$0xf]
    %v104 = vld [vmem:[%s0 + $0x150] sm:$0xff]
    %v105 = vld [vmem:[%s0 + $0x158] sm:$0xff]
    %v106 = vld [vmem:[%s0 + $0x160] sm:$0xff]
    %v107 = vld [vmem:[%s0 + $0x168] sm:$0xf]
    %v108 = vld [vmem:[%s0 + $0x16c] sm:$0xff]
    %v109 = vld [vmem:[%s0 + $0x174] sm:$0xff]
    %v110 = vld [vmem:[%s0 + $0x17c] sm:$0xff]
    %v111 = vld [vmem:[%s0 + $0x184] sm:$0xf]
    %v112 = vld [vmem:[%s0 + $0x188] sm:$0xff]
    %v113 = vld [vmem:[%s0 + $0x190] sm:$0xff]
    %v114 = vld [vmem:[%s0 + $0x198] sm:$0xff]
    %v115 = vld [vmem:[%s0 + $0x1a0] sm:$0xf]
    %v116 = vld [vmem:[%s0 + $0x1a4] sm:$0xff]
    %v117 = vld [vmem:[%s0 + $0x1ac] sm:$0xff]
    %v118 = vld [vmem:[%s0 + $0x1b4] sm:$0xff]
    %v119 = vld [vmem:[%s0 + $0x1bc] sm:$0xf]
    %v120 = vld [vmem:[%s0 + $0x1c0] sm:$0xff]
    %v121 = vld [vmem:[%s0 + $0x1c8] sm:$0xff]
    %v122 = vld [vmem:[%s0 + $0x1d0] sm:$0xff]
    %v123 = vld [vmem:[%s0 + $0x1d8] sm:$0xf]
    %v124 = vld [vmem:[%s0 + $0x1dc] sm:$0xff]
    %v125 = vld [vmem:[%s0 + $0x1e4] sm:$0xff]
    %v126 = vld [vmem:[%s0 + $0x1ec] sm:$0xff]
    %v127 = vld [vmem:[%s0 + $0x1f4] sm:$0xf]
    %v128 = vld [vmem:[%s0 + $0x1f8] sm:$0xff]
    %v129 = vld [vmem:[%s0 + $0x200] sm:$0xff]
    %v130 = vld [vmem:[%s0 + $0x208] sm:$0xff]
    %v131 = vld [vmem:[%s0 + $0x210] sm:$0xf]
    %v132 = vld [vmem:[%s0 + $0x214] sm:$0xff]
    %v133 = vld [vmem:[%s0 + $0x21c] sm:$0xff]
    %v134 = vld [vmem:[%s0 + $0x224] sm:$0xff]
    %v135 = vld [vmem:[%s0 + $0x22c] sm:$0xf]
    %v136 = vld [vmem:[%s0 + $0x230] sm:$0xff]
    %v137 = vld [vmem:[%s0 + $0x238] sm:$0xff]
    %v138 = vld [vmem:[%s0 + $0x240] sm:$0xff]
    %v139 = vld [vmem:[%s0 + $0x248] sm:$0xf]
    %v140 = vld [vmem:[%s0 + $0x24c] sm:$0xff]
    %v141 = vld [vmem:[%s0 + $0x254] sm:$0xff]
    %v142 = vld [vmem:[%s0 + $0x25c] sm:$0xff]
    %v143 = vld [vmem:[%s0 + $0x264] sm:$0xf]
    %v144 = vld [vmem:[%s0 + $0x268] sm:$0xff]
    %v145 = vld [vmem:[%s0 + $0x270] sm:$0xff]
    %v146 = vld [vmem:[%s0 + $0x278] sm:$0xff]
    %v147 = vld [vmem:[%s0 + $0x280] sm:$0xf]
    %v148 = vld [vmem:[%s0 + $0x284] sm:$0xff]
    %v149 = vld [vmem:[%s0 + $0x28c] sm:$0xff]
    %v150 = vld [vmem:[%s0 + $0x294] sm:$0xff]
    %v151 = vld [vmem:[%s0 + $0x29c] sm:$0xf]
    %v152 = vld [vmem:[%s0 + $0x2a0] sm:$0xff]
    %v153 = vld [vmem:[%s0 + $0x2a8] sm:$0xff]
    %v154 = vld [vmem:[%s0 + $0x2b0] sm:$0xff]
    %v155 = vld [vmem:[%s0 + $0x2b8] sm:$0xf]
    %v156 = vld [vmem:[%s0 + $0x2bc] sm:$0xff]
    %v157 = vld [vmem:[%s0 + $0x2c4] sm:$0xff]
    %v158 = vld [vmem:[%s0 + $0x2cc] sm:$0xff]
    %v159 = vld [vmem:[%s0 + $0x2d4] sm:$0xf]
    %v160 = vld [vmem:[%s0 + $0x2d8] sm:$0xff]
    %v161 = vld [vmem:[%s0 + $0x2e0] sm:$0xff]
    %v162 = vld [vmem:[%s0 + $0x2e8] sm:$0xff]
    %v163 = vld [vmem:[%s0 + $0x2f0] sm:$0xf]
    %v164 = vld [vmem:[%s0 + $0x2f4] sm:$0xff]
    %v165 = vld [vmem:[%s0 + $0x2fc] sm:$0xff]
    %v166 = vld [vmem:[%s0 + $0x304] sm:$0xff]
    %v167 = vld [vmem:[%s0 + $0x30c] sm:$0xf]
    %v168 = vld [vmem:[%s0 + $0x310] sm:$0xff]
    %v169 = vld [vmem:[%s0 + $0x318] sm:$0xff]
    %v170 = vld [vmem:[%s0 + $0x320] sm:$0xff]
    %v171 = vld [vmem:[%s0 + $0x328] sm:$0xf]
    %v172 = vld [vmem:[%s0 + $0x32c] sm:$0xff]
    %v173 = vld [vmem:[%s0 + $0x334] sm:$0xff]
    %v174 = vld [vmem:[%s0 + $0x33c] sm:$0xff]
    %v175 = vld [vmem:[%s0 + $0x344] sm:$0xf]
    %v176 = vld [vmem:[%s0 + $0x348] sm:$0xff]
    %v177 = vld [vmem:[%s0 + $0x350] sm:$0xff]
    %v178 = vld [vmem:[%s0 + $0x358] sm:$0xff]
    %v179 = vld [vmem:[%s0 + $0x360] sm:$0xf]
    %v180 = vld [vmem:[%s0 + $0x364] sm:$0xff]
    %v181 = vld [vmem:[%s0 + $0x36c] sm:$0xff]
    %v182 = vld [vmem:[%s0 + $0x374] sm:$0xff]
    %v183 = vld [vmem:[%s0 + $0x37c] sm:$0xf]
    %v184 = vld [vmem:[%s1] sm:$0xff]
    %v185 = vld [vmem:[%s1 + $0x8] sm:$0xff]
    %v186 = vld [vmem:[%s1 + $0x10] sm:$0xff]
    %v187 = vld [vmem:[%s1 + $0x18] sm:$0xff]
    %v188 = vld [vmem:[%s1 + $0x20] sm:$0xff]
    %v189 = vld [vmem:[%s1 + $0x28] sm:$0xff]
    %v190 = vld [vmem:[%s1 + $0x30] sm:$0xff]
    %v191 = vld [vmem:[%s1 + $0x38] sm:$0xff]
    %v192 = vld [vmem:[%s1 + $0x40] sm:$0xff]
    %v193 = vld [vmem:[%s1 + $0x48] sm:$0xff]
    %v194 = vld [vmem:[%s1 + $0x50] sm:$0xff]
    %v195 = vld [vmem:[%s1 + $0x58] sm:$0xff]
    %v196 = vld [vmem:[%s1 + $0x60] sm:$0xff]
    %v197 = vld [vmem:[%s1 + $0x68] sm:$0xff]
    %v198 = vld [vmem:[%s1 + $0x70] sm:$0xff]
    %v199 = vld [vmem:[%s1 + $0x78] sm:$0xff]
    %v200 = vld [vmem:[%s1 + $0x80] sm:$0xff]
    %v201 = vld [vmem:[%s1 + $0x88] sm:$0xff]
    %v202 = vld [vmem:[%s1 + $0x90] sm:$0xff]
    %v203 = vld [vmem:[%s1 + $0x98] sm:$0xff]
    %v204 = vld [vmem:[%s1 + $0xa0] sm:$0xff]
    %v205 = vld [vmem:[%s1 + $0xa8] sm:$0xff]
    %v206 = vld [vmem:[%s1 + $0xb0] sm:$0xff]
    %v207 = vld [vmem:[%s1 + $0xb8] sm:$0xff]
    %v208 = vld [vmem:[%s1 + $0xc0] sm:$0xff]
    %v209 = vld [vmem:[%s1 + $0xc8] sm:$0xff]
    %v210 = vld [vmem:[%s1 + $0xd0] sm:$0xff]
    %v211 = vld [vmem:[%s1 + $0xd8] sm:$0xff]
    %v212 = vld [vmem:[%s1 + $0xe0] sm:$0xff]
    %v213 = vld [vmem:[%s1 + $0xe8] sm:$0xff]
    %v214 = vld [vmem:[%s1 + $0xf0] sm:$0xff]
    %v215 = vld [vmem:[%s1 + $0xf8] sm:$0xff]
    %v216 = vld [vmem:[%s1 + $0x100] sm:$0xff]
    %v217 = vld [vmem:[%s1 + $0x108] sm:$0xff]
    %v218 = vld [vmem:[%s1 + $0x110] sm:$0xff]
    %v219 = vld [vmem:[%s1 + $0x118] sm:$0xff]
    %v220 = vld [vmem:[%s1 + $0x120] sm:$0xff]
    %v221 = vld [vmem:[%s1 + $0x128] sm:$0xff]
    %v222 = vld [vmem:[%s1 + $0x130] sm:$0xff]
    %v223 = vld [vmem:[%s1 + $0x138] sm:$0xff]
    %v224 = vld [vmem:[%s1 + $0x140] sm:$0xff]
    %v225 = vld [vmem:[%s1 + $0x148] sm:$0xff]
    %v226 = vld [vmem:[%s1 + $0x150] sm:$0xff]
    %v227 = vld [vmem:[%s1 + $0x158] sm:$0xff]
    %v228 = vld [vmem:[%s1 + $0x160] sm:$0xff]
    %v229 = vld [vmem:[%s1 + $0x168] sm:$0xff]
    %v230 = vld [vmem:[%s1 + $0x170] sm:$0xff]
    %v231 = vld [vmem:[%s1 + $0x178] sm:$0xff]
    %v232 = vld [vmem:[%s1 + $0x180] sm:$0xff]
    %v233 = vld [vmem:[%s1 + $0x188] sm:$0xff]
    %v234 = vld [vmem:[%s1 + $0x190] sm:$0xff]
    %v235 = vld [vmem:[%s1 + $0x198] sm:$0xff]
    %v236 = vld [vmem:[%s1 + $0x1a0] sm:$0xff]
    %v237 = vld [vmem:[%s1 + $0x1a8] sm:$0xff]
    %v238 = vld [vmem:[%s1 + $0x1b0] sm:$0xff]
    %v239 = vld [vmem:[%s1 + $0x1b8] sm:$0xff]
    %v240 = vld [vmem:[%s1 + $0x1c0] sm:$0xff]
    %v241 = vld [vmem:[%s1 + $0x1c8] sm:$0xff]
    %v242 = vld [vmem:[%s1 + $0x1d0] sm:$0xff]
    %v243 = vld [vmem:[%s1 + $0x1d8] sm:$0xff]
    %v244 = vld [vmem:[%s1 + $0x1e0] sm:$0xff]
    %v245 = vld [vmem:[%s1 + $0x1e8] sm:$0xff]
    %v246 = vld [vmem:[%s1 + $0x1f0] sm:$0xff]
    %v247 = vld [vmem:[%s1 + $0x1f8] sm:$0xff]
    %v248 = vld [vmem:[%s1 + $0x200] sm:$0xff]
    %v249 = vld [vmem:[%s1 + $0x208] sm:$0xff]
    %v250 = vld [vmem:[%s1 + $0x210] sm:$0xff]
    %v251 = vld [vmem:[%s1 + $0x218] sm:$0xff]
    %v252 = vld [vmem:[%s1 + $0x220] sm:$0xff]
    %v253 = vld [vmem:[%s1 + $0x228] sm:$0xff]
    %v254 = vld [vmem:[%s1 + $0x230] sm:$0xff]
    %v255 = vld [vmem:[%s1 + $0x238] sm:$0xff]
    %v256 = vld [vmem:[%s1 + $0x240] sm:$0xff]
    %v257 = vld [vmem:[%s1 + $0x248] sm:$0xff]
    %v258 = vld [vmem:[%s1 + $0x250] sm:$0xff]
    %v259 = vld [vmem:[%s1 + $0x258] sm:$0xff]
    %v260 = vld [vmem:[%s1 + $0x260] sm:$0xff]
    %v261 = vld [vmem:[%s1 + $0x268] sm:$0xff]
    %v262 = vld [vmem:[%s1 + $0x270] sm:$0xff]
    %v263 = vld [vmem:[%s1 + $0x278] sm:$0xff]
    %v264 = vld [vmem:[%s1 + $0x280] sm:$0xff]
    %v265 = vld [vmem:[%s1 + $0x288] sm:$0xff]
    %v266 = vld [vmem:[%s1 + $0x290] sm:$0xff]
    %v267 = vld [vmem:[%s1 + $0x298] sm:$0xff]
    %v268 = vld [vmem:[%s1 + $0x2a0] sm:$0xff]
    %v269 = vld [vmem:[%s1 + $0x2a8] sm:$0xff]
    %v270 = vld [vmem:[%s1 + $0x2b0] sm:$0xff]
    %v271 = vld [vmem:[%s1 + $0x2b8] sm:$0xff]
    %v272 = vld [vmem:[%s1 + $0x2c0] sm:$0xff]
    %v273 = vld [vmem:[%s1 + $0x2c8] sm:$0xff]
    %v274 = vld [vmem:[%s1 + $0x2d0] sm:$0xff]
    %v275 = vld [vmem:[%s1 + $0x2d8] sm:$0xff]
    %v276 = vld [vmem:[%s1 + $0x2e0] sm:$0xff]
    %v277 = vld [vmem:[%s1 + $0x2e8] sm:$0xff]
    %v278 = vld [vmem:[%s1 + $0x2f0] sm:$0xff]
    %v279 = vld [vmem:[%s1 + $0x2f8] sm:$0xff]
    %v280 = vld [vmem:[%s1 + $0x300] sm:$0xff]
    %v281 = vld [vmem:[%s1 + $0x308] sm:$0xff]
    %v282 = vld [vmem:[%s1 + $0x310] sm:$0xff]
    %v283 = vld [vmem:[%s1 + $0x318] sm:$0xff]
    %v284 = vld [vmem:[%s1 + $0x320] sm:$0xff]
    %v285 = vld [vmem:[%s1 + $0x328] sm:$0xff]
    %v286 = vld [vmem:[%s1 + $0x330] sm:$0xff]
    %v287 = vld [vmem:[%s1 + $0x338] sm:$0xff]
    %v288 = vld [vmem:[%s1 + $0x340] sm:$0xff]
    %v289 = vld [vmem:[%s1 + $0x348] sm:$0xff]
    %v290 = vld [vmem:[%s1 + $0x350] sm:$0xff]
    %v291 = vld [vmem:[%s1 + $0x358] sm:$0xff]
    %v292 = vld [vmem:[%s1 + $0x360] sm:$0xff]
    %v293 = vld [vmem:[%s1 + $0x368] sm:$0xff]
    %v294 = vld [vmem:[%s1 + $0x370] sm:$0xff]
    %v295 = vld [vmem:[%s1 + $0x378] sm:$0xff]
    %v296 = vld [vmem:[%s1 + $0x380] sm:$0xff]
    %v297 = vld [vmem:[%s1 + $0x388] sm:$0xff]
    %v298 = vld [vmem:[%s1 + $0x390] sm:$0xff]
    %v299 = vld [vmem:[%s1 + $0x398] sm:$0xff]
    %v300 = vld [vmem:[%s1 + $0x3a0] sm:$0xff]
    %v301 = vld [vmem:[%s1 + $0x3a8] sm:$0xff]
    %v302 = vld [vmem:[%s1 + $0x3b0] sm:$0xff]
    %v303 = vld [vmem:[%s1 + $0x3b8] sm:$0xff]
    %v304 = vld [vmem:[%s1 + $0x3c0] sm:$0xff]
    %v305 = vld [vmem:[%s1 + $0x3c8] sm:$0xff]
    %v306 = vld [vmem:[%s1 + $0x3d0] sm:$0xff]
    %v307 = vld [vmem:[%s1 + $0x3d8] sm:$0xff]
    %v308 = vld [vmem:[%s1 + $0x3e0] sm:$0xff]
    %v309 = vld [vmem:[%s1 + $0x3e8] sm:$0xff]
    %v310 = vld [vmem:[%s1 + $0x3f0] sm:$0xff]
    %v311 = vld [vmem:[%s1 + $0x3f8] sm:$0xff]
    %v312 = vld [vmem:[%s1 + $0x400] sm:$0xff]
    %v313 = vld [vmem:[%s1 + $0x408] sm:$0xff]
    %v314 = vld [vmem:[%s1 + $0x410] sm:$0xff]
    %v315 = vld [vmem:[%s1 + $0x418] sm:$0xff]
    %v316 = vld [vmem:[%s1 + $0x420] sm:$0xff]
    %v317 = vld [vmem:[%s1 + $0x428] sm:$0xff]
    %v318 = vld [vmem:[%s1 + $0x430] sm:$0xff]
    %v319 = vld [vmem:[%s1 + $0x438] sm:$0xff]
    %v320 = vld [vmem:[%s1 + $0x440] sm:$0xff]
    %v321 = vld [vmem:[%s1 + $0x448] sm:$0xff]
    %v322 = vld [vmem:[%s1 + $0x450] sm:$0xff]
    %v323 = vld [vmem:[%s1 + $0x458] sm:$0xff]
    %v324 = vld [vmem:[%s1 + $0x460] sm:$0xff]
    %v325 = vld [vmem:[%s1 + $0x468] sm:$0xff]
    %v326 = vld [vmem:[%s1 + $0x470] sm:$0xff]
    %v327 = vld [vmem:[%s1 + $0x478] sm:$0xff]
    %v328 = vld [vmem:[%s1 + $0x480] sm:$0xff]
    %v329 = vld [vmem:[%s1 + $0x488] sm:$0xff]
    %v330 = vld [vmem:[%s1 + $0x490] sm:$0xff]
    %v331 = vld [vmem:[%s1 + $0x498] sm:$0xff]
    %v332 = vld [vmem:[%s1 + $0x4a0] sm:$0xff]
    %v333 = vld [vmem:[%s1 + $0x4a8] sm:$0xff]
    %v334 = vld [vmem:[%s1 + $0x4b0] sm:$0xff]
    %v335 = vld [vmem:[%s1 + $0x4b8] sm:$0xff]
    %v336 = vld [vmem:[%s1 + $0x4c0] sm:$0xff]
    %v337 = vld [vmem:[%s1 + $0x4c8] sm:$0xff]
    %v338 = vld [vmem:[%s1 + $0x4d0] sm:$0xff]
    %v339 = vld [vmem:[%s1 + $0x4d8] sm:$0xff]
    %v340 = vld [vmem:[%s1 + $0x4e0] sm:$0xff]
    %v341 = vld [vmem:[%s1 + $0x4e8] sm:$0xff]
    %v342 = vld [vmem:[%s1 + $0x4f0] sm:$0xff]
    %v343 = vld [vmem:[%s1 + $0x4f8] sm:$0xff]
    %v344 = vld [vmem:[%s1 + $0x500] sm:$0xff]
    %v345 = vld [vmem:[%s1 + $0x508] sm:$0xff]
    %v346 = vld [vmem:[%s1 + $0x510] sm:$0xff]
    %v347 = vld [vmem:[%s1 + $0x518] sm:$0xff]
    %v348 = vld [vmem:[%s1 + $0x520] sm:$0xff]
    %v349 = vld [vmem:[%s1 + $0x528] sm:$0xff]
    %v350 = vld [vmem:[%s1 + $0x530] sm:$0xff]
    %v351 = vld [vmem:[%s1 + $0x538] sm:$0xff]
    %v352 = vld [vmem:[%s1 + $0x540] sm:$0xff]
    %v353 = vld [vmem:[%s1 + $0x548] sm:$0xff]
    %v354 = vld [vmem:[%s1 + $0x550] sm:$0xff]
    %v355 = vld [vmem:[%s1 + $0x558] sm:$0xff]
    %v356 = vld [vmem:[%s1 + $0x560] sm:$0xff]
    %v357 = vld [vmem:[%s1 + $0x568] sm:$0xff]
    %v358 = vld [vmem:[%s1 + $0x570] sm:$0xff]
    %v359 = vld [vmem:[%s1 + $0x578] sm:$0xff]
    %v360 = vld [vmem:[%s1 + $0x580] sm:$0xff]
    %v361 = vld [vmem:[%s1 + $0x588] sm:$0xff]
    %v362 = vld [vmem:[%s1 + $0x590] sm:$0xff]
    %v363 = vld [vmem:[%s1 + $0x598] sm:$0xff]
    %v364 = vld [vmem:[%s1 + $0x5a0] sm:$0xff]
    %v365 = vld [vmem:[%s1 + $0x5a8] sm:$0xff]
    %v366 = vld [vmem:[%s1 + $0x5b0] sm:$0xff]
    %v367 = vld [vmem:[%s1 + $0x5b8] sm:$0xff]
    %v368 = vld [vmem:[%s1 + $0x5c0] sm:$0xff]
    %v369 = vld [vmem:[%s1 + $0x5c8] sm:$0xff]
    %v370 = vld [vmem:[%s1 + $0x5d0] sm:$0xff]
    %v371 = vld [vmem:[%s1 + $0x5d8] sm:$0xff]
    %v372 = vld [vmem:[%s1 + $0x5e0] sm:$0xff]
    %v373 = vld [vmem:[%s1 + $0x5e8] sm:$0xff]
    %v374 = vld [vmem:[%s1 + $0x5f0] sm:$0xff]
    %v375 = vld [vmem:[%s1 + $0x5f8] sm:$0xff]
    %v376 = vld [vmem:[%s1 + $0x600] sm:$0xff]
    %v377 = vld [vmem:[%s1 + $0x608] sm:$0xff]
    %v378 = vld [vmem:[%s1 + $0x610] sm:$0xff]
    %v379 = vld [vmem:[%s1 + $0x618] sm:$0xff]
    %v380 = vld [vmem:[%s2] sm:$0xf]
    %v382 = vlaneseq
    %v383 = vshrl.u32 %v382, 7
    %v384 = vsub.s32 0, %v383
    %v385 = vrot.slane %v380, %v384
    %v386 = vlaneseq
    %v387 = vshrl.u32 %v386, 7
    %v388 = vsub.s32 1, %v387
    %v389 = vrot.slane %v380, %v388
    %v390 = vlaneseq
    %v391 = vshrl.u32 %v390, 7
    %v392 = vsub.s32 2, %v391
    %v393 = vrot.slane %v380, %v392
    %v394 = vlaneseq
    %v395 = vshrl.u32 %v394, 7
    %v396 = vsub.s32 3, %v395
    %v397 = vrot.slane %v380, %v396
    %v530 = vunpack.c.l.b16 %v56
    %v531 = vunpack.c.h.b16 %v56
    %v532 = vunpack.c.l.b16 %v57
    %v533 = vunpack.c.h.b16 %v57
    %v534 = vunpack.c.l.b16 %v58
    %v535 = vunpack.c.h.b16 %v58
    %v536 = vunpack.c.l.b16 %v59
    %v537 = vunpack.c.l.b16 %v60
    %v538 = vunpack.c.h.b16 %v60
    %v539 = vunpack.c.l.b16 %v61
    %v540 = vunpack.c.h.b16 %v61
    %v541 = vunpack.c.l.b16 %v62
    %v542 = vunpack.c.h.b16 %v62
    %v543 = vunpack.c.l.b16 %v63
    %v544 = vunpack.c.l.b16 %v64
    %v545 = vunpack.c.h.b16 %v64
    %v546 = vunpack.c.l.b16 %v65
    %v547 = vunpack.c.h.b16 %v65
    %v548 = vunpack.c.l.b16 %v66
    %v549 = vunpack.c.h.b16 %v66
    %v550 = vunpack.c.l.b16 %v67
    %v551 = vunpack.c.l.b16 %v68
    %v552 = vunpack.c.h.b16 %v68
    %v553 = vunpack.c.l.b16 %v69
    %v554 = vunpack.c.h.b16 %v69
    %v555 = vunpack.c.l.b16 %v70
    %v556 = vunpack.c.h.b16 %v70
    %v557 = vunpack.c.l.b16 %v71
    %v558 = vunpack.c.l.b16 %v72
    %v559 = vunpack.c.h.b16 %v72
    %v560 = vunpack.c.l.b16 %v73
    %v561 = vunpack.c.h.b16 %v73
    %v562 = vunpack.c.l.b16 %v74
    %v563 = vunpack.c.h.b16 %v74
    %v564 = vunpack.c.l.b16 %v75
    %v565 = vunpack.c.l.b16 %v76
    %v566 = vunpack.c.h.b16 %v76
    %v567 = vunpack.c.l.b16 %v77
    %v568 = vunpack.c.h.b16 %v77
    %v569 = vunpack.c.l.b16 %v78
    %v570 = vunpack.c.h.b16 %v78
    %v571 = vunpack.c.l.b16 %v79
    %v572 = vunpack.c.l.b16 %v80
    %v573 = vunpack.c.h.b16 %v80
    %v574 = vunpack.c.l.b16 %v81
    %v575 = vunpack.c.h.b16 %v81
    %v576 = vunpack.c.l.b16 %v82
    %v577 = vunpack.c.h.b16 %v82
    %v578 = vunpack.c.l.b16 %v83
    %v579 = vunpack.c.l.b16 %v84
    %v580 = vunpack.c.h.b16 %v84
    %v581 = vunpack.c.l.b16 %v85
    %v582 = vunpack.c.h.b16 %v85
    %v583 = vunpack.c.l.b16 %v86
    %v584 = vunpack.c.h.b16 %v86
    %v585 = vunpack.c.l.b16 %v87
    %v586 = vunpack.c.l.b16 %v88
    %v587 = vunpack.c.h.b16 %v88
    %v588 = vunpack.c.l.b16 %v89
    %v589 = vunpack.c.h.b16 %v89
    %v590 = vunpack.c.l.b16 %v90
    %v591 = vunpack.c.h.b16 %v90
    %v592 = vunpack.c.l.b16 %v91
    %v593 = vunpack.c.l.b16 %v92
    %v594 = vunpack.c.h.b16 %v92
    %v595 = vunpack.c.l.b16 %v93
    %v596 = vunpack.c.h.b16 %v93
    %v597 = vunpack.c.l.b16 %v94
    %v598 = vunpack.c.h.b16 %v94
    %v599 = vunpack.c.l.b16 %v95
    %v600 = vunpack.c.l.b16 %v96
    %v601 = vunpack.c.h.b16 %v96
    %v602 = vunpack.c.l.b16 %v97
    %v603 = vunpack.c.h.b16 %v97
    %v604 = vunpack.c.l.b16 %v98
    %v605 = vunpack.c.h.b16 %v98
    %v606 = vunpack.c.l.b16 %v99
    %v607 = vunpack.c.l.b16 %v100
    %v608 = vunpack.c.h.b16 %v100
    %v609 = vunpack.c.l.b16 %v101
    %v610 = vunpack.c.h.b16 %v101
    %v611 = vunpack.c.l.b16 %v102
    %v612 = vunpack.c.h.b16 %v102
    %v613 = vunpack.c.l.b16 %v103
    %v614 = vunpack.c.l.b16 %v104
    %v615 = vunpack.c.h.b16 %v104
    %v616 = vunpack.c.l.b16 %v105
    %v617 = vunpack.c.h.b16 %v105
    %v618 = vunpack.c.l.b16 %v106
    %v619 = vunpack.c.h.b16 %v106
    %v620 = vunpack.c.l.b16 %v107
    %v621 = vunpack.c.l.b16 %v108
    %v622 = vunpack.c.h.b16 %v108
    %v623 = vunpack.c.l.b16 %v109
    %v624 = vunpack.c.h.b16 %v109
    %v625 = vunpack.c.l.b16 %v110
    %v626 = vunpack.c.h.b16 %v110
    %v627 = vunpack.c.l.b16 %v111
    %v628 = vunpack.c.l.b16 %v112
    %v629 = vunpack.c.h.b16 %v112
    %v630 = vunpack.c.l.b16 %v113
    %v631 = vunpack.c.h.b16 %v113
    %v632 = vunpack.c.l.b16 %v114
    %v633 = vunpack.c.h.b16 %v114
    %v634 = vunpack.c.l.b16 %v115
    %v635 = vunpack.c.l.b16 %v116
    %v636 = vunpack.c.h.b16 %v116
    %v637 = vunpack.c.l.b16 %v117
    %v638 = vunpack.c.h.b16 %v117
    %v639 = vunpack.c.l.b16 %v118
    %v640 = vunpack.c.h.b16 %v118
    %v641 = vunpack.c.l.b16 %v119
    %v642 = vunpack.c.l.b16 %v120
    %v643 = vunpack.c.h.b16 %v120
    %v644 = vunpack.c.l.b16 %v121
    %v645 = vunpack.c.h.b16 %v121
    %v646 = vunpack.c.l.b16 %v122
    %v647 = vunpack.c.h.b16 %v122
    %v648 = vunpack.c.l.b16 %v123
    %v649 = vunpack.c.l.b16 %v124
    %v650 = vunpack.c.h.b16 %v124
    %v651 = vunpack.c.l.b16 %v125
    %v652 = vunpack.c.h.b16 %v125
    %v653 = vunpack.c.l.b16 %v126
    %v654 = vunpack.c.h.b16 %v126
    %v655 = vunpack.c.l.b16 %v127
    %v656 = vunpack.c.l.b16 %v128
    %v657 = vunpack.c.h.b16 %v128
    %v658 = vunpack.c.l.b16 %v129
    %v659 = vunpack.c.h.b16 %v129
    %v660 = vunpack.c.l.b16 %v130
    %v661 = vunpack.c.h.b16 %v130
    %v662 = vunpack.c.l.b16 %v131
    %v663 = vunpack.c.l.b16 %v132
    %v664 = vunpack.c.h.b16 %v132
    %v665 = vunpack.c.l.b16 %v133
    %v666 = vunpack.c.h.b16 %v133
    %v667 = vunpack.c.l.b16 %v134
    %v668 = vunpack.c.h.b16 %v134
    %v669 = vunpack.c.l.b16 %v135
    %v670 = vunpack.c.l.b16 %v136
    %v671 = vunpack.c.h.b16 %v136
    %v672 = vunpack.c.l.b16 %v137
    %v673 = vunpack.c.h.b16 %v137
    %v674 = vunpack.c.l.b16 %v138
    %v675 = vunpack.c.h.b16 %v138
    %v676 = vunpack.c.l.b16 %v139
    %v677 = vunpack.c.l.b16 %v140
    %v678 = vunpack.c.h.b16 %v140
    %v679 = vunpack.c.l.b16 %v141
    %v680 = vunpack.c.h.b16 %v141
    %v681 = vunpack.c.l.b16 %v142
    %v682 = vunpack.c.h.b16 %v142
    %v683 = vunpack.c.l.b16 %v143
    %v684 = vunpack.c.l.b16 %v144
    %v685 = vunpack.c.h.b16 %v144
    %v686 = vunpack.c.l.b16 %v145
    %v687 = vunpack.c.h.b16 %v145
    %v688 = vunpack.c.l.b16 %v146
    %v689 = vunpack.c.h.b16 %v146
    %v690 = vunpack.c.l.b16 %v147
    %v691 = vunpack.c.l.b16 %v148
    %v692 = vunpack.c.h.b16 %v148
    %v693 = vunpack.c.l.b16 %v149
    %v694 = vunpack.c.h.b16 %v149
    %v695 = vunpack.c.l.b16 %v150
    %v696 = vunpack.c.h.b16 %v150
    %v697 = vunpack.c.l.b16 %v151
    %v698 = vunpack.c.l.b16 %v152
    %v699 = vunpack.c.h.b16 %v152
    %v700 = vunpack.c.l.b16 %v153
    %v701 = vunpack.c.h.b16 %v153
    %v702 = vunpack.c.l.b16 %v154
    %v703 = vunpack.c.h.b16 %v154
    %v704 = vunpack.c.l.b16 %v155
    %v705 = vunpack.c.l.b16 %v156
    %v706 = vunpack.c.h.b16 %v156
    %v707 = vunpack.c.l.b16 %v157
    %v708 = vunpack.c.h.b16 %v157
    %v709 = vunpack.c.l.b16 %v158
    %v710 = vunpack.c.h.b16 %v158
    %v711 = vunpack.c.l.b16 %v159
    %v712 = vunpack.c.l.b16 %v160
    %v713 = vunpack.c.h.b16 %v160
    %v714 = vunpack.c.l.b16 %v161
    %v715 = vunpack.c.h.b16 %v161
    %v716 = vunpack.c.l.b16 %v162
    %v717 = vunpack.c.h.b16 %v162
    %v718 = vunpack.c.l.b16 %v163
    %v719 = vunpack.c.l.b16 %v164
    %v720 = vunpack.c.h.b16 %v164
    %v721 = vunpack.c.l.b16 %v165
    %v722 = vunpack.c.h.b16 %v165
    %v723 = vunpack.c.l.b16 %v166
    %v724 = vunpack.c.h.b16 %v166
    %v725 = vunpack.c.l.b16 %v167
    %v726 = vunpack.c.l.b16 %v168
    %v727 = vunpack.c.h.b16 %v168
    %v728 = vunpack.c.l.b16 %v169
    %v729 = vunpack.c.h.b16 %v169
    %v730 = vunpack.c.l.b16 %v170
    %v731 = vunpack.c.h.b16 %v170
    %v732 = vunpack.c.l.b16 %v171
    %v733 = vunpack.c.l.b16 %v172
    %v734 = vunpack.c.h.b16 %v172
    %v735 = vunpack.c.l.b16 %v173
    %v736 = vunpack.c.h.b16 %v173
    %v737 = vunpack.c.l.b16 %v174
    %v738 = vunpack.c.h.b16 %v174
    %v739 = vunpack.c.l.b16 %v175
    %v740 = vunpack.c.l.b16 %v176
    %v741 = vunpack.c.h.b16 %v176
    %v742 = vunpack.c.l.b16 %v177
    %v743 = vunpack.c.h.b16 %v177
    %v744 = vunpack.c.l.b16 %v178
    %v745 = vunpack.c.h.b16 %v178
    %v746 = vunpack.c.l.b16 %v179
    %v747 = vunpack.c.l.b16 %v180
    %v748 = vunpack.c.h.b16 %v180
    %v749 = vunpack.c.l.b16 %v181
    %v750 = vunpack.c.h.b16 %v181
    %v751 = vunpack.c.l.b16 %v182
    %v752 = vunpack.c.h.b16 %v182
    %v753 = vunpack.c.l.b16 %v183
    %v754 = vpack.c.b16 %v537, %v530
    %v755 = vpack.c.b16 %v538, %v531
    %v756 = vpack.c.b16 %v539, %v532
    %v757 = vpack.c.b16 %v540, %v533
    %v758 = vpack.c.b16 %v541, %v534
    %v759 = vpack.c.b16 %v542, %v535
    %v760 = vpack.c.b16 %v543, %v536
    %v761 = vpack.c.b16 %v551, %v544
    %v762 = vpack.c.b16 %v552, %v545
    %v763 = vpack.c.b16 %v553, %v546
    %v764 = vpack.c.b16 %v554, %v547
    %v765 = vpack.c.b16 %v555, %v548
    %v766 = vpack.c.b16 %v556, %v549
    %v767 = vpack.c.b16 %v557, %v550
    %v768 = vpack.c.b16 %v565, %v558
    %v769 = vpack.c.b16 %v566, %v559
    %v770 = vpack.c.b16 %v567, %v560
    %v771 = vpack.c.b16 %v568, %v561
    %v772 = vpack.c.b16 %v569, %v562
    %v773 = vpack.c.b16 %v570, %v563
    %v774 = vpack.c.b16 %v571, %v564
    %v775 = vpack.c.b16 %v579, %v572
    %v776 = vpack.c.b16 %v580, %v573
    %v777 = vpack.c.b16 %v581, %v574
    %v778 = vpack.c.b16 %v582, %v575
    %v779 = vpack.c.b16 %v583, %v576
    %v780 = vpack.c.b16 %v584, %v577
    %v781 = vpack.c.b16 %v585, %v578
    %v782 = vpack.c.b16 %v593, %v586
    %v783 = vpack.c.b16 %v594, %v587
    %v784 = vpack.c.b16 %v595, %v588
    %v785 = vpack.c.b16 %v596, %v589
    %v786 = vpack.c.b16 %v597, %v590
    %v787 = vpack.c.b16 %v598, %v591
    %v788 = vpack.c.b16 %v599, %v592
    %v789 = vpack.c.b16 %v607, %v600
    %v790 = vpack.c.b16 %v608, %v601
    %v791 = vpack.c.b16 %v609, %v602
    %v792 = vpack.c.b16 %v610, %v603
    %v793 = vpack.c.b16 %v611, %v604
    %v794 = vpack.c.b16 %v612, %v605
    %v795 = vpack.c.b16 %v613, %v606
    %v796 = vpack.c.b16 %v621, %v614
    %v797 = vpack.c.b16 %v622, %v615
    %v798 = vpack.c.b16 %v623, %v616
    %v799 = vpack.c.b16 %v624, %v617
    %v800 = vpack.c.b16 %v625, %v618
    %v801 = vpack.c.b16 %v626, %v619
    %v802 = vpack.c.b16 %v627, %v620
    %v803 = vpack.c.b16 %v635, %v628
    %v804 = vpack.c.b16 %v636, %v629
    %v805 = vpack.c.b16 %v637, %v630
    %v806 = vpack.c.b16 %v638, %v631
    %v807 = vpack.c.b16 %v639, %v632
    %v808 = vpack.c.b16 %v640, %v633
    %v809 = vpack.c.b16 %v641, %v634
    %v810 = vpack.c.b16 %v649, %v642
    %v811 = vpack.c.b16 %v650, %v643
    %v812 = vpack.c.b16 %v651, %v644
    %v813 = vpack.c.b16 %v652, %v645
    %v814 = vpack.c.b16 %v653, %v646
    %v815 = vpack.c.b16 %v654, %v647
    %v816 = vpack.c.b16 %v655, %v648
    %v817 = vpack.c.b16 %v663, %v656
    %v818 = vpack.c.b16 %v664, %v657
    %v819 = vpack.c.b16 %v665, %v658
    %v820 = vpack.c.b16 %v666, %v659
    %v821 = vpack.c.b16 %v667, %v660
    %v822 = vpack.c.b16 %v668, %v661
    %v823 = vpack.c.b16 %v669, %v662
    %v824 = vpack.c.b16 %v677, %v670
    %v825 = vpack.c.b16 %v678, %v671
    %v826 = vpack.c.b16 %v679, %v672
    %v827 = vpack.c.b16 %v680, %v673
    %v828 = vpack.c.b16 %v681, %v674
    %v829 = vpack.c.b16 %v682, %v675
    %v830 = vpack.c.b16 %v683, %v676
    %v831 = vpack.c.b16 %v691, %v684
    %v832 = vpack.c.b16 %v692, %v685
    %v833 = vpack.c.b16 %v693, %v686
    %v834 = vpack.c.b16 %v694, %v687
    %v835 = vpack.c.b16 %v695, %v688
    %v836 = vpack.c.b16 %v696, %v689
    %v837 = vpack.c.b16 %v697, %v690
    %v838 = vpack.c.b16 %v705, %v698
    %v839 = vpack.c.b16 %v706, %v699
    %v840 = vpack.c.b16 %v707, %v700
    %v841 = vpack.c.b16 %v708, %v701
    %v842 = vpack.c.b16 %v709, %v702
    %v843 = vpack.c.b16 %v710, %v703
    %v844 = vpack.c.b16 %v711, %v704
    %v845 = vpack.c.b16 %v719, %v712
    %v846 = vpack.c.b16 %v720, %v713
    %v847 = vpack.c.b16 %v721, %v714
    %v848 = vpack.c.b16 %v722, %v715
    %v849 = vpack.c.b16 %v723, %v716
    %v850 = vpack.c.b16 %v724, %v717
    %v851 = vpack.c.b16 %v725, %v718
    %v852 = vpack.c.b16 %v733, %v726
    %v853 = vpack.c.b16 %v734, %v727
    %v854 = vpack.c.b16 %v735, %v728
    %v855 = vpack.c.b16 %v736, %v729
    %v856 = vpack.c.b16 %v737, %v730
    %v857 = vpack.c.b16 %v738, %v731
    %v858 = vpack.c.b16 %v739, %v732
    %v859 = vpack.c.b16 %v747, %v740
    %v860 = vpack.c.b16 %v748, %v741
    %v861 = vpack.c.b16 %v749, %v742
    %v862 = vpack.c.b16 %v750, %v743
    %v863 = vpack.c.b16 %v751, %v744
    %v864 = vpack.c.b16 %v752, %v745
    %v865 = vpack.c.b16 %v753, %v746
    %v1158 = vunpack.c.l.b16 %v184
    %v1159 = vunpack.c.h.b16 %v184
    %v1160 = vunpack.c.l.b16 %v185
    %v1161 = vunpack.c.h.b16 %v185
    %v1162 = vunpack.c.l.b16 %v186
    %v1163 = vunpack.c.h.b16 %v186
    %v1164 = vunpack.c.l.b16 %v187
    %v1165 = vunpack.c.h.b16 %v187
    %v1166 = vunpack.c.l.b16 %v188
    %v1167 = vunpack.c.h.b16 %v188
    %v1168 = vunpack.c.l.b16 %v189
    %v1169 = vunpack.c.h.b16 %v189
    %v1170 = vunpack.c.l.b16 %v190
    %v1171 = vunpack.c.h.b16 %v190
    %v1172 = vunpack.c.l.b16 %v191
    %v1173 = vunpack.c.h.b16 %v191
    %v1174 = vunpack.c.l.b16 %v192
    %v1175 = vunpack.c.h.b16 %v192
    %v1176 = vunpack.c.l.b16 %v193
    %v1177 = vunpack.c.h.b16 %v193
    %v1178 = vunpack.c.l.b16 %v194
    %v1179 = vunpack.c.h.b16 %v194
    %v1180 = vunpack.c.l.b16 %v195
    %v1181 = vunpack.c.h.b16 %v195
    %v1182 = vunpack.c.l.b16 %v196
    %v1183 = vunpack.c.h.b16 %v196
    %v1184 = vunpack.c.l.b16 %v197
    %v1185 = vunpack.c.h.b16 %v197
    %v1186 = vunpack.c.l.b16 %v198
    %v1187 = vunpack.c.h.b16 %v198
    %v1188 = vunpack.c.l.b16 %v199
    %v1189 = vunpack.c.h.b16 %v199
    %v1190 = vunpack.c.l.b16 %v200
    %v1191 = vunpack.c.h.b16 %v200
    %v1192 = vunpack.c.l.b16 %v201
    %v1193 = vunpack.c.h.b16 %v201
    %v1194 = vunpack.c.l.b16 %v202
    %v1195 = vunpack.c.h.b16 %v202
    %v1196 = vunpack.c.l.b16 %v203
    %v1197 = vunpack.c.h.b16 %v203
    %v1198 = vunpack.c.l.b16 %v204
    %v1199 = vunpack.c.h.b16 %v204
    %v1200 = vunpack.c.l.b16 %v205
    %v1201 = vunpack.c.h.b16 %v205
    %v1202 = vunpack.c.l.b16 %v206
    %v1203 = vunpack.c.h.b16 %v206
    %v1204 = vunpack.c.l.b16 %v207
    %v1205 = vunpack.c.h.b16 %v207
    %v1206 = vunpack.c.l.b16 %v208
    %v1207 = vunpack.c.h.b16 %v208
    %v1208 = vunpack.c.l.b16 %v209
    %v1209 = vunpack.c.h.b16 %v209
    %v1210 = vunpack.c.l.b16 %v210
    %v1211 = vunpack.c.h.b16 %v210
    %v1212 = vunpack.c.l.b16 %v211
    %v1213 = vunpack.c.h.b16 %v211
    %v1214 = vunpack.c.l.b16 %v212
    %v1215 = vunpack.c.h.b16 %v212
    %v1216 = vunpack.c.l.b16 %v213
    %v1217 = vunpack.c.h.b16 %v213
    %v1218 = vunpack.c.l.b16 %v214
    %v1219 = vunpack.c.h.b16 %v214
    %v1220 = vunpack.c.l.b16 %v215
    %v1221 = vunpack.c.h.b16 %v215
    %v1222 = vunpack.c.l.b16 %v216
    %v1223 = vunpack.c.h.b16 %v216
    %v1224 = vunpack.c.l.b16 %v217
    %v1225 = vunpack.c.h.b16 %v217
    %v1226 = vunpack.c.l.b16 %v218
    %v1227 = vunpack.c.h.b16 %v218
    %v1228 = vunpack.c.l.b16 %v219
    %v1229 = vunpack.c.h.b16 %v219
    %v1230 = vunpack.c.l.b16 %v220
    %v1231 = vunpack.c.h.b16 %v220
    %v1232 = vunpack.c.l.b16 %v221
    %v1233 = vunpack.c.h.b16 %v221
    %v1234 = vunpack.c.l.b16 %v222
    %v1235 = vunpack.c.h.b16 %v222
    %v1236 = vunpack.c.l.b16 %v223
    %v1237 = vunpack.c.h.b16 %v223
    %v1238 = vunpack.c.l.b16 %v224
    %v1239 = vunpack.c.h.b16 %v224
    %v1240 = vunpack.c.l.b16 %v225
    %v1241 = vunpack.c.h.b16 %v225
    %v1242 = vunpack.c.l.b16 %v226
    %v1243 = vunpack.c.h.b16 %v226
    %v1244 = vunpack.c.l.b16 %v227
    %v1245 = vunpack.c.h.b16 %v227
    %v1246 = vunpack.c.l.b16 %v228
    %v1247 = vunpack.c.h.b16 %v228
    %v1248 = vunpack.c.l.b16 %v229
    %v1249 = vunpack.c.h.b16 %v229
    %v1250 = vunpack.c.l.b16 %v230
    %v1251 = vunpack.c.h.b16 %v230
    %v1252 = vunpack.c.l.b16 %v231
    %v1253 = vunpack.c.h.b16 %v231
    %v1254 = vunpack.c.l.b16 %v232
    %v1255 = vunpack.c.h.b16 %v232
    %v1256 = vunpack.c.l.b16 %v233
    %v1257 = vunpack.c.h.b16 %v233
    %v1258 = vunpack.c.l.b16 %v234
    %v1259 = vunpack.c.h.b16 %v234
    %v1260 = vunpack.c.l.b16 %v235
    %v1261 = vunpack.c.h.b16 %v235
    %v1262 = vunpack.c.l.b16 %v236
    %v1263 = vunpack.c.h.b16 %v236
    %v1264 = vunpack.c.l.b16 %v237
    %v1265 = vunpack.c.h.b16 %v237
    %v1266 = vunpack.c.l.b16 %v238
    %v1267 = vunpack.c.h.b16 %v238
    %v1268 = vunpack.c.l.b16 %v239
    %v1269 = vunpack.c.h.b16 %v239
    %v1270 = vunpack.c.l.b16 %v240
    %v1271 = vunpack.c.h.b16 %v240
    %v1272 = vunpack.c.l.b16 %v241
    %v1273 = vunpack.c.h.b16 %v241
    %v1274 = vunpack.c.l.b16 %v242
    %v1275 = vunpack.c.h.b16 %v242
    %v1276 = vunpack.c.l.b16 %v243
    %v1277 = vunpack.c.h.b16 %v243
    %v1278 = vunpack.c.l.b16 %v244
    %v1279 = vunpack.c.h.b16 %v244
    %v1280 = vunpack.c.l.b16 %v245
    %v1281 = vunpack.c.h.b16 %v245
    %v1282 = vunpack.c.l.b16 %v246
    %v1283 = vunpack.c.h.b16 %v246
    %v1284 = vunpack.c.l.b16 %v247
    %v1285 = vunpack.c.h.b16 %v247
    %v1286 = vunpack.c.l.b16 %v248
    %v1287 = vunpack.c.h.b16 %v248
    %v1288 = vunpack.c.l.b16 %v249
    %v1289 = vunpack.c.h.b16 %v249
    %v1290 = vunpack.c.l.b16 %v250
    %v1291 = vunpack.c.h.b16 %v250
    %v1292 = vunpack.c.l.b16 %v251
    %v1293 = vunpack.c.h.b16 %v251
    %v1294 = vunpack.c.l.b16 %v252
    %v1295 = vunpack.c.h.b16 %v252
    %v1296 = vunpack.c.l.b16 %v253
    %v1297 = vunpack.c.h.b16 %v253
    %v1298 = vunpack.c.l.b16 %v254
    %v1299 = vunpack.c.h.b16 %v254
    %v1300 = vunpack.c.l.b16 %v255
    %v1301 = vunpack.c.h.b16 %v255
    %v1302 = vunpack.c.l.b16 %v256
    %v1303 = vunpack.c.h.b16 %v256
    %v1304 = vunpack.c.l.b16 %v257
    %v1305 = vunpack.c.h.b16 %v257
    %v1306 = vunpack.c.l.b16 %v258
    %v1307 = vunpack.c.h.b16 %v258
    %v1308 = vunpack.c.l.b16 %v259
    %v1309 = vunpack.c.h.b16 %v259
    %v1310 = vunpack.c.l.b16 %v260
    %v1311 = vunpack.c.h.b16 %v260
    %v1312 = vunpack.c.l.b16 %v261
    %v1313 = vunpack.c.h.b16 %v261
    %v1314 = vunpack.c.l.b16 %v262
    %v1315 = vunpack.c.h.b16 %v262
    %v1316 = vunpack.c.l.b16 %v263
    %v1317 = vunpack.c.h.b16 %v263
    %v1318 = vunpack.c.l.b16 %v264
    %v1319 = vunpack.c.h.b16 %v264
    %v1320 = vunpack.c.l.b16 %v265
    %v1321 = vunpack.c.h.b16 %v265
    %v1322 = vunpack.c.l.b16 %v266
    %v1323 = vunpack.c.h.b16 %v266
    %v1324 = vunpack.c.l.b16 %v267
    %v1325 = vunpack.c.h.b16 %v267
    %v1326 = vunpack.c.l.b16 %v268
    %v1327 = vunpack.c.h.b16 %v268
    %v1328 = vunpack.c.l.b16 %v269
    %v1329 = vunpack.c.h.b16 %v269
    %v1330 = vunpack.c.l.b16 %v270
    %v1331 = vunpack.c.h.b16 %v270
    %v1332 = vunpack.c.l.b16 %v271
    %v1333 = vunpack.c.h.b16 %v271
    %v1334 = vunpack.c.l.b16 %v272
    %v1335 = vunpack.c.h.b16 %v272
    %v1336 = vunpack.c.l.b16 %v273
    %v1337 = vunpack.c.h.b16 %v273
    %v1338 = vunpack.c.l.b16 %v274
    %v1339 = vunpack.c.h.b16 %v274
    %v1340 = vunpack.c.l.b16 %v275
    %v1341 = vunpack.c.h.b16 %v275
    %v1342 = vunpack.c.l.b16 %v276
    %v1343 = vunpack.c.h.b16 %v276
    %v1344 = vunpack.c.l.b16 %v277
    %v1345 = vunpack.c.h.b16 %v277
    %v1346 = vunpack.c.l.b16 %v278
    %v1347 = vunpack.c.h.b16 %v278
    %v1348 = vunpack.c.l.b16 %v279
    %v1349 = vunpack.c.h.b16 %v279
    %v1350 = vunpack.c.l.b16 %v280
    %v1351 = vunpack.c.h.b16 %v280
    %v1352 = vunpack.c.l.b16 %v281
    %v1353 = vunpack.c.h.b16 %v281
    %v1354 = vunpack.c.l.b16 %v282
    %v1355 = vunpack.c.h.b16 %v282
    %v1356 = vunpack.c.l.b16 %v283
    %v1357 = vunpack.c.h.b16 %v283
    %v1358 = vunpack.c.l.b16 %v284
    %v1359 = vunpack.c.h.b16 %v284
    %v1360 = vunpack.c.l.b16 %v285
    %v1361 = vunpack.c.h.b16 %v285
    %v1362 = vunpack.c.l.b16 %v286
    %v1363 = vunpack.c.h.b16 %v286
    %v1364 = vunpack.c.l.b16 %v287
    %v1365 = vunpack.c.h.b16 %v287
    %v1366 = vunpack.c.l.b16 %v288
    %v1367 = vunpack.c.h.b16 %v288
    %v1368 = vunpack.c.l.b16 %v289
    %v1369 = vunpack.c.h.b16 %v289
    %v1370 = vunpack.c.l.b16 %v290
    %v1371 = vunpack.c.h.b16 %v290
    %v1372 = vunpack.c.l.b16 %v291
    %v1373 = vunpack.c.h.b16 %v291
    %v1374 = vunpack.c.l.b16 %v292
    %v1375 = vunpack.c.h.b16 %v292
    %v1376 = vunpack.c.l.b16 %v293
    %v1377 = vunpack.c.h.b16 %v293
    %v1378 = vunpack.c.l.b16 %v294
    %v1379 = vunpack.c.h.b16 %v294
    %v1380 = vunpack.c.l.b16 %v295
    %v1381 = vunpack.c.h.b16 %v295
    %v1382 = vunpack.c.l.b16 %v296
    %v1383 = vunpack.c.h.b16 %v296
    %v1384 = vunpack.c.l.b16 %v297
    %v1385 = vunpack.c.h.b16 %v297
    %v1386 = vunpack.c.l.b16 %v298
    %v1387 = vunpack.c.h.b16 %v298
    %v1388 = vunpack.c.l.b16 %v299
    %v1389 = vunpack.c.h.b16 %v299
    %v1390 = vunpack.c.l.b16 %v300
    %v1391 = vunpack.c.h.b16 %v300
    %v1392 = vunpack.c.l.b16 %v301
    %v1393 = vunpack.c.h.b16 %v301
    %v1394 = vunpack.c.l.b16 %v302
    %v1395 = vunpack.c.h.b16 %v302
    %v1396 = vunpack.c.l.b16 %v303
    %v1397 = vunpack.c.h.b16 %v303
    %v1398 = vunpack.c.l.b16 %v304
    %v1399 = vunpack.c.h.b16 %v304
    %v1400 = vunpack.c.l.b16 %v305
    %v1401 = vunpack.c.h.b16 %v305
    %v1402 = vunpack.c.l.b16 %v306
    %v1403 = vunpack.c.h.b16 %v306
    %v1404 = vunpack.c.l.b16 %v307
    %v1405 = vunpack.c.h.b16 %v307
    %v1406 = vunpack.c.l.b16 %v308
    %v1407 = vunpack.c.h.b16 %v308
    %v1408 = vunpack.c.l.b16 %v309
    %v1409 = vunpack.c.h.b16 %v309
    %v1410 = vunpack.c.l.b16 %v310
    %v1411 = vunpack.c.h.b16 %v310
    %v1412 = vunpack.c.l.b16 %v311
    %v1413 = vunpack.c.h.b16 %v311
    %v1414 = vunpack.c.l.b16 %v312
    %v1415 = vunpack.c.h.b16 %v312
    %v1416 = vunpack.c.l.b16 %v313
    %v1417 = vunpack.c.h.b16 %v313
    %v1418 = vunpack.c.l.b16 %v314
    %v1419 = vunpack.c.h.b16 %v314
    %v1420 = vunpack.c.l.b16 %v315
    %v1421 = vunpack.c.h.b16 %v315
    %v1422 = vunpack.c.l.b16 %v316
    %v1423 = vunpack.c.h.b16 %v316
    %v1424 = vunpack.c.l.b16 %v317
    %v1425 = vunpack.c.h.b16 %v317
    %v1426 = vunpack.c.l.b16 %v318
    %v1427 = vunpack.c.h.b16 %v318
    %v1428 = vunpack.c.l.b16 %v319
    %v1429 = vunpack.c.h.b16 %v319
    %v1430 = vunpack.c.l.b16 %v320
    %v1431 = vunpack.c.h.b16 %v320
    %v1432 = vunpack.c.l.b16 %v321
    %v1433 = vunpack.c.h.b16 %v321
    %v1434 = vunpack.c.l.b16 %v322
    %v1435 = vunpack.c.h.b16 %v322
    %v1436 = vunpack.c.l.b16 %v323
    %v1437 = vunpack.c.h.b16 %v323
    %v1438 = vunpack.c.l.b16 %v324
    %v1439 = vunpack.c.h.b16 %v324
    %v1440 = vunpack.c.l.b16 %v325
    %v1441 = vunpack.c.h.b16 %v325
    %v1442 = vunpack.c.l.b16 %v326
    %v1443 = vunpack.c.h.b16 %v326
    %v1444 = vunpack.c.l.b16 %v327
    %v1445 = vunpack.c.h.b16 %v327
    %v1446 = vunpack.c.l.b16 %v328
    %v1447 = vunpack.c.h.b16 %v328
    %v1448 = vunpack.c.l.b16 %v329
    %v1449 = vunpack.c.h.b16 %v329
    %v1450 = vunpack.c.l.b16 %v330
    %v1451 = vunpack.c.h.b16 %v330
    %v1452 = vunpack.c.l.b16 %v331
    %v1453 = vunpack.c.h.b16 %v331
    %v1454 = vunpack.c.l.b16 %v332
    %v1455 = vunpack.c.h.b16 %v332
    %v1456 = vunpack.c.l.b16 %v333
    %v1457 = vunpack.c.h.b16 %v333
    %v1458 = vunpack.c.l.b16 %v334
    %v1459 = vunpack.c.h.b16 %v334
    %v1460 = vunpack.c.l.b16 %v335
    %v1461 = vunpack.c.h.b16 %v335
    %v1462 = vunpack.c.l.b16 %v336
    %v1463 = vunpack.c.h.b16 %v336
    %v1464 = vunpack.c.l.b16 %v337
    %v1465 = vunpack.c.h.b16 %v337
    %v1466 = vunpack.c.l.b16 %v338
    %v1467 = vunpack.c.h.b16 %v338
    %v1468 = vunpack.c.l.b16 %v339
    %v1469 = vunpack.c.h.b16 %v339
    %v1470 = vunpack.c.l.b16 %v340
    %v1471 = vunpack.c.h.b16 %v340
    %v1472 = vunpack.c.l.b16 %v341
    %v1473 = vunpack.c.h.b16 %v341
    %v1474 = vunpack.c.l.b16 %v342
    %v1475 = vunpack.c.h.b16 %v342
    %v1476 = vunpack.c.l.b16 %v343
    %v1477 = vunpack.c.h.b16 %v343
    %v1478 = vunpack.c.l.b16 %v344
    %v1479 = vunpack.c.h.b16 %v344
    %v1480 = vunpack.c.l.b16 %v345
    %v1481 = vunpack.c.h.b16 %v345
    %v1482 = vunpack.c.l.b16 %v346
    %v1483 = vunpack.c.h.b16 %v346
    %v1484 = vunpack.c.l.b16 %v347
    %v1485 = vunpack.c.h.b16 %v347
    %v1486 = vunpack.c.l.b16 %v348
    %v1487 = vunpack.c.h.b16 %v348
    %v1488 = vunpack.c.l.b16 %v349
    %v1489 = vunpack.c.h.b16 %v349
    %v1490 = vunpack.c.l.b16 %v350
    %v1491 = vunpack.c.h.b16 %v350
    %v1492 = vunpack.c.l.b16 %v351
    %v1493 = vunpack.c.h.b16 %v351
    %v1494 = vunpack.c.l.b16 %v352
    %v1495 = vunpack.c.h.b16 %v352
    %v1496 = vunpack.c.l.b16 %v353
    %v1497 = vunpack.c.h.b16 %v353
    %v1498 = vunpack.c.l.b16 %v354
    %v1499 = vunpack.c.h.b16 %v354
    %v1500 = vunpack.c.l.b16 %v355
    %v1501 = vunpack.c.h.b16 %v355
    %v1502 = vunpack.c.l.b16 %v356
    %v1503 = vunpack.c.h.b16 %v356
    %v1504 = vunpack.c.l.b16 %v357
    %v1505 = vunpack.c.h.b16 %v357
    %v1506 = vunpack.c.l.b16 %v358
    %v1507 = vunpack.c.h.b16 %v358
    %v1508 = vunpack.c.l.b16 %v359
    %v1509 = vunpack.c.h.b16 %v359
    %v1510 = vunpack.c.l.b16 %v360
    %v1511 = vunpack.c.h.b16 %v360
    %v1512 = vunpack.c.l.b16 %v361
    %v1513 = vunpack.c.h.b16 %v361
    %v1514 = vunpack.c.l.b16 %v362
    %v1515 = vunpack.c.h.b16 %v362
    %v1516 = vunpack.c.l.b16 %v363
    %v1517 = vunpack.c.h.b16 %v363
    %v1518 = vunpack.c.l.b16 %v364
    %v1519 = vunpack.c.h.b16 %v364
    %v1520 = vunpack.c.l.b16 %v365
    %v1521 = vunpack.c.h.b16 %v365
    %v1522 = vunpack.c.l.b16 %v366
    %v1523 = vunpack.c.h.b16 %v366
    %v1524 = vunpack.c.l.b16 %v367
    %v1525 = vunpack.c.h.b16 %v367
    %v1526 = vunpack.c.l.b16 %v368
    %v1527 = vunpack.c.h.b16 %v368
    %v1528 = vunpack.c.l.b16 %v369
    %v1529 = vunpack.c.h.b16 %v369
    %v1530 = vunpack.c.l.b16 %v370
    %v1531 = vunpack.c.h.b16 %v370
    %v1532 = vunpack.c.l.b16 %v371
    %v1533 = vunpack.c.h.b16 %v371
    %v1534 = vunpack.c.l.b16 %v372
    %v1535 = vunpack.c.h.b16 %v372
    %v1536 = vunpack.c.l.b16 %v373
    %v1537 = vunpack.c.h.b16 %v373
    %v1538 = vunpack.c.l.b16 %v374
    %v1539 = vunpack.c.h.b16 %v374
    %v1540 = vunpack.c.l.b16 %v375
    %v1541 = vunpack.c.h.b16 %v375
    %v1542 = vunpack.c.l.b16 %v376
    %v1543 = vunpack.c.h.b16 %v376
    %v1544 = vunpack.c.l.b16 %v377
    %v1545 = vunpack.c.h.b16 %v377
    %v1546 = vunpack.c.l.b16 %v378
    %v1547 = vunpack.c.h.b16 %v378
    %v1548 = vunpack.c.l.b16 %v379
    %v1549 = vunpack.c.h.b16 %v379
    %v1550 = vpack.c.b16 %v1162, %v1158
    %v1551 = vpack.c.b16 %v1163, %v1159
    %v1552 = vpack.c.b16 %v1164, %v1160
    %v1553 = vpack.c.b16 %v1165, %v1161
    %v1554 = vpack.c.b16 %v1170, %v1166
    %v1555 = vpack.c.b16 %v1171, %v1167
    %v1556 = vpack.c.b16 %v1172, %v1168
    %v1557 = vpack.c.b16 %v1173, %v1169
    %v1558 = vpack.c.b16 %v1178, %v1174
    %v1559 = vpack.c.b16 %v1179, %v1175
    %v1560 = vpack.c.b16 %v1180, %v1176
    %v1561 = vpack.c.b16 %v1181, %v1177
    %v1562 = vpack.c.b16 %v1186, %v1182
    %v1563 = vpack.c.b16 %v1187, %v1183
    %v1564 = vpack.c.b16 %v1188, %v1184
    %v1565 = vpack.c.b16 %v1189, %v1185
    %v1566 = vpack.c.b16 %v1194, %v1190
    %v1567 = vpack.c.b16 %v1195, %v1191
    %v1568 = vpack.c.b16 %v1196, %v1192
    %v1569 = vpack.c.b16 %v1197, %v1193
    %v1570 = vpack.c.b16 %v1202, %v1198
    %v1571 = vpack.c.b16 %v1203, %v1199
    %v1572 = vpack.c.b16 %v1204, %v1200
    %v1573 = vpack.c.b16 %v1205, %v1201
    %v1574 = vpack.c.b16 %v1210, %v1206
    %v1575 = vpack.c.b16 %v1211, %v1207
    %v1576 = vpack.c.b16 %v1212, %v1208
    %v1577 = vpack.c.b16 %v1213, %v1209
    %v1578 = vpack.c.b16 %v1218, %v1214
    %v1579 = vpack.c.b16 %v1219, %v1215
    %v1580 = vpack.c.b16 %v1220, %v1216
    %v1581 = vpack.c.b16 %v1221, %v1217
    %v1582 = vpack.c.b16 %v1226, %v1222
    %v1583 = vpack.c.b16 %v1227, %v1223
    %v1584 = vpack.c.b16 %v1228, %v1224
    %v1585 = vpack.c.b16 %v1229, %v1225
    %v1586 = vpack.c.b16 %v1234, %v1230
    %v1587 = vpack.c.b16 %v1235, %v1231
    %v1588 = vpack.c.b16 %v1236, %v1232
    %v1589 = vpack.c.b16 %v1237, %v1233
    %v1590 = vpack.c.b16 %v1242, %v1238
    %v1591 = vpack.c.b16 %v1243, %v1239
    %v1592 = vpack.c.b16 %v1244, %v1240
    %v1593 = vpack.c.b16 %v1245, %v1241
    %v1594 = vpack.c.b16 %v1250, %v1246
    %v1595 = vpack.c.b16 %v1251, %v1247
    %v1596 = vpack.c.b16 %v1252, %v1248
    %v1597 = vpack.c.b16 %v1253, %v1249
    %v1598 = vpack.c.b16 %v1258, %v1254
    %v1599 = vpack.c.b16 %v1259, %v1255
    %v1600 = vpack.c.b16 %v1260, %v1256
    %v1601 = vpack.c.b16 %v1261, %v1257
    %v1602 = vpack.c.b16 %v1266, %v1262
    %v1603 = vpack.c.b16 %v1267, %v1263
    %v1604 = vpack.c.b16 %v1268, %v1264
    %v1605 = vpack.c.b16 %v1269, %v1265
    %v1606 = vpack.c.b16 %v1274, %v1270
    %v1607 = vpack.c.b16 %v1275, %v1271
    %v1608 = vpack.c.b16 %v1276, %v1272
    %v1609 = vpack.c.b16 %v1277, %v1273
    %v1610 = vpack.c.b16 %v1282, %v1278
    %v1611 = vpack.c.b16 %v1283, %v1279
    %v1612 = vpack.c.b16 %v1284, %v1280
    %v1613 = vpack.c.b16 %v1285, %v1281
    %v1614 = vpack.c.b16 %v1290, %v1286
    %v1615 = vpack.c.b16 %v1291, %v1287
    %v1616 = vpack.c.b16 %v1292, %v1288
    %v1617 = vpack.c.b16 %v1293, %v1289
    %v1618 = vpack.c.b16 %v1298, %v1294
    %v1619 = vpack.c.b16 %v1299, %v1295
    %v1620 = vpack.c.b16 %v1300, %v1296
    %v1621 = vpack.c.b16 %v1301, %v1297
    %v1622 = vpack.c.b16 %v1306, %v1302
    %v1623 = vpack.c.b16 %v1307, %v1303
    %v1624 = vpack.c.b16 %v1308, %v1304
    %v1625 = vpack.c.b16 %v1309, %v1305
    %v1626 = vpack.c.b16 %v1314, %v1310
    %v1627 = vpack.c.b16 %v1315, %v1311
    %v1628 = vpack.c.b16 %v1316, %v1312
    %v1629 = vpack.c.b16 %v1317, %v1313
    %v1630 = vpack.c.b16 %v1322, %v1318
    %v1631 = vpack.c.b16 %v1323, %v1319
    %v1632 = vpack.c.b16 %v1324, %v1320
    %v1633 = vpack.c.b16 %v1325, %v1321
    %v1634 = vpack.c.b16 %v1330, %v1326
    %v1635 = vpack.c.b16 %v1331, %v1327
    %v1636 = vpack.c.b16 %v1332, %v1328
    %v1637 = vpack.c.b16 %v1333, %v1329
    %v1638 = vpack.c.b16 %v1338, %v1334
    %v1639 = vpack.c.b16 %v1339, %v1335
    %v1640 = vpack.c.b16 %v1340, %v1336
    %v1641 = vpack.c.b16 %v1341, %v1337
    %v1642 = vpack.c.b16 %v1346, %v1342
    %v1643 = vpack.c.b16 %v1347, %v1343
    %v1644 = vpack.c.b16 %v1348, %v1344
    %v1645 = vpack.c.b16 %v1349, %v1345
    %v1646 = vpack.c.b16 %v1354, %v1350
    %v1647 = vpack.c.b16 %v1355, %v1351
    %v1648 = vpack.c.b16 %v1356, %v1352
    %v1649 = vpack.c.b16 %v1357, %v1353
    %v1650 = vpack.c.b16 %v1362, %v1358
    %v1651 = vpack.c.b16 %v1363, %v1359
    %v1652 = vpack.c.b16 %v1364, %v1360
    %v1653 = vpack.c.b16 %v1365, %v1361
    %v1654 = vpack.c.b16 %v1370, %v1366
    %v1655 = vpack.c.b16 %v1371, %v1367
    %v1656 = vpack.c.b16 %v1372, %v1368
    %v1657 = vpack.c.b16 %v1373, %v1369
    %v1658 = vpack.c.b16 %v1378, %v1374
    %v1659 = vpack.c.b16 %v1379, %v1375
    %v1660 = vpack.c.b16 %v1380, %v1376
    %v1661 = vpack.c.b16 %v1381, %v1377
    %v1662 = vpack.c.b16 %v1386, %v1382
    %v1663 = vpack.c.b16 %v1387, %v1383
    %v1664 = vpack.c.b16 %v1388, %v1384
    %v1665 = vpack.c.b16 %v1389, %v1385
    %v1666 = vpack.c.b16 %v1394, %v1390
    %v1667 = vpack.c.b16 %v1395, %v1391
    %v1668 = vpack.c.b16 %v1396, %v1392
    %v1669 = vpack.c.b16 %v1397, %v1393
    %v1670 = vpack.c.b16 %v1402, %v1398
    %v1671 = vpack.c.b16 %v1403, %v1399
    %v1672 = vpack.c.b16 %v1404, %v1400
    %v1673 = vpack.c.b16 %v1405, %v1401
    %v1674 = vpack.c.b16 %v1410, %v1406
    %v1675 = vpack.c.b16 %v1411, %v1407
    %v1676 = vpack.c.b16 %v1412, %v1408
    %v1677 = vpack.c.b16 %v1413, %v1409
    %v1678 = vpack.c.b16 %v1418, %v1414
    %v1679 = vpack.c.b16 %v1419, %v1415
    %v1680 = vpack.c.b16 %v1420, %v1416
    %v1681 = vpack.c.b16 %v1421, %v1417
    %v1682 = vpack.c.b16 %v1426, %v1422
    %v1683 = vpack.c.b16 %v1427, %v1423
    %v1684 = vpack.c.b16 %v1428, %v1424
    %v1685 = vpack.c.b16 %v1429, %v1425
    %v1686 = vpack.c.b16 %v1434, %v1430
    %v1687 = vpack.c.b16 %v1435, %v1431
    %v1688 = vpack.c.b16 %v1436, %v1432
    %v1689 = vpack.c.b16 %v1437, %v1433
    %v1690 = vpack.c.b16 %v1442, %v1438
    %v1691 = vpack.c.b16 %v1443, %v1439
    %v1692 = vpack.c.b16 %v1444, %v1440
    %v1693 = vpack.c.b16 %v1445, %v1441
    %v1694 = vpack.c.b16 %v1450, %v1446
    %v1695 = vpack.c.b16 %v1451, %v1447
    %v1696 = vpack.c.b16 %v1452, %v1448
    %v1697 = vpack.c.b16 %v1453, %v1449
    %v1698 = vpack.c.b16 %v1458, %v1454
    %v1699 = vpack.c.b16 %v1459, %v1455
    %v1700 = vpack.c.b16 %v1460, %v1456
    %v1701 = vpack.c.b16 %v1461, %v1457
    %v1702 = vpack.c.b16 %v1466, %v1462
    %v1703 = vpack.c.b16 %v1467, %v1463
    %v1704 = vpack.c.b16 %v1468, %v1464
    %v1705 = vpack.c.b16 %v1469, %v1465
    %v1706 = vpack.c.b16 %v1474, %v1470
    %v1707 = vpack.c.b16 %v1475, %v1471
    %v1708 = vpack.c.b16 %v1476, %v1472
    %v1709 = vpack.c.b16 %v1477, %v1473
    %v1710 = vpack.c.b16 %v1482, %v1478
    %v1711 = vpack.c.b16 %v1483, %v1479
    %v1712 = vpack.c.b16 %v1484, %v1480
    %v1713 = vpack.c.b16 %v1485, %v1481
    %v1714 = vpack.c.b16 %v1490, %v1486
    %v1715 = vpack.c.b16 %v1491, %v1487
    %v1716 = vpack.c.b16 %v1492, %v1488
    %v1717 = vpack.c.b16 %v1493, %v1489
    %v1718 = vpack.c.b16 %v1498, %v1494
    %v1719 = vpack.c.b16 %v1499, %v1495
    %v1720 = vpack.c.b16 %v1500, %v1496
    %v1721 = vpack.c.b16 %v1501, %v1497
    %v1722 = vpack.c.b16 %v1506, %v1502
    %v1723 = vpack.c.b16 %v1507, %v1503
    %v1724 = vpack.c.b16 %v1508, %v1504
    %v1725 = vpack.c.b16 %v1509, %v1505
    %v1726 = vpack.c.b16 %v1514, %v1510
    %v1727 = vpack.c.b16 %v1515, %v1511
    %v1728 = vpack.c.b16 %v1516, %v1512
    %v1729 = vpack.c.b16 %v1517, %v1513
    %v1730 = vpack.c.b16 %v1522, %v1518
    %v1731 = vpack.c.b16 %v1523, %v1519
    %v1732 = vpack.c.b16 %v1524, %v1520
    %v1733 = vpack.c.b16 %v1525, %v1521
    %v1734 = vpack.c.b16 %v1530, %v1526
    %v1735 = vpack.c.b16 %v1531, %v1527
    %v1736 = vpack.c.b16 %v1532, %v1528
    %v1737 = vpack.c.b16 %v1533, %v1529
    %v1738 = vpack.c.b16 %v1538, %v1534
    %v1739 = vpack.c.b16 %v1539, %v1535
    %v1740 = vpack.c.b16 %v1540, %v1536
    %v1741 = vpack.c.b16 %v1541, %v1537
    %v1742 = vpack.c.b16 %v1546, %v1542
    %v1743 = vpack.c.b16 %v1547, %v1543
    %v1744 = vpack.c.b16 %v1548, %v1544
    %v1745 = vpack.c.b16 %v1549, %v1545
    %vm1942 = vcmask 130048
    %v1944 = vsel %vm1942, %v760, 0
    %v1947 = vsel %vm1942, %v767, 0
    %v1950 = vsel %vm1942, %v774, 0
    %v1953 = vsel %vm1942, %v781, 0
    %v1956 = vsel %vm1942, %v788, 0
    %v1959 = vsel %vm1942, %v795, 0
    %v1962 = vsel %vm1942, %v802, 0
    %v1965 = vsel %vm1942, %v809, 0
    %v1968 = vsel %vm1942, %v816, 0
    %v1971 = vsel %vm1942, %v823, 0
    %v1974 = vsel %vm1942, %v830, 0
    %v1977 = vsel %vm1942, %v837, 0
    %v1980 = vsel %vm1942, %v844, 0
    %v1983 = vsel %vm1942, %v851, 0
    %v1986 = vsel %vm1942, %v858, 0
    %v1989 = vsel %vm1942, %v865, 0
    %1991 = vmatprep.subr.bf16.mxu0 %v1579
    %1992 = vmatpush1.bf16.msra.mxu0 %v1578
    %1993 = vmatprep.subr.bf16.mxu0 %v1575
    %1994 = vmatpush1.bf16.msra.mxu0 %v1574
    %1995 = vmatprep.subr.bf16.mxu0 %v1571
    %1996 = vmatpush1.bf16.msra.mxu0 %v1570
    %1997 = vmatprep.subr.bf16.mxu0 %v1567
    %1998 = vmatpush1.bf16.msra.mxu0 %v1566
    %1999 = vmatprep.subr.bf16.mxu0 %v1563
    %2000 = vmatpush1.bf16.msra.mxu0 %v1562
    %2001 = vmatprep.subr.bf16.mxu0 %v1559
    %2002 = vmatpush1.bf16.msra.mxu0 %v1558
    %2003 = vmatprep.subr.bf16.mxu0 %v1555
    %2004 = vmatpush1.bf16.msra.mxu0 %v1554
    %2005 = vmatprep.subr.bf16.mxu0 %v1551
    %2006 = vmatpush1.bf16.msra.mxu0 %v1550
    %2007 = vmatprep.subr.bf16.mxu0 %v1611
    %2008 = vmatpush2.bf16.msra.mxu0 %v1610
    %2009 = vmatprep.subr.bf16.mxu0 %v1607
    %2010 = vmatpush2.bf16.msra.mxu0 %v1606
    %2011 = vmatprep.subr.bf16.mxu0 %v1603
    %2012 = vmatpush2.bf16.msra.mxu0 %v1602
    %2013 = vmatprep.subr.bf16.mxu0 %v1599
    %2014 = vmatpush2.bf16.msra.mxu0 %v1598
    %2015 = vmatprep.subr.bf16.mxu0 %v1595
    %2016 = vmatpush2.bf16.msra.mxu0 %v1594
    %2017 = vmatprep.subr.bf16.mxu0 %v1591
    %2018 = vmatpush2.bf16.msra.mxu0 %v1590
    %2019 = vmatprep.subr.bf16.mxu0 %v1587
    %2020 = vmatpush2.bf16.msra.mxu0 %v1586
    %2021 = vmatprep.subr.bf16.mxu0 %v1583
    %2022 = vmatpush2.bf16.msra.mxu0 %v1582
    %2023 = vmatprep.mubr.bf16.mxu0 %v755
    %2024 = vmatmul.mubr.bf16.gmra.mxu0 %v754
    %v2025 = vpop.f32.mrf.mxu0
    %v2026 = vadd.f32 %v385, %v2025
    %v2027 = vpop.f32.mrf.mxu0
    %v2028 = vadd.f32 %v389, %v2027
    %v2029 = vpop.f32.mrf.mxu0
    %v2030 = vadd.f32 %v385, %v2029
    %v2031 = vpop.f32.mrf.mxu0
    %v2032 = vadd.f32 %v389, %v2031
    %2033 = vmatprep.mubr.bf16.mxu0 %v762
    %2034 = vmatmul.mubr.bf16.gmra.mxu0 %v761
    %v2035 = vpop.f32.mrf.mxu0
    %v2036 = vadd.f32 %v385, %v2035
    %v2037 = vpop.f32.mrf.mxu0
    %v2038 = vadd.f32 %v389, %v2037
    %v2039 = vpop.f32.mrf.mxu0
    %v2040 = vadd.f32 %v385, %v2039
    %v2041 = vpop.f32.mrf.mxu0
    %v2042 = vadd.f32 %v389, %v2041
    %2043 = vmatprep.mubr.bf16.mxu0 %v769
    %2044 = vmatmul.mubr.bf16.gmra.mxu0 %v768
    %v2045 = vpop.f32.mrf.mxu0
    %v2046 = vadd.f32 %v385, %v2045
    %v2047 = vpop.f32.mrf.mxu0
    %v2048 = vadd.f32 %v389, %v2047
    %v2049 = vpop.f32.mrf.mxu0
    %v2050 = vadd.f32 %v385, %v2049
    %v2051 = vpop.f32.mrf.mxu0
    %v2052 = vadd.f32 %v389, %v2051
    %2053 = vmatprep.mubr.bf16.mxu0 %v776
    %2054 = vmatmul.mubr.bf16.gmra.mxu0 %v775
    %v2055 = vpop.f32.mrf.mxu0
    %v2056 = vadd.f32 %v385, %v2055
    %v2057 = vpop.f32.mrf.mxu0
    %v2058 = vadd.f32 %v389, %v2057
    %v2059 = vpop.f32.mrf.mxu0
    %v2060 = vadd.f32 %v385, %v2059
    %v2061 = vpop.f32.mrf.mxu0
    %v2062 = vadd.f32 %v389, %v2061
    %2063 = vmatprep.mubr.bf16.mxu0 %v783
    %2064 = vmatmul.mubr.bf16.gmra.mxu0 %v782
    %v2065 = vpop.f32.mrf.mxu0
    %v2066 = vadd.f32 %v385, %v2065
    %v2067 = vpop.f32.mrf.mxu0
    %v2068 = vadd.f32 %v389, %v2067
    %v2069 = vpop.f32.mrf.mxu0
    %v2070 = vadd.f32 %v385, %v2069
    %v2071 = vpop.f32.mrf.mxu0
    %v2072 = vadd.f32 %v389, %v2071
    %2073 = vmatprep.mubr.bf16.mxu0 %v790
    %2074 = vmatmul.mubr.bf16.gmra.mxu0 %v789
    %v2075 = vpop.f32.mrf.mxu0
    %v2076 = vadd.f32 %v385, %v2075
    %v2077 = vpop.f32.mrf.mxu0
    %v2078 = vadd.f32 %v389, %v2077
    %v2079 = vpop.f32.mrf.mxu0
    %v2080 = vadd.f32 %v385, %v2079
    %v2081 = vpop.f32.mrf.mxu0
    %v2082 = vadd.f32 %v389, %v2081
    %2083 = vmatprep.mubr.bf16.mxu0 %v797
    %2084 = vmatmul.mubr.bf16.gmra.mxu0 %v796
    %v2085 = vpop.f32.mrf.mxu0
    %v2086 = vadd.f32 %v385, %v2085
    %v2087 = vpop.f32.mrf.mxu0
    %v2088 = vadd.f32 %v389, %v2087
    %v2089 = vpop.f32.mrf.mxu0
    %v2090 = vadd.f32 %v385, %v2089
    %v2091 = vpop.f32.mrf.mxu0
    %v2092 = vadd.f32 %v389, %v2091
    %2093 = vmatprep.mubr.bf16.mxu0 %v804
    %2094 = vmatmul.mubr.bf16.gmra.mxu0 %v803
    %v2095 = vpop.f32.mrf.mxu0
    %v2096 = vadd.f32 %v385, %v2095
    %v2097 = vpop.f32.mrf.mxu0
    %v2098 = vadd.f32 %v389, %v2097
    %v2099 = vpop.f32.mrf.mxu0
    %v2100 = vadd.f32 %v385, %v2099
    %v2101 = vpop.f32.mrf.mxu0
    %v2102 = vadd.f32 %v389, %v2101
    %2103 = vmatprep.mubr.bf16.mxu0 %v811
    %2104 = vmatmul.mubr.bf16.gmra.mxu0 %v810
    %v2105 = vpop.f32.mrf.mxu0
    %v2106 = vadd.f32 %v385, %v2105
    %v2107 = vpop.f32.mrf.mxu0
    %v2108 = vadd.f32 %v389, %v2107
    %v2109 = vpop.f32.mrf.mxu0
    %v2110 = vadd.f32 %v385, %v2109
    %v2111 = vpop.f32.mrf.mxu0
    %v2112 = vadd.f32 %v389, %v2111
    %2113 = vmatprep.mubr.bf16.mxu0 %v818
    %2114 = vmatmul.mubr.bf16.gmra.mxu0 %v817
    %v2115 = vpop.f32.mrf.mxu0
    %v2116 = vadd.f32 %v385, %v2115
    %v2117 = vpop.f32.mrf.mxu0
    %v2118 = vadd.f32 %v389, %v2117
    %v2119 = vpop.f32.mrf.mxu0
    %v2120 = vadd.f32 %v385, %v2119
    %v2121 = vpop.f32.mrf.mxu0
    %v2122 = vadd.f32 %v389, %v2121
    %2123 = vmatprep.mubr.bf16.mxu0 %v825
    %2124 = vmatmul.mubr.bf16.gmra.mxu0 %v824
    %v2125 = vpop.f32.mrf.mxu0
    %v2126 = vadd.f32 %v385, %v2125
    %v2127 = vpop.f32.mrf.mxu0
    %v2128 = vadd.f32 %v389, %v2127
    %v2129 = vpop.f32.mrf.mxu0
    %v2130 = vadd.f32 %v385, %v2129
    %v2131 = vpop.f32.mrf.mxu0
    %v2132 = vadd.f32 %v389, %v2131
    %2133 = vmatprep.mubr.bf16.mxu0 %v832
    %2134 = vmatmul.mubr.bf16.gmra.mxu0 %v831
    %v2135 = vpop.f32.mrf.mxu0
    %v2136 = vadd.f32 %v385, %v2135
    %v2137 = vpop.f32.mrf.mxu0
    %v2138 = vadd.f32 %v389, %v2137
    %v2139 = vpop.f32.mrf.mxu0
    %v2140 = vadd.f32 %v385, %v2139
    %v2141 = vpop.f32.mrf.mxu0
    %v2142 = vadd.f32 %v389, %v2141
    %2143 = vmatprep.mubr.bf16.mxu0 %v839
    %2144 = vmatmul.mubr.bf16.gmra.mxu0 %v838
    %v2145 = vpop.f32.mrf.mxu0
    %v2146 = vadd.f32 %v385, %v2145
    %v2147 = vpop.f32.mrf.mxu0
    %v2148 = vadd.f32 %v389, %v2147
    %v2149 = vpop.f32.mrf.mxu0
    %v2150 = vadd.f32 %v385, %v2149
    %v2151 = vpop.f32.mrf.mxu0
    %v2152 = vadd.f32 %v389, %v2151
    %2153 = vmatprep.mubr.bf16.mxu0 %v846
    %2154 = vmatmul.mubr.bf16.gmra.mxu0 %v845
    %v2155 = vpop.f32.mrf.mxu0
    %v2156 = vadd.f32 %v385, %v2155
    %v2157 = vpop.f32.mrf.mxu0
    %v2158 = vadd.f32 %v389, %v2157
    %v2159 = vpop.f32.mrf.mxu0
    %v2160 = vadd.f32 %v385, %v2159
    %v2161 = vpop.f32.mrf.mxu0
    %v2162 = vadd.f32 %v389, %v2161
    %2163 = vmatprep.mubr.bf16.mxu0 %v853
    %2164 = vmatmul.mubr.bf16.gmra.mxu0 %v852
    %v2165 = vpop.f32.mrf.mxu0
    %v2166 = vadd.f32 %v385, %v2165
    %v2167 = vpop.f32.mrf.mxu0
    %v2168 = vadd.f32 %v389, %v2167
    %v2169 = vpop.f32.mrf.mxu0
    %v2170 = vadd.f32 %v385, %v2169
    %v2171 = vpop.f32.mrf.mxu0
    %v2172 = vadd.f32 %v389, %v2171
    %2173 = vmatprep.mubr.bf16.mxu0 %v860
    %2174 = vmatmul.mubr.bf16.gmra.mxu0 %v859
    %v2175 = vpop.f32.mrf.mxu0
    %v2176 = vadd.f32 %v385, %v2175
    %v2177 = vpop.f32.mrf.mxu0
    %v2178 = vadd.f32 %v389, %v2177
    %v2179 = vpop.f32.mrf.mxu0
    %v2180 = vadd.f32 %v385, %v2179
    %v2181 = vpop.f32.mrf.mxu0
    %v2182 = vadd.f32 %v389, %v2181
    %2183 = vdwg.mxu0
    %2184 = vmatprep.subr.bf16.mxu0 %v1643
    %2185 = vmatpush1.bf16.msra.mxu0 %v1642
    %2186 = vmatprep.subr.bf16.mxu0 %v1639
    %2187 = vmatpush1.bf16.msra.mxu0 %v1638
    %2188 = vmatprep.subr.bf16.mxu0 %v1635
    %2189 = vmatpush1.bf16.msra.mxu0 %v1634
    %2190 = vmatprep.subr.bf16.mxu0 %v1631
    %2191 = vmatpush1.bf16.msra.mxu0 %v1630
    %2192 = vmatprep.subr.bf16.mxu0 %v1627
    %2193 = vmatpush1.bf16.msra.mxu0 %v1626
    %2194 = vmatprep.subr.bf16.mxu0 %v1623
    %2195 = vmatpush1.bf16.msra.mxu0 %v1622
    %2196 = vmatprep.subr.bf16.mxu0 %v1619
    %2197 = vmatpush1.bf16.msra.mxu0 %v1618
    %2198 = vmatprep.subr.bf16.mxu0 %v1615
    %2199 = vmatpush1.bf16.msra.mxu0 %v1614
    %2200 = vmatprep.subr.bf16.mxu0 %v1675
    %2201 = vmatpush2.bf16.msra.mxu0 %v1674
    %2202 = vmatprep.subr.bf16.mxu0 %v1671
    %2203 = vmatpush2.bf16.msra.mxu0 %v1670
    %2204 = vmatprep.subr.bf16.mxu0 %v1667
    %2205 = vmatpush2.bf16.msra.mxu0 %v1666
    %2206 = vmatprep.subr.bf16.mxu0 %v1663
    %2207 = vmatpush2.bf16.msra.mxu0 %v1662
    %2208 = vmatprep.subr.bf16.mxu0 %v1659
    %2209 = vmatpush2.bf16.msra.mxu0 %v1658
    %2210 = vmatprep.subr.bf16.mxu0 %v1655
    %2211 = vmatpush2.bf16.msra.mxu0 %v1654
    %2212 = vmatprep.subr.bf16.mxu0 %v1651
    %2213 = vmatpush2.bf16.msra.mxu0 %v1650
    %2214 = vmatprep.subr.bf16.mxu0 %v1647
    %2215 = vmatpush2.bf16.msra.mxu0 %v1646
    %2216 = vmatprep.mubr.bf16.mxu0 %v757
    %2217 = vmatmul.mubr.bf16.gmra.mxu0 %v756
    %v2218 = vpop.f32.mrf.mxu0
    %v2219 = vadd.f32 %v2026, %v2218
    %v2220 = vpop.f32.mrf.mxu0
    %v2221 = vadd.f32 %v2028, %v2220
    %v2222 = vpop.f32.mrf.mxu0
    %v2223 = vadd.f32 %v2030, %v2222
    %v2224 = vpop.f32.mrf.mxu0
    %v2225 = vadd.f32 %v2032, %v2224
    %2226 = vmatprep.mubr.bf16.mxu0 %v764
    %2227 = vmatmul.mubr.bf16.gmra.mxu0 %v763
    %v2228 = vpop.f32.mrf.mxu0
    %v2229 = vadd.f32 %v2036, %v2228
    %v2230 = vpop.f32.mrf.mxu0
    %v2231 = vadd.f32 %v2038, %v2230
    %v2232 = vpop.f32.mrf.mxu0
    %v2233 = vadd.f32 %v2040, %v2232
    %v2234 = vpop.f32.mrf.mxu0
    %v2235 = vadd.f32 %v2042, %v2234
    %2236 = vmatprep.mubr.bf16.mxu0 %v771
    %2237 = vmatmul.mubr.bf16.gmra.mxu0 %v770
    %v2238 = vpop.f32.mrf.mxu0
    %v2239 = vadd.f32 %v2046, %v2238
    %v2240 = vpop.f32.mrf.mxu0
    %v2241 = vadd.f32 %v2048, %v2240
    %v2242 = vpop.f32.mrf.mxu0
    %v2243 = vadd.f32 %v2050, %v2242
    %v2244 = vpop.f32.mrf.mxu0
    %v2245 = vadd.f32 %v2052, %v2244
    %2246 = vmatprep.mubr.bf16.mxu0 %v778
    %2247 = vmatmul.mubr.bf16.gmra.mxu0 %v777
    %v2248 = vpop.f32.mrf.mxu0
    %v2249 = vadd.f32 %v2056, %v2248
    %v2250 = vpop.f32.mrf.mxu0
    %v2251 = vadd.f32 %v2058, %v2250
    %v2252 = vpop.f32.mrf.mxu0
    %v2253 = vadd.f32 %v2060, %v2252
    %v2254 = vpop.f32.mrf.mxu0
    %v2255 = vadd.f32 %v2062, %v2254
    %2256 = vmatprep.mubr.bf16.mxu0 %v785
    %2257 = vmatmul.mubr.bf16.gmra.mxu0 %v784
    %v2258 = vpop.f32.mrf.mxu0
    %v2259 = vadd.f32 %v2066, %v2258
    %v2260 = vpop.f32.mrf.mxu0
    %v2261 = vadd.f32 %v2068, %v2260
    %v2262 = vpop.f32.mrf.mxu0
    %v2263 = vadd.f32 %v2070, %v2262
    %v2264 = vpop.f32.mrf.mxu0
    %v2265 = vadd.f32 %v2072, %v2264
    %2266 = vmatprep.mubr.bf16.mxu0 %v792
    %2267 = vmatmul.mubr.bf16.gmra.mxu0 %v791
    %v2268 = vpop.f32.mrf.mxu0
    %v2269 = vadd.f32 %v2076, %v2268
    %v2270 = vpop.f32.mrf.mxu0
    %v2271 = vadd.f32 %v2078, %v2270
    %v2272 = vpop.f32.mrf.mxu0
    %v2273 = vadd.f32 %v2080, %v2272
    %v2274 = vpop.f32.mrf.mxu0
    %v2275 = vadd.f32 %v2082, %v2274
    %2276 = vmatprep.mubr.bf16.mxu0 %v799
    %2277 = vmatmul.mubr.bf16.gmra.mxu0 %v798
    %v2278 = vpop.f32.mrf.mxu0
    %v2279 = vadd.f32 %v2086, %v2278
    %v2280 = vpop.f32.mrf.mxu0
    %v2281 = vadd.f32 %v2088, %v2280
    %v2282 = vpop.f32.mrf.mxu0
    %v2283 = vadd.f32 %v2090, %v2282
    %v2284 = vpop.f32.mrf.mxu0
    %v2285 = vadd.f32 %v2092, %v2284
    %2286 = vmatprep.mubr.bf16.mxu0 %v806
    %2287 = vmatmul.mubr.bf16.gmra.mxu0 %v805
    %v2288 = vpop.f32.mrf.mxu0
    %v2289 = vadd.f32 %v2096, %v2288
    %v2290 = vpop.f32.mrf.mxu0
    %v2291 = vadd.f32 %v2098, %v2290
    %v2292 = vpop.f32.mrf.mxu0
    %v2293 = vadd.f32 %v2100, %v2292
    %v2294 = vpop.f32.mrf.mxu0
    %v2295 = vadd.f32 %v2102, %v2294
    %2296 = vmatprep.mubr.bf16.mxu0 %v813
    %2297 = vmatmul.mubr.bf16.gmra.mxu0 %v812
    %v2298 = vpop.f32.mrf.mxu0
    %v2299 = vadd.f32 %v2106, %v2298
    %v2300 = vpop.f32.mrf.mxu0
    %v2301 = vadd.f32 %v2108, %v2300
    %v2302 = vpop.f32.mrf.mxu0
    %v2303 = vadd.f32 %v2110, %v2302
    %v2304 = vpop.f32.mrf.mxu0
    %v2305 = vadd.f32 %v2112, %v2304
    %2306 = vmatprep.mubr.bf16.mxu0 %v820
    %2307 = vmatmul.mubr.bf16.gmra.mxu0 %v819
    %v2308 = vpop.f32.mrf.mxu0
    %v2309 = vadd.f32 %v2116, %v2308
    %v2310 = vpop.f32.mrf.mxu0
    %v2311 = vadd.f32 %v2118, %v2310
    %v2312 = vpop.f32.mrf.mxu0
    %v2313 = vadd.f32 %v2120, %v2312
    %v2314 = vpop.f32.mrf.mxu0
    %v2315 = vadd.f32 %v2122, %v2314
    %2316 = vmatprep.mubr.bf16.mxu0 %v827
    %2317 = vmatmul.mubr.bf16.gmra.mxu0 %v826
    %v2318 = vpop.f32.mrf.mxu0
    %v2319 = vadd.f32 %v2126, %v2318
    %v2320 = vpop.f32.mrf.mxu0
    %v2321 = vadd.f32 %v2128, %v2320
    %v2322 = vpop.f32.mrf.mxu0
    %v2323 = vadd.f32 %v2130, %v2322
    %v2324 = vpop.f32.mrf.mxu0
    %v2325 = vadd.f32 %v2132, %v2324
    %2326 = vmatprep.mubr.bf16.mxu0 %v834
    %2327 = vmatmul.mubr.bf16.gmra.mxu0 %v833
    %v2328 = vpop.f32.mrf.mxu0
    %v2329 = vadd.f32 %v2136, %v2328
    %v2330 = vpop.f32.mrf.mxu0
    %v2331 = vadd.f32 %v2138, %v2330
    %v2332 = vpop.f32.mrf.mxu0
    %v2333 = vadd.f32 %v2140, %v2332
    %v2334 = vpop.f32.mrf.mxu0
    %v2335 = vadd.f32 %v2142, %v2334
    %2336 = vmatprep.mubr.bf16.mxu0 %v841
    %2337 = vmatmul.mubr.bf16.gmra.mxu0 %v840
    %v2338 = vpop.f32.mrf.mxu0
    %v2339 = vadd.f32 %v2146, %v2338
    %v2340 = vpop.f32.mrf.mxu0
    %v2341 = vadd.f32 %v2148, %v2340
    %v2342 = vpop.f32.mrf.mxu0
    %v2343 = vadd.f32 %v2150, %v2342
    %v2344 = vpop.f32.mrf.mxu0
    %v2345 = vadd.f32 %v2152, %v2344
    %2346 = vmatprep.mubr.bf16.mxu0 %v848
    %2347 = vmatmul.mubr.bf16.gmra.mxu0 %v847
    %v2348 = vpop.f32.mrf.mxu0
    %v2349 = vadd.f32 %v2156, %v2348
    %v2350 = vpop.f32.mrf.mxu0
    %v2351 = vadd.f32 %v2158, %v2350
    %v2352 = vpop.f32.mrf.mxu0
    %v2353 = vadd.f32 %v2160, %v2352
    %v2354 = vpop.f32.mrf.mxu0
    %v2355 = vadd.f32 %v2162, %v2354
    %2356 = vmatprep.mubr.bf16.mxu0 %v855
    %2357 = vmatmul.mubr.bf16.gmra.mxu0 %v854
    %v2358 = vpop.f32.mrf.mxu0
    %v2359 = vadd.f32 %v2166, %v2358
    %v2360 = vpop.f32.mrf.mxu0
    %v2361 = vadd.f32 %v2168, %v2360
    %v2362 = vpop.f32.mrf.mxu0
    %v2363 = vadd.f32 %v2170, %v2362
    %v2364 = vpop.f32.mrf.mxu0
    %v2365 = vadd.f32 %v2172, %v2364
    %2366 = vmatprep.mubr.bf16.mxu0 %v862
    %2367 = vmatmul.mubr.bf16.gmra.mxu0 %v861
    %v2368 = vpop.f32.mrf.mxu0
    %v2369 = vadd.f32 %v2176, %v2368
    %v2370 = vpop.f32.mrf.mxu0
    %v2371 = vadd.f32 %v2178, %v2370
    %v2372 = vpop.f32.mrf.mxu0
    %v2373 = vadd.f32 %v2180, %v2372
    %v2374 = vpop.f32.mrf.mxu0
    %v2375 = vadd.f32 %v2182, %v2374
    %2376 = vdwg.mxu0
    %2377 = vmatprep.subr.bf16.mxu0 %v1707
    %2378 = vmatpush1.bf16.msra.mxu0 %v1706
    %2379 = vmatprep.subr.bf16.mxu0 %v1703
    %2380 = vmatpush1.bf16.msra.mxu0 %v1702
    %2381 = vmatprep.subr.bf16.mxu0 %v1699
    %2382 = vmatpush1.bf16.msra.mxu0 %v1698
    %2383 = vmatprep.subr.bf16.mxu0 %v1695
    %2384 = vmatpush1.bf16.msra.mxu0 %v1694
    %2385 = vmatprep.subr.bf16.mxu0 %v1691
    %2386 = vmatpush1.bf16.msra.mxu0 %v1690
    %2387 = vmatprep.subr.bf16.mxu0 %v1687
    %2388 = vmatpush1.bf16.msra.mxu0 %v1686
    %2389 = vmatprep.subr.bf16.mxu0 %v1683
    %2390 = vmatpush1.bf16.msra.mxu0 %v1682
    %2391 = vmatprep.subr.bf16.mxu0 %v1679
    %2392 = vmatpush1.bf16.msra.mxu0 %v1678
    %2393 = vmatprep.subr.bf16.mxu0 %v1739
    %2394 = vmatpush2.bf16.msra.mxu0 %v1738
    %2395 = vmatprep.subr.bf16.mxu0 %v1735
    %2396 = vmatpush2.bf16.msra.mxu0 %v1734
    %2397 = vmatprep.subr.bf16.mxu0 %v1731
    %2398 = vmatpush2.bf16.msra.mxu0 %v1730
    %2399 = vmatprep.subr.bf16.mxu0 %v1727
    %2400 = vmatpush2.bf16.msra.mxu0 %v1726
    %2401 = vmatprep.subr.bf16.mxu0 %v1723
    %2402 = vmatpush2.bf16.msra.mxu0 %v1722
    %2403 = vmatprep.subr.bf16.mxu0 %v1719
    %2404 = vmatpush2.bf16.msra.mxu0 %v1718
    %2405 = vmatprep.subr.bf16.mxu0 %v1715
    %2406 = vmatpush2.bf16.msra.mxu0 %v1714
    %2407 = vmatprep.subr.bf16.mxu0 %v1711
    %2408 = vmatpush2.bf16.msra.mxu0 %v1710
    %2409 = vmatprep.mubr.bf16.mxu0 %v759
    %2410 = vmatmul.mubr.bf16.gmra.mxu0 %v758
    %v2411 = vpop.f32.mrf.mxu0
    %v2412 = vadd.f32 %v2219, %v2411
    %v2413 = vpop.f32.mrf.mxu0
    %v2414 = vadd.f32 %v2221, %v2413
    %v2415 = vpop.f32.mrf.mxu0
    %v2416 = vadd.f32 %v2223, %v2415
    %v2417 = vpop.f32.mrf.mxu0
    %v2418 = vadd.f32 %v2225, %v2417
    %2419 = vmatprep.mubr.bf16.mxu0 %v766
    %2420 = vmatmul.mubr.bf16.gmra.mxu0 %v765
    %v2421 = vpop.f32.mrf.mxu0
    %v2422 = vadd.f32 %v2229, %v2421
    %v2423 = vpop.f32.mrf.mxu0
    %v2424 = vadd.f32 %v2231, %v2423
    %v2425 = vpop.f32.mrf.mxu0
    %v2426 = vadd.f32 %v2233, %v2425
    %v2427 = vpop.f32.mrf.mxu0
    %v2428 = vadd.f32 %v2235, %v2427
    %2429 = vmatprep.mubr.bf16.mxu0 %v773
    %2430 = vmatmul.mubr.bf16.gmra.mxu0 %v772
    %v2431 = vpop.f32.mrf.mxu0
    %v2432 = vadd.f32 %v2239, %v2431
    %v2433 = vpop.f32.mrf.mxu0
    %v2434 = vadd.f32 %v2241, %v2433
    %v2435 = vpop.f32.mrf.mxu0
    %v2436 = vadd.f32 %v2243, %v2435
    %v2437 = vpop.f32.mrf.mxu0
    %v2438 = vadd.f32 %v2245, %v2437
    %2439 = vmatprep.mubr.bf16.mxu0 %v780
    %2440 = vmatmul.mubr.bf16.gmra.mxu0 %v779
    %v2441 = vpop.f32.mrf.mxu0
    %v2442 = vadd.f32 %v2249, %v2441
    %v2443 = vpop.f32.mrf.mxu0
    %v2444 = vadd.f32 %v2251, %v2443
    %v2445 = vpop.f32.mrf.mxu0
    %v2446 = vadd.f32 %v2253, %v2445
    %v2447 = vpop.f32.mrf.mxu0
    %v2448 = vadd.f32 %v2255, %v2447
    %2449 = vmatprep.mubr.bf16.mxu0 %v787
    %2450 = vmatmul.mubr.bf16.gmra.mxu0 %v786
    %v2451 = vpop.f32.mrf.mxu0
    %v2452 = vadd.f32 %v2259, %v2451
    %v2453 = vpop.f32.mrf.mxu0
    %v2454 = vadd.f32 %v2261, %v2453
    %v2455 = vpop.f32.mrf.mxu0
    %v2456 = vadd.f32 %v2263, %v2455
    %v2457 = vpop.f32.mrf.mxu0
    %v2458 = vadd.f32 %v2265, %v2457
    %2459 = vmatprep.mubr.bf16.mxu0 %v794
    %2460 = vmatmul.mubr.bf16.gmra.mxu0 %v793
    %v2461 = vpop.f32.mrf.mxu0
    %v2462 = vadd.f32 %v2269, %v2461
    %v2463 = vpop.f32.mrf.mxu0
    %v2464 = vadd.f32 %v2271, %v2463
    %v2465 = vpop.f32.mrf.mxu0
    %v2466 = vadd.f32 %v2273, %v2465
    %v2467 = vpop.f32.mrf.mxu0
    %v2468 = vadd.f32 %v2275, %v2467
    %2469 = vmatprep.mubr.bf16.mxu0 %v801
    %2470 = vmatmul.mubr.bf16.gmra.mxu0 %v800
    %v2471 = vpop.f32.mrf.mxu0
    %v2472 = vadd.f32 %v2279, %v2471
    %v2473 = vpop.f32.mrf.mxu0
    %v2474 = vadd.f32 %v2281, %v2473
    %v2475 = vpop.f32.mrf.mxu0
    %v2476 = vadd.f32 %v2283, %v2475
    %v2477 = vpop.f32.mrf.mxu0
    %v2478 = vadd.f32 %v2285, %v2477
    %2479 = vmatprep.mubr.bf16.mxu0 %v808
    %2480 = vmatmul.mubr.bf16.gmra.mxu0 %v807
    %v2481 = vpop.f32.mrf.mxu0
    %v2482 = vadd.f32 %v2289, %v2481
    %v2483 = vpop.f32.mrf.mxu0
    %v2484 = vadd.f32 %v2291, %v2483
    %v2485 = vpop.f32.mrf.mxu0
    %v2486 = vadd.f32 %v2293, %v2485
    %v2487 = vpop.f32.mrf.mxu0
    %v2488 = vadd.f32 %v2295, %v2487
    %2489 = vmatprep.mubr.bf16.mxu0 %v815
    %2490 = vmatmul.mubr.bf16.gmra.mxu0 %v814
    %v2491 = vpop.f32.mrf.mxu0
    %v2492 = vadd.f32 %v2299, %v2491
    %v2493 = vpop.f32.mrf.mxu0
    %v2494 = vadd.f32 %v2301, %v2493
    %v2495 = vpop.f32.mrf.mxu0
    %v2496 = vadd.f32 %v2303, %v2495
    %v2497 = vpop.f32.mrf.mxu0
    %v2498 = vadd.f32 %v2305, %v2497
    %2499 = vmatprep.mubr.bf16.mxu0 %v822
    %2500 = vmatmul.mubr.bf16.gmra.mxu0 %v821
    %v2501 = vpop.f32.mrf.mxu0
    %v2502 = vadd.f32 %v2309, %v2501
    %v2503 = vpop.f32.mrf.mxu0
    %v2504 = vadd.f32 %v2311, %v2503
    %v2505 = vpop.f32.mrf.mxu0
    %v2506 = vadd.f32 %v2313, %v2505
    %v2507 = vpop.f32.mrf.mxu0
    %v2508 = vadd.f32 %v2315, %v2507
    %2509 = vmatprep.mubr.bf16.mxu0 %v829
    %2510 = vmatmul.mubr.bf16.gmra.mxu0 %v828
    %v2511 = vpop.f32.mrf.mxu0
    %v2512 = vadd.f32 %v2319, %v2511
    %v2513 = vpop.f32.mrf.mxu0
    %v2514 = vadd.f32 %v2321, %v2513
    %v2515 = vpop.f32.mrf.mxu0
    %v2516 = vadd.f32 %v2323, %v2515
    %v2517 = vpop.f32.mrf.mxu0
    %v2518 = vadd.f32 %v2325, %v2517
    %2519 = vmatprep.mubr.bf16.mxu0 %v836
    %2520 = vmatmul.mubr.bf16.gmra.mxu0 %v835
    %v2521 = vpop.f32.mrf.mxu0
    %v2522 = vadd.f32 %v2329, %v2521
    %v2523 = vpop.f32.mrf.mxu0
    %v2524 = vadd.f32 %v2331, %v2523
    %v2525 = vpop.f32.mrf.mxu0
    %v2526 = vadd.f32 %v2333, %v2525
    %v2527 = vpop.f32.mrf.mxu0
    %v2528 = vadd.f32 %v2335, %v2527
    %2529 = vmatprep.mubr.bf16.mxu0 %v843
    %2530 = vmatmul.mubr.bf16.gmra.mxu0 %v842
    %v2531 = vpop.f32.mrf.mxu0
    %v2532 = vadd.f32 %v2339, %v2531
    %v2533 = vpop.f32.mrf.mxu0
    %v2534 = vadd.f32 %v2341, %v2533
    %v2535 = vpop.f32.mrf.mxu0
    %v2536 = vadd.f32 %v2343, %v2535
    %v2537 = vpop.f32.mrf.mxu0
    %v2538 = vadd.f32 %v2345, %v2537
    %2539 = vmatprep.mubr.bf16.mxu0 %v850
    %2540 = vmatmul.mubr.bf16.gmra.mxu0 %v849
    %v2541 = vpop.f32.mrf.mxu0
    %v2542 = vadd.f32 %v2349, %v2541
    %v2543 = vpop.f32.mrf.mxu0
    %v2544 = vadd.f32 %v2351, %v2543
    %v2545 = vpop.f32.mrf.mxu0
    %v2546 = vadd.f32 %v2353, %v2545
    %v2547 = vpop.f32.mrf.mxu0
    %v2548 = vadd.f32 %v2355, %v2547
    %2549 = vmatprep.mubr.bf16.mxu0 %v857
    %2550 = vmatmul.mubr.bf16.gmra.mxu0 %v856
    %v2551 = vpop.f32.mrf.mxu0
    %v2552 = vadd.f32 %v2359, %v2551
    %v2553 = vpop.f32.mrf.mxu0
    %v2554 = vadd.f32 %v2361, %v2553
    %v2555 = vpop.f32.mrf.mxu0
    %v2556 = vadd.f32 %v2363, %v2555
    %v2557 = vpop.f32.mrf.mxu0
    %v2558 = vadd.f32 %v2365, %v2557
    %2559 = vmatprep.mubr.bf16.mxu0 %v864
    %2560 = vmatmul.mubr.bf16.gmra.mxu0 %v863
    %v2561 = vpop.f32.mrf.mxu0
    %v2562 = vadd.f32 %v2369, %v2561
    %v2563 = vpop.f32.mrf.mxu0
    %v2564 = vadd.f32 %v2371, %v2563
    %v2565 = vpop.f32.mrf.mxu0
    %v2566 = vadd.f32 %v2373, %v2565
    %v2567 = vpop.f32.mrf.mxu0
    %v2568 = vadd.f32 %v2375, %v2567
    %2569 = vdwg.mxu0
    %2570 = vmatprep.subr.bf16.mxu0 0
    %2571 = vmatpush1.bf16.msra.mxu0 0
    %2572 = vmatprep.subr.bf16.mxu0 0
    %2573 = vmatpush1.bf16.msra.mxu0 0
    %2574 = vmatprep.subr.bf16.mxu0 0
    %2575 = vmatpush1.bf16.msra.mxu0 0
    %2576 = vmatprep.subr.bf16.mxu0 0
    %2577 = vmatpush1.bf16.msra.mxu0 0
    %2578 = vmatprep.subr.bf16.mxu0 0
    %2579 = vmatpush1.bf16.msra.mxu0 0
    %2580 = vmatprep.subr.bf16.mxu0 0
    %2581 = vmatpush1.bf16.msra.mxu0 0
    %2582 = vmatprep.subr.bf16.mxu0 0
    %2583 = vmatpush1.bf16.msra.mxu0 0
    %2584 = vmatprep.subr.bf16.mxu0 %v1743
    %2585 = vmatpush1.bf16.msra.mxu0 %v1742
    %2586 = vmatprep.subr.bf16.mxu0 0
    %2587 = vmatpush2.bf16.msra.mxu0 0
    %2588 = vmatprep.subr.bf16.mxu0 0
    %2589 = vmatpush2.bf16.msra.mxu0 0
    %2590 = vmatprep.subr.bf16.mxu0 0
    %2591 = vmatpush2.bf16.msra.mxu0 0
    %2592 = vmatprep.subr.bf16.mxu0 0
    %2593 = vmatpush2.bf16.msra.mxu0 0
    %2594 = vmatprep.subr.bf16.mxu0 0
    %2595 = vmatpush2.bf16.msra.mxu0 0
    %2596 = vmatprep.subr.bf16.mxu0 0
    %2597 = vmatpush2.bf16.msra.mxu0 0
    %2598 = vmatprep.subr.bf16.mxu0 0
    %2599 = vmatpush2.bf16.msra.mxu0 0
    %2600 = vmatprep.subr.bf16.mxu0 0
    %2601 = vmatpush2.bf16.msra.mxu0 0
    %2602 = vmatprep.mubr.bf16.mxu0 0
    %2603 = vmatmul.mubr.bf16.gmra.mxu0 %v1944
    %v2604 = vpop.f32.mrf.mxu0
    %v2605 = vadd.f32 %v2412, %v2604
    %v2606 = vpop.f32.mrf.mxu0
    %v2607 = vadd.f32 %v2414, %v2606
    %v2608 = vpop.f32.mrf.mxu0
    %v2609 = vadd.f32 %v2416, %v2608
    %v2610 = vpop.f32.mrf.mxu0
    %v2611 = vadd.f32 %v2418, %v2610
    %2612 = vmatprep.mubr.bf16.mxu0 0
    %2613 = vmatmul.mubr.bf16.gmra.mxu0 %v1947
    %v2614 = vpop.f32.mrf.mxu0
    %v2615 = vadd.f32 %v2422, %v2614
    %v2616 = vpop.f32.mrf.mxu0
    %v2617 = vadd.f32 %v2424, %v2616
    %v2618 = vpop.f32.mrf.mxu0
    %v2619 = vadd.f32 %v2426, %v2618
    %v2620 = vpop.f32.mrf.mxu0
    %v2621 = vadd.f32 %v2428, %v2620
    %2622 = vmatprep.mubr.bf16.mxu0 0
    %2623 = vmatmul.mubr.bf16.gmra.mxu0 %v1950
    %v2624 = vpop.f32.mrf.mxu0
    %v2625 = vadd.f32 %v2432, %v2624
    %v2626 = vpop.f32.mrf.mxu0
    %v2627 = vadd.f32 %v2434, %v2626
    %v2628 = vpop.f32.mrf.mxu0
    %v2629 = vadd.f32 %v2436, %v2628
    %v2630 = vpop.f32.mrf.mxu0
    %v2631 = vadd.f32 %v2438, %v2630
    %2632 = vmatprep.mubr.bf16.mxu0 0
    %2633 = vmatmul.mubr.bf16.gmra.mxu0 %v1953
    %v2634 = vpop.f32.mrf.mxu0
    %v2635 = vadd.f32 %v2442, %v2634
    %v2636 = vpop.f32.mrf.mxu0
    %v2637 = vadd.f32 %v2444, %v2636
    %v2638 = vpop.f32.mrf.mxu0
    %v2639 = vadd.f32 %v2446, %v2638
    %v2640 = vpop.f32.mrf.mxu0
    %v2641 = vadd.f32 %v2448, %v2640
    %2642 = vmatprep.mubr.bf16.mxu0 0
    %2643 = vmatmul.mubr.bf16.gmra.mxu0 %v1956
    %v2644 = vpop.f32.mrf.mxu0
    %v2645 = vadd.f32 %v2452, %v2644
    %v2646 = vpop.f32.mrf.mxu0
    %v2647 = vadd.f32 %v2454, %v2646
    %v2648 = vpop.f32.mrf.mxu0
    %v2649 = vadd.f32 %v2456, %v2648
    %v2650 = vpop.f32.mrf.mxu0
    %v2651 = vadd.f32 %v2458, %v2650
    %2652 = vmatprep.mubr.bf16.mxu0 0
    %2653 = vmatmul.mubr.bf16.gmra.mxu0 %v1959
    %v2654 = vpop.f32.mrf.mxu0
    %v2655 = vadd.f32 %v2462, %v2654
    %v2656 = vpop.f32.mrf.mxu0
    %v2657 = vadd.f32 %v2464, %v2656
    %v2658 = vpop.f32.mrf.mxu0
    %v2659 = vadd.f32 %v2466, %v2658
    %v2660 = vpop.f32.mrf.mxu0
    %v2661 = vadd.f32 %v2468, %v2660
    %2662 = vmatprep.mubr.bf16.mxu0 0
    %2663 = vmatmul.mubr.bf16.gmra.mxu0 %v1962
    %v2664 = vpop.f32.mrf.mxu0
    %v2665 = vadd.f32 %v2472, %v2664
    %v2666 = vpop.f32.mrf.mxu0
    %v2667 = vadd.f32 %v2474, %v2666
    %v2668 = vpop.f32.mrf.mxu0
    %v2669 = vadd.f32 %v2476, %v2668
    %v2670 = vpop.f32.mrf.mxu0
    %v2671 = vadd.f32 %v2478, %v2670
    %2672 = vmatprep.mubr.bf16.mxu0 0
    %2673 = vmatmul.mubr.bf16.gmra.mxu0 %v1965
    %v2674 = vpop.f32.mrf.mxu0
    %v2675 = vadd.f32 %v2482, %v2674
    %v2676 = vpop.f32.mrf.mxu0
    %v2677 = vadd.f32 %v2484, %v2676
    %v2678 = vpop.f32.mrf.mxu0
    %v2679 = vadd.f32 %v2486, %v2678
    %v2680 = vpop.f32.mrf.mxu0
    %v2681 = vadd.f32 %v2488, %v2680
    %2682 = vmatprep.mubr.bf16.mxu0 0
    %2683 = vmatmul.mubr.bf16.gmra.mxu0 %v1968
    %v2684 = vpop.f32.mrf.mxu0
    %v2685 = vadd.f32 %v2492, %v2684
    %v2686 = vpop.f32.mrf.mxu0
    %v2687 = vadd.f32 %v2494, %v2686
    %v2688 = vpop.f32.mrf.mxu0
    %v2689 = vadd.f32 %v2496, %v2688
    %v2690 = vpop.f32.mrf.mxu0
    %v2691 = vadd.f32 %v2498, %v2690
    %2692 = vmatprep.mubr.bf16.mxu0 0
    %2693 = vmatmul.mubr.bf16.gmra.mxu0 %v1971
    %v2694 = vpop.f32.mrf.mxu0
    %v2695 = vadd.f32 %v2502, %v2694
    %v2696 = vpop.f32.mrf.mxu0
    %v2697 = vadd.f32 %v2504, %v2696
    %v2698 = vpop.f32.mrf.mxu0
    %v2699 = vadd.f32 %v2506, %v2698
    %v2700 = vpop.f32.mrf.mxu0
    %v2701 = vadd.f32 %v2508, %v2700
    %2702 = vmatprep.mubr.bf16.mxu0 0
    %2703 = vmatmul.mubr.bf16.gmra.mxu0 %v1974
    %v2704 = vpop.f32.mrf.mxu0
    %v2705 = vadd.f32 %v2512, %v2704
    %v2706 = vpop.f32.mrf.mxu0
    %v2707 = vadd.f32 %v2514, %v2706
    %v2708 = vpop.f32.mrf.mxu0
    %v2709 = vadd.f32 %v2516, %v2708
    %v2710 = vpop.f32.mrf.mxu0
    %v2711 = vadd.f32 %v2518, %v2710
    %2712 = vmatprep.mubr.bf16.mxu0 0
    %2713 = vmatmul.mubr.bf16.gmra.mxu0 %v1977
    %v2714 = vpop.f32.mrf.mxu0
    %v2715 = vadd.f32 %v2522, %v2714
    %v2716 = vpop.f32.mrf.mxu0
    %v2717 = vadd.f32 %v2524, %v2716
    %v2718 = vpop.f32.mrf.mxu0
    %v2719 = vadd.f32 %v2526, %v2718
    %v2720 = vpop.f32.mrf.mxu0
    %v2721 = vadd.f32 %v2528, %v2720
    %2722 = vmatprep.mubr.bf16.mxu0 0
    %2723 = vmatmul.mubr.bf16.gmra.mxu0 %v1980
    %v2724 = vpop.f32.mrf.mxu0
    %v2725 = vadd.f32 %v2532, %v2724
    %v2726 = vpop.f32.mrf.mxu0
    %v2727 = vadd.f32 %v2534, %v2726
    %v2728 = vpop.f32.mrf.mxu0
    %v2729 = vadd.f32 %v2536, %v2728
    %v2730 = vpop.f32.mrf.mxu0
    %v2731 = vadd.f32 %v2538, %v2730
    %2732 = vmatprep.mubr.bf16.mxu0 0
    %2733 = vmatmul.mubr.bf16.gmra.mxu0 %v1983
    %v2734 = vpop.f32.mrf.mxu0
    %v2735 = vadd.f32 %v2542, %v2734
    %v2736 = vpop.f32.mrf.mxu0
    %v2737 = vadd.f32 %v2544, %v2736
    %v2738 = vpop.f32.mrf.mxu0
    %v2739 = vadd.f32 %v2546, %v2738
    %v2740 = vpop.f32.mrf.mxu0
    %v2741 = vadd.f32 %v2548, %v2740
    %2742 = vmatprep.mubr.bf16.mxu0 0
    %2743 = vmatmul.mubr.bf16.gmra.mxu0 %v1986
    %v2744 = vpop.f32.mrf.mxu0
    %v2745 = vadd.f32 %v2552, %v2744
    %v2746 = vpop.f32.mrf.mxu0
    %v2747 = vadd.f32 %v2554, %v2746
    %v2748 = vpop.f32.mrf.mxu0
    %v2749 = vadd.f32 %v2556, %v2748
    %v2750 = vpop.f32.mrf.mxu0
    %v2751 = vadd.f32 %v2558, %v2750
    %2752 = vmatprep.mubr.bf16.mxu0 0
    %2753 = vmatmul.mubr.bf16.gmra.mxu0 %v1989
    %v2754 = vpop.f32.mrf.mxu0
    %v2755 = vadd.f32 %v2562, %v2754
    %v2756 = vpop.f32.mrf.mxu0
    %v2757 = vadd.f32 %v2564, %v2756
    %v2758 = vpop.f32.mrf.mxu0
    %v2759 = vadd.f32 %v2566, %v2758
    %v2760 = vpop.f32.mrf.mxu0
    %v2761 = vadd.f32 %v2568, %v2760
    %2762 = vdwg.mxu0
    %2763 = vmatprep.subr.bf16.mxu0 %v1581
    %2764 = vmatpush1.bf16.msra.mxu0 %v1580
    %2765 = vmatprep.subr.bf16.mxu0 %v1577
    %2766 = vmatpush1.bf16.msra.mxu0 %v1576
    %2767 = vmatprep.subr.bf16.mxu0 %v1573
    %2768 = vmatpush1.bf16.msra.mxu0 %v1572
    %2769 = vmatprep.subr.bf16.mxu0 %v1569
    %2770 = vmatpush1.bf16.msra.mxu0 %v1568
    %2771 = vmatprep.subr.bf16.mxu0 %v1565
    %2772 = vmatpush1.bf16.msra.mxu0 %v1564
    %2773 = vmatprep.subr.bf16.mxu0 %v1561
    %2774 = vmatpush1.bf16.msra.mxu0 %v1560
    %2775 = vmatprep.subr.bf16.mxu0 %v1557
    %2776 = vmatpush1.bf16.msra.mxu0 %v1556
    %2777 = vmatprep.subr.bf16.mxu0 %v1553
    %2778 = vmatpush1.bf16.msra.mxu0 %v1552
    %2779 = vmatprep.subr.bf16.mxu0 %v1613
    %2780 = vmatpush2.bf16.msra.mxu0 %v1612
    %2781 = vmatprep.subr.bf16.mxu0 %v1609
    %2782 = vmatpush2.bf16.msra.mxu0 %v1608
    %2783 = vmatprep.subr.bf16.mxu0 %v1605
    %2784 = vmatpush2.bf16.msra.mxu0 %v1604
    %2785 = vmatprep.subr.bf16.mxu0 %v1601
    %2786 = vmatpush2.bf16.msra.mxu0 %v1600
    %2787 = vmatprep.subr.bf16.mxu0 %v1597
    %2788 = vmatpush2.bf16.msra.mxu0 %v1596
    %2789 = vmatprep.subr.bf16.mxu0 %v1593
    %2790 = vmatpush2.bf16.msra.mxu0 %v1592
    %2791 = vmatprep.subr.bf16.mxu0 %v1589
    %2792 = vmatpush2.bf16.msra.mxu0 %v1588
    %2793 = vmatprep.subr.bf16.mxu0 %v1585
    %2794 = vmatpush2.bf16.msra.mxu0 %v1584
    %2795 = vmatprep.mubr.bf16.mxu0 %v755
    %2796 = vmatmul.mubr.bf16.gmra.mxu0 %v754
    %v2797 = vpop.f32.mrf.mxu0
    %v2798 = vadd.f32 %v393, %v2797
    %v2799 = vpop.f32.mrf.mxu0
    %v2800 = vadd.f32 %v397, %v2799
    %v2801 = vpop.f32.mrf.mxu0
    %v2802 = vadd.f32 %v393, %v2801
    %v2803 = vpop.f32.mrf.mxu0
    %v2804 = vadd.f32 %v397, %v2803
    %2805 = vmatprep.mubr.bf16.mxu0 %v762
    %2806 = vmatmul.mubr.bf16.gmra.mxu0 %v761
    %v2807 = vpop.f32.mrf.mxu0
    %v2808 = vadd.f32 %v393, %v2807
    %v2809 = vpop.f32.mrf.mxu0
    %v2810 = vadd.f32 %v397, %v2809
    %v2811 = vpop.f32.mrf.mxu0
    %v2812 = vadd.f32 %v393, %v2811
    %v2813 = vpop.f32.mrf.mxu0
    %v2814 = vadd.f32 %v397, %v2813
    %2815 = vmatprep.mubr.bf16.mxu0 %v769
    %2816 = vmatmul.mubr.bf16.gmra.mxu0 %v768
    %v2817 = vpop.f32.mrf.mxu0
    %v2818 = vadd.f32 %v393, %v2817
    %v2819 = vpop.f32.mrf.mxu0
    %v2820 = vadd.f32 %v397, %v2819
    %v2821 = vpop.f32.mrf.mxu0
    %v2822 = vadd.f32 %v393, %v2821
    %v2823 = vpop.f32.mrf.mxu0
    %v2824 = vadd.f32 %v397, %v2823
    %2825 = vmatprep.mubr.bf16.mxu0 %v776
    %2826 = vmatmul.mubr.bf16.gmra.mxu0 %v775
    %v2827 = vpop.f32.mrf.mxu0
    %v2828 = vadd.f32 %v393, %v2827
    %v2829 = vpop.f32.mrf.mxu0
    %v2830 = vadd.f32 %v397, %v2829
    %v2831 = vpop.f32.mrf.mxu0
    %v2832 = vadd.f32 %v393, %v2831
    %v2833 = vpop.f32.mrf.mxu0
    %v2834 = vadd.f32 %v397, %v2833
    %2835 = vmatprep.mubr.bf16.mxu0 %v783
    %2836 = vmatmul.mubr.bf16.gmra.mxu0 %v782
    %v2837 = vpop.f32.mrf.mxu0
    %v2838 = vadd.f32 %v393, %v2837
    %v2839 = vpop.f32.mrf.mxu0
    %v2840 = vadd.f32 %v397, %v2839
    %v2841 = vpop.f32.mrf.mxu0
    %v2842 = vadd.f32 %v393, %v2841
    %v2843 = vpop.f32.mrf.mxu0
    %v2844 = vadd.f32 %v397, %v2843
    %2845 = vmatprep.mubr.bf16.mxu0 %v790
    %2846 = vmatmul.mubr.bf16.gmra.mxu0 %v789
    %v2847 = vpop.f32.mrf.mxu0
    %v2848 = vadd.f32 %v393, %v2847
    %v2849 = vpop.f32.mrf.mxu0
    %v2850 = vadd.f32 %v397, %v2849
    %v2851 = vpop.f32.mrf.mxu0
    %v2852 = vadd.f32 %v393, %v2851
    %v2853 = vpop.f32.mrf.mxu0
    %v2854 = vadd.f32 %v397, %v2853
    %2855 = vmatprep.mubr.bf16.mxu0 %v797
    %2856 = vmatmul.mubr.bf16.gmra.mxu0 %v796
    %v2857 = vpop.f32.mrf.mxu0
    %v2858 = vadd.f32 %v393, %v2857
    %v2859 = vpop.f32.mrf.mxu0
    %v2860 = vadd.f32 %v397, %v2859
    %v2861 = vpop.f32.mrf.mxu0
    %v2862 = vadd.f32 %v393, %v2861
    %v2863 = vpop.f32.mrf.mxu0
    %v2864 = vadd.f32 %v397, %v2863
    %2865 = vmatprep.mubr.bf16.mxu0 %v804
    %2866 = vmatmul.mubr.bf16.gmra.mxu0 %v803
    %v2867 = vpop.f32.mrf.mxu0
    %v2868 = vadd.f32 %v393, %v2867
    %v2869 = vpop.f32.mrf.mxu0
    %v2870 = vadd.f32 %v397, %v2869
    %v2871 = vpop.f32.mrf.mxu0
    %v2872 = vadd.f32 %v393, %v2871
    %v2873 = vpop.f32.mrf.mxu0
    %v2874 = vadd.f32 %v397, %v2873
    %2875 = vmatprep.mubr.bf16.mxu0 %v811
    %2876 = vmatmul.mubr.bf16.gmra.mxu0 %v810
    %v2877 = vpop.f32.mrf.mxu0
    %v2878 = vadd.f32 %v393, %v2877
    %v2879 = vpop.f32.mrf.mxu0
    %v2880 = vadd.f32 %v397, %v2879
    %v2881 = vpop.f32.mrf.mxu0
    %v2882 = vadd.f32 %v393, %v2881
    %v2883 = vpop.f32.mrf.mxu0
    %v2884 = vadd.f32 %v397, %v2883
    %2885 = vmatprep.mubr.bf16.mxu0 %v818
    %2886 = vmatmul.mubr.bf16.gmra.mxu0 %v817
    %v2887 = vpop.f32.mrf.mxu0
    %v2888 = vadd.f32 %v393, %v2887
    %v2889 = vpop.f32.mrf.mxu0
    %v2890 = vadd.f32 %v397, %v2889
    %v2891 = vpop.f32.mrf.mxu0
    %v2892 = vadd.f32 %v393, %v2891
    %v2893 = vpop.f32.mrf.mxu0
    %v2894 = vadd.f32 %v397, %v2893
    %2895 = vmatprep.mubr.bf16.mxu0 %v825
    %2896 = vmatmul.mubr.bf16.gmra.mxu0 %v824
    %v2897 = vpop.f32.mrf.mxu0
    %v2898 = vadd.f32 %v393, %v2897
    %v2899 = vpop.f32.mrf.mxu0
    %v2900 = vadd.f32 %v397, %v2899
    %v2901 = vpop.f32.mrf.mxu0
    %v2902 = vadd.f32 %v393, %v2901
    %v2903 = vpop.f32.mrf.mxu0
    %v2904 = vadd.f32 %v397, %v2903
    %2905 = vmatprep.mubr.bf16.mxu0 %v832
    %2906 = vmatmul.mubr.bf16.gmra.mxu0 %v831
    %v2907 = vpop.f32.mrf.mxu0
    %v2908 = vadd.f32 %v393, %v2907
    %v2909 = vpop.f32.mrf.mxu0
    %v2910 = vadd.f32 %v397, %v2909
    %v2911 = vpop.f32.mrf.mxu0
    %v2912 = vadd.f32 %v393, %v2911
    %v2913 = vpop.f32.mrf.mxu0
    %v2914 = vadd.f32 %v397, %v2913
    %2915 = vmatprep.mubr.bf16.mxu0 %v839
    %2916 = vmatmul.mubr.bf16.gmra.mxu0 %v838
    %v2917 = vpop.f32.mrf.mxu0
    %v2918 = vadd.f32 %v393, %v2917
    %v2919 = vpop.f32.mrf.mxu0
    %v2920 = vadd.f32 %v397, %v2919
    %v2921 = vpop.f32.mrf.mxu0
    %v2922 = vadd.f32 %v393, %v2921
    %v2923 = vpop.f32.mrf.mxu0
    %v2924 = vadd.f32 %v397, %v2923
    %2925 = vmatprep.mubr.bf16.mxu0 %v846
    %2926 = vmatmul.mubr.bf16.gmra.mxu0 %v845
    %v2927 = vpop.f32.mrf.mxu0
    %v2928 = vadd.f32 %v393, %v2927
    %v2929 = vpop.f32.mrf.mxu0
    %v2930 = vadd.f32 %v397, %v2929
    %v2931 = vpop.f32.mrf.mxu0
    %v2932 = vadd.f32 %v393, %v2931
    %v2933 = vpop.f32.mrf.mxu0
    %v2934 = vadd.f32 %v397, %v2933
    %2935 = vmatprep.mubr.bf16.mxu0 %v853
    %2936 = vmatmul.mubr.bf16.gmra.mxu0 %v852
    %v2937 = vpop.f32.mrf.mxu0
    %v2938 = vadd.f32 %v393, %v2937
    %v2939 = vpop.f32.mrf.mxu0
    %v2940 = vadd.f32 %v397, %v2939
    %v2941 = vpop.f32.mrf.mxu0
    %v2942 = vadd.f32 %v393, %v2941
    %v2943 = vpop.f32.mrf.mxu0
    %v2944 = vadd.f32 %v397, %v2943
    %2945 = vmatprep.mubr.bf16.mxu0 %v860
    %2946 = vmatmul.mubr.bf16.gmra.mxu0 %v859
    %v2947 = vpop.f32.mrf.mxu0
    %v2948 = vadd.f32 %v393, %v2947
    %v2949 = vpop.f32.mrf.mxu0
    %v2950 = vadd.f32 %v397, %v2949
    %v2951 = vpop.f32.mrf.mxu0
    %v2952 = vadd.f32 %v393, %v2951
    %v2953 = vpop.f32.mrf.mxu0
    %v2954 = vadd.f32 %v397, %v2953
    %2955 = vdwg.mxu0
    %2956 = vmatprep.subr.bf16.mxu0 %v1645
    %2957 = vmatpush1.bf16.msra.mxu0 %v1644
    %2958 = vmatprep.subr.bf16.mxu0 %v1641
    %2959 = vmatpush1.bf16.msra.mxu0 %v1640
    %2960 = vmatprep.subr.bf16.mxu0 %v1637
    %2961 = vmatpush1.bf16.msra.mxu0 %v1636
    %2962 = vmatprep.subr.bf16.mxu0 %v1633
    %2963 = vmatpush1.bf16.msra.mxu0 %v1632
    %2964 = vmatprep.subr.bf16.mxu0 %v1629
    %2965 = vmatpush1.bf16.msra.mxu0 %v1628
    %2966 = vmatprep.subr.bf16.mxu0 %v1625
    %2967 = vmatpush1.bf16.msra.mxu0 %v1624
    %2968 = vmatprep.subr.bf16.mxu0 %v1621
    %2969 = vmatpush1.bf16.msra.mxu0 %v1620
    %2970 = vmatprep.subr.bf16.mxu0 %v1617
    %2971 = vmatpush1.bf16.msra.mxu0 %v1616
    %2972 = vmatprep.subr.bf16.mxu0 %v1677
    %2973 = vmatpush2.bf16.msra.mxu0 %v1676
    %2974 = vmatprep.subr.bf16.mxu0 %v1673
    %2975 = vmatpush2.bf16.msra.mxu0 %v1672
    %2976 = vmatprep.subr.bf16.mxu0 %v1669
    %2977 = vmatpush2.bf16.msra.mxu0 %v1668
    %2978 = vmatprep.subr.bf16.mxu0 %v1665
    %2979 = vmatpush2.bf16.msra.mxu0 %v1664
    %2980 = vmatprep.subr.bf16.mxu0 %v1661
    %2981 = vmatpush2.bf16.msra.mxu0 %v1660
    %2982 = vmatprep.subr.bf16.mxu0 %v1657
    %2983 = vmatpush2.bf16.msra.mxu0 %v1656
    %2984 = vmatprep.subr.bf16.mxu0 %v1653
    %2985 = vmatpush2.bf16.msra.mxu0 %v1652
    %2986 = vmatprep.subr.bf16.mxu0 %v1649
    %2987 = vmatpush2.bf16.msra.mxu0 %v1648
    %2988 = vmatprep.mubr.bf16.mxu0 %v757
    %2989 = vmatmul.mubr.bf16.gmra.mxu0 %v756
    %v2990 = vpop.f32.mrf.mxu0
    %v2991 = vadd.f32 %v2798, %v2990
    %v2992 = vpop.f32.mrf.mxu0
    %v2993 = vadd.f32 %v2800, %v2992
    %v2994 = vpop.f32.mrf.mxu0
    %v2995 = vadd.f32 %v2802, %v2994
    %v2996 = vpop.f32.mrf.mxu0
    %v2997 = vadd.f32 %v2804, %v2996
    %2998 = vmatprep.mubr.bf16.mxu0 %v764
    %2999 = vmatmul.mubr.bf16.gmra.mxu0 %v763
    %v3000 = vpop.f32.mrf.mxu0
    %v3001 = vadd.f32 %v2808, %v3000
    %v3002 = vpop.f32.mrf.mxu0
    %v3003 = vadd.f32 %v2810, %v3002
    %v3004 = vpop.f32.mrf.mxu0
    %v3005 = vadd.f32 %v2812, %v3004
    %v3006 = vpop.f32.mrf.mxu0
    %v3007 = vadd.f32 %v2814, %v3006
    %3008 = vmatprep.mubr.bf16.mxu0 %v771
    %3009 = vmatmul.mubr.bf16.gmra.mxu0 %v770
    %v3010 = vpop.f32.mrf.mxu0
    %v3011 = vadd.f32 %v2818, %v3010
    %v3012 = vpop.f32.mrf.mxu0
    %v3013 = vadd.f32 %v2820, %v3012
    %v3014 = vpop.f32.mrf.mxu0
    %v3015 = vadd.f32 %v2822, %v3014
    %v3016 = vpop.f32.mrf.mxu0
    %v3017 = vadd.f32 %v2824, %v3016
    %3018 = vmatprep.mubr.bf16.mxu0 %v778
    %3019 = vmatmul.mubr.bf16.gmra.mxu0 %v777
    %v3020 = vpop.f32.mrf.mxu0
    %v3021 = vadd.f32 %v2828, %v3020
    %v3022 = vpop.f32.mrf.mxu0
    %v3023 = vadd.f32 %v2830, %v3022
    %v3024 = vpop.f32.mrf.mxu0
    %v3025 = vadd.f32 %v2832, %v3024
    %v3026 = vpop.f32.mrf.mxu0
    %v3027 = vadd.f32 %v2834, %v3026
    %3028 = vmatprep.mubr.bf16.mxu0 %v785
    %3029 = vmatmul.mubr.bf16.gmra.mxu0 %v784
    %v3030 = vpop.f32.mrf.mxu0
    %v3031 = vadd.f32 %v2838, %v3030
    %v3032 = vpop.f32.mrf.mxu0
    %v3033 = vadd.f32 %v2840, %v3032
    %v3034 = vpop.f32.mrf.mxu0
    %v3035 = vadd.f32 %v2842, %v3034
    %v3036 = vpop.f32.mrf.mxu0
    %v3037 = vadd.f32 %v2844, %v3036
    %3038 = vmatprep.mubr.bf16.mxu0 %v792
    %3039 = vmatmul.mubr.bf16.gmra.mxu0 %v791
    %v3040 = vpop.f32.mrf.mxu0
    %v3041 = vadd.f32 %v2848, %v3040
    %v3042 = vpop.f32.mrf.mxu0
    %v3043 = vadd.f32 %v2850, %v3042
    %v3044 = vpop.f32.mrf.mxu0
    %v3045 = vadd.f32 %v2852, %v3044
    %v3046 = vpop.f32.mrf.mxu0
    %v3047 = vadd.f32 %v2854, %v3046
    %3048 = vmatprep.mubr.bf16.mxu0 %v799
    %3049 = vmatmul.mubr.bf16.gmra.mxu0 %v798
    %v3050 = vpop.f32.mrf.mxu0
    %v3051 = vadd.f32 %v2858, %v3050
    %v3052 = vpop.f32.mrf.mxu0
    %v3053 = vadd.f32 %v2860, %v3052
    %v3054 = vpop.f32.mrf.mxu0
    %v3055 = vadd.f32 %v2862, %v3054
    %v3056 = vpop.f32.mrf.mxu0
    %v3057 = vadd.f32 %v2864, %v3056
    %3058 = vmatprep.mubr.bf16.mxu0 %v806
    %3059 = vmatmul.mubr.bf16.gmra.mxu0 %v805
    %v3060 = vpop.f32.mrf.mxu0
    %v3061 = vadd.f32 %v2868, %v3060
    %v3062 = vpop.f32.mrf.mxu0
    %v3063 = vadd.f32 %v2870, %v3062
    %v3064 = vpop.f32.mrf.mxu0
    %v3065 = vadd.f32 %v2872, %v3064
    %v3066 = vpop.f32.mrf.mxu0
    %v3067 = vadd.f32 %v2874, %v3066
    %3068 = vmatprep.mubr.bf16.mxu0 %v813
    %3069 = vmatmul.mubr.bf16.gmra.mxu0 %v812
    %v3070 = vpop.f32.mrf.mxu0
    %v3071 = vadd.f32 %v2878, %v3070
    %v3072 = vpop.f32.mrf.mxu0
    %v3073 = vadd.f32 %v2880, %v3072
    %v3074 = vpop.f32.mrf.mxu0
    %v3075 = vadd.f32 %v2882, %v3074
    %v3076 = vpop.f32.mrf.mxu0
    %v3077 = vadd.f32 %v2884, %v3076
    %3078 = vmatprep.mubr.bf16.mxu0 %v820
    %3079 = vmatmul.mubr.bf16.gmra.mxu0 %v819
    %v3080 = vpop.f32.mrf.mxu0
    %v3081 = vadd.f32 %v2888, %v3080
    %v3082 = vpop.f32.mrf.mxu0
    %v3083 = vadd.f32 %v2890, %v3082
    %v3084 = vpop.f32.mrf.mxu0
    %v3085 = vadd.f32 %v2892, %v3084
    %v3086 = vpop.f32.mrf.mxu0
    %v3087 = vadd.f32 %v2894, %v3086
    %3088 = vmatprep.mubr.bf16.mxu0 %v827
    %3089 = vmatmul.mubr.bf16.gmra.mxu0 %v826
    %v3090 = vpop.f32.mrf.mxu0
    %v3091 = vadd.f32 %v2898, %v3090
    %v3092 = vpop.f32.mrf.mxu0
    %v3093 = vadd.f32 %v2900, %v3092
    %v3094 = vpop.f32.mrf.mxu0
    %v3095 = vadd.f32 %v2902, %v3094
    %v3096 = vpop.f32.mrf.mxu0
    %v3097 = vadd.f32 %v2904, %v3096
    %3098 = vmatprep.mubr.bf16.mxu0 %v834
    %3099 = vmatmul.mubr.bf16.gmra.mxu0 %v833
    %v3100 = vpop.f32.mrf.mxu0
    %v3101 = vadd.f32 %v2908, %v3100
    %v3102 = vpop.f32.mrf.mxu0
    %v3103 = vadd.f32 %v2910, %v3102
    %v3104 = vpop.f32.mrf.mxu0
    %v3105 = vadd.f32 %v2912, %v3104
    %v3106 = vpop.f32.mrf.mxu0
    %v3107 = vadd.f32 %v2914, %v3106
    %3108 = vmatprep.mubr.bf16.mxu0 %v841
    %3109 = vmatmul.mubr.bf16.gmra.mxu0 %v840
    %v3110 = vpop.f32.mrf.mxu0
    %v3111 = vadd.f32 %v2918, %v3110
    %v3112 = vpop.f32.mrf.mxu0
    %v3113 = vadd.f32 %v2920, %v3112
    %v3114 = vpop.f32.mrf.mxu0
    %v3115 = vadd.f32 %v2922, %v3114
    %v3116 = vpop.f32.mrf.mxu0
    %v3117 = vadd.f32 %v2924, %v3116
    %3118 = vmatprep.mubr.bf16.mxu0 %v848
    %3119 = vmatmul.mubr.bf16.gmra.mxu0 %v847
    %v3120 = vpop.f32.mrf.mxu0
    %v3121 = vadd.f32 %v2928, %v3120
    %v3122 = vpop.f32.mrf.mxu0
    %v3123 = vadd.f32 %v2930, %v3122
    %v3124 = vpop.f32.mrf.mxu0
    %v3125 = vadd.f32 %v2932, %v3124
    %v3126 = vpop.f32.mrf.mxu0
    %v3127 = vadd.f32 %v2934, %v3126
    %3128 = vmatprep.mubr.bf16.mxu0 %v855
    %3129 = vmatmul.mubr.bf16.gmra.mxu0 %v854
    %v3130 = vpop.f32.mrf.mxu0
    %v3131 = vadd.f32 %v2938, %v3130
    %v3132 = vpop.f32.mrf.mxu0
    %v3133 = vadd.f32 %v2940, %v3132
    %v3134 = vpop.f32.mrf.mxu0
    %v3135 = vadd.f32 %v2942, %v3134
    %v3136 = vpop.f32.mrf.mxu0
    %v3137 = vadd.f32 %v2944, %v3136
    %3138 = vmatprep.mubr.bf16.mxu0 %v862
    %3139 = vmatmul.mubr.bf16.gmra.mxu0 %v861
    %v3140 = vpop.f32.mrf.mxu0
    %v3141 = vadd.f32 %v2948, %v3140
    %v3142 = vpop.f32.mrf.mxu0
    %v3143 = vadd.f32 %v2950, %v3142
    %v3144 = vpop.f32.mrf.mxu0
    %v3145 = vadd.f32 %v2952, %v3144
    %v3146 = vpop.f32.mrf.mxu0
    %v3147 = vadd.f32 %v2954, %v3146
    %3148 = vdwg.mxu0
    %3149 = vmatprep.subr.bf16.mxu0 %v1709
    %3150 = vmatpush1.bf16.msra.mxu0 %v1708
    %3151 = vmatprep.subr.bf16.mxu0 %v1705
    %3152 = vmatpush1.bf16.msra.mxu0 %v1704
    %3153 = vmatprep.subr.bf16.mxu0 %v1701
    %3154 = vmatpush1.bf16.msra.mxu0 %v1700
    %3155 = vmatprep.subr.bf16.mxu0 %v1697
    %3156 = vmatpush1.bf16.msra.mxu0 %v1696
    %3157 = vmatprep.subr.bf16.mxu0 %v1693
    %3158 = vmatpush1.bf16.msra.mxu0 %v1692
    %3159 = vmatprep.subr.bf16.mxu0 %v1689
    %3160 = vmatpush1.bf16.msra.mxu0 %v1688
    %3161 = vmatprep.subr.bf16.mxu0 %v1685
    %3162 = vmatpush1.bf16.msra.mxu0 %v1684
    %3163 = vmatprep.subr.bf16.mxu0 %v1681
    %3164 = vmatpush1.bf16.msra.mxu0 %v1680
    %3165 = vmatprep.subr.bf16.mxu0 %v1741
    %3166 = vmatpush2.bf16.msra.mxu0 %v1740
    %3167 = vmatprep.subr.bf16.mxu0 %v1737
    %3168 = vmatpush2.bf16.msra.mxu0 %v1736
    %3169 = vmatprep.subr.bf16.mxu0 %v1733
    %3170 = vmatpush2.bf16.msra.mxu0 %v1732
    %3171 = vmatprep.subr.bf16.mxu0 %v1729
    %3172 = vmatpush2.bf16.msra.mxu0 %v1728
    %3173 = vmatprep.subr.bf16.mxu0 %v1725
    %3174 = vmatpush2.bf16.msra.mxu0 %v1724
    %3175 = vmatprep.subr.bf16.mxu0 %v1721
    %3176 = vmatpush2.bf16.msra.mxu0 %v1720
    %3177 = vmatprep.subr.bf16.mxu0 %v1717
    %3178 = vmatpush2.bf16.msra.mxu0 %v1716
    %3179 = vmatprep.subr.bf16.mxu0 %v1713
    %3180 = vmatpush2.bf16.msra.mxu0 %v1712
    %3181 = vmatprep.mubr.bf16.mxu0 %v759
    %3182 = vmatmul.mubr.bf16.gmra.mxu0 %v758
    %v3183 = vpop.f32.mrf.mxu0
    %v3184 = vadd.f32 %v2991, %v3183
    %v3185 = vpop.f32.mrf.mxu0
    %v3186 = vadd.f32 %v2993, %v3185
    %v3187 = vpop.f32.mrf.mxu0
    %v3188 = vadd.f32 %v2995, %v3187
    %v3189 = vpop.f32.mrf.mxu0
    %v3190 = vadd.f32 %v2997, %v3189
    %3191 = vmatprep.mubr.bf16.mxu0 %v766
    %3192 = vmatmul.mubr.bf16.gmra.mxu0 %v765
    %v3193 = vpop.f32.mrf.mxu0
    %v3194 = vadd.f32 %v3001, %v3193
    %v3195 = vpop.f32.mrf.mxu0
    %v3196 = vadd.f32 %v3003, %v3195
    %v3197 = vpop.f32.mrf.mxu0
    %v3198 = vadd.f32 %v3005, %v3197
    %v3199 = vpop.f32.mrf.mxu0
    %v3200 = vadd.f32 %v3007, %v3199
    %3201 = vmatprep.mubr.bf16.mxu0 %v773
    %3202 = vmatmul.mubr.bf16.gmra.mxu0 %v772
    %v3203 = vpop.f32.mrf.mxu0
    %v3204 = vadd.f32 %v3011, %v3203
    %v3205 = vpop.f32.mrf.mxu0
    %v3206 = vadd.f32 %v3013, %v3205
    %v3207 = vpop.f32.mrf.mxu0
    %v3208 = vadd.f32 %v3015, %v3207
    %v3209 = vpop.f32.mrf.mxu0
    %v3210 = vadd.f32 %v3017, %v3209
    %3211 = vmatprep.mubr.bf16.mxu0 %v780
    %3212 = vmatmul.mubr.bf16.gmra.mxu0 %v779
    %v3213 = vpop.f32.mrf.mxu0
    %v3214 = vadd.f32 %v3021, %v3213
    %v3215 = vpop.f32.mrf.mxu0
    %v3216 = vadd.f32 %v3023, %v3215
    %v3217 = vpop.f32.mrf.mxu0
    %v3218 = vadd.f32 %v3025, %v3217
    %v3219 = vpop.f32.mrf.mxu0
    %v3220 = vadd.f32 %v3027, %v3219
    %3221 = vmatprep.mubr.bf16.mxu0 %v787
    %3222 = vmatmul.mubr.bf16.gmra.mxu0 %v786
    %v3223 = vpop.f32.mrf.mxu0
    %v3224 = vadd.f32 %v3031, %v3223
    %v3225 = vpop.f32.mrf.mxu0
    %v3226 = vadd.f32 %v3033, %v3225
    %v3227 = vpop.f32.mrf.mxu0
    %v3228 = vadd.f32 %v3035, %v3227
    %v3229 = vpop.f32.mrf.mxu0
    %v3230 = vadd.f32 %v3037, %v3229
    %3231 = vmatprep.mubr.bf16.mxu0 %v794
    %3232 = vmatmul.mubr.bf16.gmra.mxu0 %v793
    %v3233 = vpop.f32.mrf.mxu0
    %v3234 = vadd.f32 %v3041, %v3233
    %v3235 = vpop.f32.mrf.mxu0
    %v3236 = vadd.f32 %v3043, %v3235
    %v3237 = vpop.f32.mrf.mxu0
    %v3238 = vadd.f32 %v3045, %v3237
    %v3239 = vpop.f32.mrf.mxu0
    %v3240 = vadd.f32 %v3047, %v3239
    %3241 = vmatprep.mubr.bf16.mxu0 %v801
    %3242 = vmatmul.mubr.bf16.gmra.mxu0 %v800
    %v3243 = vpop.f32.mrf.mxu0
    %v3244 = vadd.f32 %v3051, %v3243
    %v3245 = vpop.f32.mrf.mxu0
    %v3246 = vadd.f32 %v3053, %v3245
    %v3247 = vpop.f32.mrf.mxu0
    %v3248 = vadd.f32 %v3055, %v3247
    %v3249 = vpop.f32.mrf.mxu0
    %v3250 = vadd.f32 %v3057, %v3249
    %3251 = vmatprep.mubr.bf16.mxu0 %v808
    %3252 = vmatmul.mubr.bf16.gmra.mxu0 %v807
    %v3253 = vpop.f32.mrf.mxu0
    %v3254 = vadd.f32 %v3061, %v3253
    %v3255 = vpop.f32.mrf.mxu0
    %v3256 = vadd.f32 %v3063, %v3255
    %v3257 = vpop.f32.mrf.mxu0
    %v3258 = vadd.f32 %v3065, %v3257
    %v3259 = vpop.f32.mrf.mxu0
    %v3260 = vadd.f32 %v3067, %v3259
    %3261 = vmatprep.mubr.bf16.mxu0 %v815
    %3262 = vmatmul.mubr.bf16.gmra.mxu0 %v814
    %v3263 = vpop.f32.mrf.mxu0
    %v3264 = vadd.f32 %v3071, %v3263
    %v3265 = vpop.f32.mrf.mxu0
    %v3266 = vadd.f32 %v3073, %v3265
    %v3267 = vpop.f32.mrf.mxu0
    %v3268 = vadd.f32 %v3075, %v3267
    %v3269 = vpop.f32.mrf.mxu0
    %v3270 = vadd.f32 %v3077, %v3269
    %3271 = vmatprep.mubr.bf16.mxu0 %v822
    %3272 = vmatmul.mubr.bf16.gmra.mxu0 %v821
    %v3273 = vpop.f32.mrf.mxu0
    %v3274 = vadd.f32 %v3081, %v3273
    %v3275 = vpop.f32.mrf.mxu0
    %v3276 = vadd.f32 %v3083, %v3275
    %v3277 = vpop.f32.mrf.mxu0
    %v3278 = vadd.f32 %v3085, %v3277
    %v3279 = vpop.f32.mrf.mxu0
    %v3280 = vadd.f32 %v3087, %v3279
    %3281 = vmatprep.mubr.bf16.mxu0 %v829
    %3282 = vmatmul.mubr.bf16.gmra.mxu0 %v828
    %v3283 = vpop.f32.mrf.mxu0
    %v3284 = vadd.f32 %v3091, %v3283
    %v3285 = vpop.f32.mrf.mxu0
    %v3286 = vadd.f32 %v3093, %v3285
    %v3287 = vpop.f32.mrf.mxu0
    %v3288 = vadd.f32 %v3095, %v3287
    %v3289 = vpop.f32.mrf.mxu0
    %v3290 = vadd.f32 %v3097, %v3289
    %3291 = vmatprep.mubr.bf16.mxu0 %v836
    %3292 = vmatmul.mubr.bf16.gmra.mxu0 %v835
    %v3293 = vpop.f32.mrf.mxu0
    %v3294 = vadd.f32 %v3101, %v3293
    %v3295 = vpop.f32.mrf.mxu0
    %v3296 = vadd.f32 %v3103, %v3295
    %v3297 = vpop.f32.mrf.mxu0
    %v3298 = vadd.f32 %v3105, %v3297
    %v3299 = vpop.f32.mrf.mxu0
    %v3300 = vadd.f32 %v3107, %v3299
    %3301 = vmatprep.mubr.bf16.mxu0 %v843
    %3302 = vmatmul.mubr.bf16.gmra.mxu0 %v842
    %v3303 = vpop.f32.mrf.mxu0
    %v3304 = vadd.f32 %v3111, %v3303
    %v3305 = vpop.f32.mrf.mxu0
    %v3306 = vadd.f32 %v3113, %v3305
    %v3307 = vpop.f32.mrf.mxu0
    %v3308 = vadd.f32 %v3115, %v3307
    %v3309 = vpop.f32.mrf.mxu0
    %v3310 = vadd.f32 %v3117, %v3309
    %3311 = vmatprep.mubr.bf16.mxu0 %v850
    %3312 = vmatmul.mubr.bf16.gmra.mxu0 %v849
    %v3313 = vpop.f32.mrf.mxu0
    %v3314 = vadd.f32 %v3121, %v3313
    %v3315 = vpop.f32.mrf.mxu0
    %v3316 = vadd.f32 %v3123, %v3315
    %v3317 = vpop.f32.mrf.mxu0
    %v3318 = vadd.f32 %v3125, %v3317
    %v3319 = vpop.f32.mrf.mxu0
    %v3320 = vadd.f32 %v3127, %v3319
    %3321 = vmatprep.mubr.bf16.mxu0 %v857
    %3322 = vmatmul.mubr.bf16.gmra.mxu0 %v856
    %v3323 = vpop.f32.mrf.mxu0
    %v3324 = vadd.f32 %v3131, %v3323
    %v3325 = vpop.f32.mrf.mxu0
    %v3326 = vadd.f32 %v3133, %v3325
    %v3327 = vpop.f32.mrf.mxu0
    %v3328 = vadd.f32 %v3135, %v3327
    %v3329 = vpop.f32.mrf.mxu0
    %v3330 = vadd.f32 %v3137, %v3329
    %3331 = vmatprep.mubr.bf16.mxu0 %v864
    %3332 = vmatmul.mubr.bf16.gmra.mxu0 %v863
    %v3333 = vpop.f32.mrf.mxu0
    %v3334 = vadd.f32 %v3141, %v3333
    %v3335 = vpop.f32.mrf.mxu0
    %v3336 = vadd.f32 %v3143, %v3335
    %v3337 = vpop.f32.mrf.mxu0
    %v3338 = vadd.f32 %v3145, %v3337
    %v3339 = vpop.f32.mrf.mxu0
    %v3340 = vadd.f32 %v3147, %v3339
    %3341 = vdwg.mxu0
    %3342 = vmatprep.subr.bf16.mxu0 0
    %3343 = vmatpush1.bf16.msra.mxu0 0
    %3344 = vmatprep.subr.bf16.mxu0 0
    %3345 = vmatpush1.bf16.msra.mxu0 0
    %3346 = vmatprep.subr.bf16.mxu0 0
    %3347 = vmatpush1.bf16.msra.mxu0 0
    %3348 = vmatprep.subr.bf16.mxu0 0
    %3349 = vmatpush1.bf16.msra.mxu0 0
    %3350 = vmatprep.subr.bf16.mxu0 0
    %3351 = vmatpush1.bf16.msra.mxu0 0
    %3352 = vmatprep.subr.bf16.mxu0 0
    %3353 = vmatpush1.bf16.msra.mxu0 0
    %3354 = vmatprep.subr.bf16.mxu0 0
    %3355 = vmatpush1.bf16.msra.mxu0 0
    %3356 = vmatprep.subr.bf16.mxu0 %v1745
    %3357 = vmatpush1.bf16.msra.mxu0 %v1744
    %3358 = vmatprep.subr.bf16.mxu0 0
    %3359 = vmatpush2.bf16.msra.mxu0 0
    %3360 = vmatprep.subr.bf16.mxu0 0
    %3361 = vmatpush2.bf16.msra.mxu0 0
    %3362 = vmatprep.subr.bf16.mxu0 0
    %3363 = vmatpush2.bf16.msra.mxu0 0
    %3364 = vmatprep.subr.bf16.mxu0 0
    %3365 = vmatpush2.bf16.msra.mxu0 0
    %3366 = vmatprep.subr.bf16.mxu0 0
    %3367 = vmatpush2.bf16.msra.mxu0 0
    %3368 = vmatprep.subr.bf16.mxu0 0
    %3369 = vmatpush2.bf16.msra.mxu0 0
    %3370 = vmatprep.subr.bf16.mxu0 0
    %3371 = vmatpush2.bf16.msra.mxu0 0
    %3372 = vmatprep.subr.bf16.mxu0 0
    %3373 = vmatpush2.bf16.msra.mxu0 0
    %3374 = vmatprep.mubr.bf16.mxu0 0
    %3375 = vmatmul.mubr.bf16.gmra.mxu0 %v1944
    %v3376 = vpop.f32.mrf.mxu0
    %v3377 = vadd.f32 %v3184, %v3376
    %v3378 = vpop.f32.mrf.mxu0
    %v3379 = vadd.f32 %v3186, %v3378
    %v3380 = vpop.f32.mrf.mxu0
    %v3381 = vadd.f32 %v3188, %v3380
    %v3382 = vpop.f32.mrf.mxu0
    %v3383 = vadd.f32 %v3190, %v3382
    %3384 = vmatprep.mubr.bf16.mxu0 0
    %3385 = vmatmul.mubr.bf16.gmra.mxu0 %v1947
    %v3386 = vpop.f32.mrf.mxu0
    %v3387 = vadd.f32 %v3194, %v3386
    %v3388 = vpop.f32.mrf.mxu0
    %v3389 = vadd.f32 %v3196, %v3388
    %v3390 = vpop.f32.mrf.mxu0
    %v3391 = vadd.f32 %v3198, %v3390
    %v3392 = vpop.f32.mrf.mxu0
    %v3393 = vadd.f32 %v3200, %v3392
    %3394 = vmatprep.mubr.bf16.mxu0 0
    %3395 = vmatmul.mubr.bf16.gmra.mxu0 %v1950
    %v3396 = vpop.f32.mrf.mxu0
    %v3397 = vadd.f32 %v3204, %v3396
    %v3398 = vpop.f32.mrf.mxu0
    %v3399 = vadd.f32 %v3206, %v3398
    %v3400 = vpop.f32.mrf.mxu0
    %v3401 = vadd.f32 %v3208, %v3400
    %v3402 = vpop.f32.mrf.mxu0
    %v3403 = vadd.f32 %v3210, %v3402
    %3404 = vmatprep.mubr.bf16.mxu0 0
    %3405 = vmatmul.mubr.bf16.gmra.mxu0 %v1953
    %v3406 = vpop.f32.mrf.mxu0
    %v3407 = vadd.f32 %v3214, %v3406
    %v3408 = vpop.f32.mrf.mxu0
    %v3409 = vadd.f32 %v3216, %v3408
    %v3410 = vpop.f32.mrf.mxu0
    %v3411 = vadd.f32 %v3218, %v3410
    %v3412 = vpop.f32.mrf.mxu0
    %v3413 = vadd.f32 %v3220, %v3412
    %3414 = vmatprep.mubr.bf16.mxu0 0
    %3415 = vmatmul.mubr.bf16.gmra.mxu0 %v1956
    %v3416 = vpop.f32.mrf.mxu0
    %v3417 = vadd.f32 %v3224, %v3416
    %v3418 = vpop.f32.mrf.mxu0
    %v3419 = vadd.f32 %v3226, %v3418
    %v3420 = vpop.f32.mrf.mxu0
    %v3421 = vadd.f32 %v3228, %v3420
    %v3422 = vpop.f32.mrf.mxu0
    %v3423 = vadd.f32 %v3230, %v3422
    %3424 = vmatprep.mubr.bf16.mxu0 0
    %3425 = vmatmul.mubr.bf16.gmra.mxu0 %v1959
    %v3426 = vpop.f32.mrf.mxu0
    %v3427 = vadd.f32 %v3234, %v3426
    %v3428 = vpop.f32.mrf.mxu0
    %v3429 = vadd.f32 %v3236, %v3428
    %v3430 = vpop.f32.mrf.mxu0
    %v3431 = vadd.f32 %v3238, %v3430
    %v3432 = vpop.f32.mrf.mxu0
    %v3433 = vadd.f32 %v3240, %v3432
    %3434 = vmatprep.mubr.bf16.mxu0 0
    %3435 = vmatmul.mubr.bf16.gmra.mxu0 %v1962
    %v3436 = vpop.f32.mrf.mxu0
    %v3437 = vadd.f32 %v3244, %v3436
    %v3438 = vpop.f32.mrf.mxu0
    %v3439 = vadd.f32 %v3246, %v3438
    %v3440 = vpop.f32.mrf.mxu0
    %v3441 = vadd.f32 %v3248, %v3440
    %v3442 = vpop.f32.mrf.mxu0
    %v3443 = vadd.f32 %v3250, %v3442
    %3444 = vmatprep.mubr.bf16.mxu0 0
    %3445 = vmatmul.mubr.bf16.gmra.mxu0 %v1965
    %v3446 = vpop.f32.mrf.mxu0
    %v3447 = vadd.f32 %v3254, %v3446
    %v3448 = vpop.f32.mrf.mxu0
    %v3449 = vadd.f32 %v3256, %v3448
    %v3450 = vpop.f32.mrf.mxu0
    %v3451 = vadd.f32 %v3258, %v3450
    %v3452 = vpop.f32.mrf.mxu0
    %v3453 = vadd.f32 %v3260, %v3452
    %3454 = vmatprep.mubr.bf16.mxu0 0
    %3455 = vmatmul.mubr.bf16.gmra.mxu0 %v1968
    %v3456 = vpop.f32.mrf.mxu0
    %v3457 = vadd.f32 %v3264, %v3456
    %v3458 = vpop.f32.mrf.mxu0
    %v3459 = vadd.f32 %v3266, %v3458
    %v3460 = vpop.f32.mrf.mxu0
    %v3461 = vadd.f32 %v3268, %v3460
    %v3462 = vpop.f32.mrf.mxu0
    %v3463 = vadd.f32 %v3270, %v3462
    %3464 = vmatprep.mubr.bf16.mxu0 0
    %3465 = vmatmul.mubr.bf16.gmra.mxu0 %v1971
    %v3466 = vpop.f32.mrf.mxu0
    %v3467 = vadd.f32 %v3274, %v3466
    %v3468 = vpop.f32.mrf.mxu0
    %v3469 = vadd.f32 %v3276, %v3468
    %v3470 = vpop.f32.mrf.mxu0
    %v3471 = vadd.f32 %v3278, %v3470
    %v3472 = vpop.f32.mrf.mxu0
    %v3473 = vadd.f32 %v3280, %v3472
    %3474 = vmatprep.mubr.bf16.mxu0 0
    %3475 = vmatmul.mubr.bf16.gmra.mxu0 %v1974
    %v3476 = vpop.f32.mrf.mxu0
    %v3477 = vadd.f32 %v3284, %v3476
    %v3478 = vpop.f32.mrf.mxu0
    %v3479 = vadd.f32 %v3286, %v3478
    %v3480 = vpop.f32.mrf.mxu0
    %v3481 = vadd.f32 %v3288, %v3480
    %v3482 = vpop.f32.mrf.mxu0
    %v3483 = vadd.f32 %v3290, %v3482
    %3484 = vmatprep.mubr.bf16.mxu0 0
    %3485 = vmatmul.mubr.bf16.gmra.mxu0 %v1977
    %v3486 = vpop.f32.mrf.mxu0
    %v3487 = vadd.f32 %v3294, %v3486
    %v3488 = vpop.f32.mrf.mxu0
    %v3489 = vadd.f32 %v3296, %v3488
    %v3490 = vpop.f32.mrf.mxu0
    %v3491 = vadd.f32 %v3298, %v3490
    %v3492 = vpop.f32.mrf.mxu0
    %v3493 = vadd.f32 %v3300, %v3492
    %3494 = vmatprep.mubr.bf16.mxu0 0
    %3495 = vmatmul.mubr.bf16.gmra.mxu0 %v1980
    %v3496 = vpop.f32.mrf.mxu0
    %v3497 = vadd.f32 %v3304, %v3496
    %v3498 = vpop.f32.mrf.mxu0
    %v3499 = vadd.f32 %v3306, %v3498
    %v3500 = vpop.f32.mrf.mxu0
    %v3501 = vadd.f32 %v3308, %v3500
    %v3502 = vpop.f32.mrf.mxu0
    %v3503 = vadd.f32 %v3310, %v3502
    %3504 = vmatprep.mubr.bf16.mxu0 0
    %3505 = vmatmul.mubr.bf16.gmra.mxu0 %v1983
    %v3506 = vpop.f32.mrf.mxu0
    %v3507 = vadd.f32 %v3314, %v3506
    %v3508 = vpop.f32.mrf.mxu0
    %v3509 = vadd.f32 %v3316, %v3508
    %v3510 = vpop.f32.mrf.mxu0
    %v3511 = vadd.f32 %v3318, %v3510
    %v3512 = vpop.f32.mrf.mxu0
    %v3513 = vadd.f32 %v3320, %v3512
    %3514 = vmatprep.mubr.bf16.mxu0 0
    %3515 = vmatmul.mubr.bf16.gmra.mxu0 %v1986
    %v3516 = vpop.f32.mrf.mxu0
    %v3517 = vadd.f32 %v3324, %v3516
    %v3518 = vpop.f32.mrf.mxu0
    %v3519 = vadd.f32 %v3326, %v3518
    %v3520 = vpop.f32.mrf.mxu0
    %v3521 = vadd.f32 %v3328, %v3520
    %v3522 = vpop.f32.mrf.mxu0
    %v3523 = vadd.f32 %v3330, %v3522
    %3524 = vmatprep.mubr.bf16.mxu0 0
    %3525 = vmatmul.mubr.bf16.gmra.mxu0 %v1989
    %v3526 = vpop.f32.mrf.mxu0
    %v3527 = vadd.f32 %v3334, %v3526
    %v3528 = vpop.f32.mrf.mxu0
    %v3529 = vadd.f32 %v3336, %v3528
    %v3530 = vpop.f32.mrf.mxu0
    %v3531 = vadd.f32 %v3338, %v3530
    %v3532 = vpop.f32.mrf.mxu0
    %v3533 = vadd.f32 %v3340, %v3532
    %3534 = vdwg.mxu0
    %vm3535 = vcmp.gt.f32.partialorder %v2605, 0.0
    %vm3536 = vcmp.gt.f32.partialorder %v2607, 0.0
    %vm3537 = vcmp.gt.f32.partialorder %v3377, 0.0
    %vm3538 = vcmp.gt.f32.partialorder %v3379, 0.0
    %vm3539 = vcmp.gt.f32.partialorder %v2609, 0.0
    %vm3540 = vcmp.gt.f32.partialorder %v2611, 0.0
    %vm3541 = vcmp.gt.f32.partialorder %v3381, 0.0
    %vm3542 = vcmp.gt.f32.partialorder %v3383, 0.0
    %vm3543 = vcmp.gt.f32.partialorder %v2615, 0.0
    %vm3544 = vcmp.gt.f32.partialorder %v2617, 0.0
    %vm3545 = vcmp.gt.f32.partialorder %v3387, 0.0
    %vm3546 = vcmp.gt.f32.partialorder %v3389, 0.0
    %vm3547 = vcmp.gt.f32.partialorder %v2619, 0.0
    %vm3548 = vcmp.gt.f32.partialorder %v2621, 0.0
    %vm3549 = vcmp.gt.f32.partialorder %v3391, 0.0
    %vm3550 = vcmp.gt.f32.partialorder %v3393, 0.0
    %vm3551 = vcmp.gt.f32.partialorder %v2625, 0.0
    %vm3552 = vcmp.gt.f32.partialorder %v2627, 0.0
    %vm3553 = vcmp.gt.f32.partialorder %v3397, 0.0
    %vm3554 = vcmp.gt.f32.partialorder %v3399, 0.0
    %vm3555 = vcmp.gt.f32.partialorder %v2629, 0.0
    %vm3556 = vcmp.gt.f32.partialorder %v2631, 0.0
    %vm3557 = vcmp.gt.f32.partialorder %v3401, 0.0
    %vm3558 = vcmp.gt.f32.partialorder %v3403, 0.0
    %vm3559 = vcmp.gt.f32.partialorder %v2635, 0.0
    %vm3560 = vcmp.gt.f32.partialorder %v2637, 0.0
    %vm3561 = vcmp.gt.f32.partialorder %v3407, 0.0
    %vm3562 = vcmp.gt.f32.partialorder %v3409, 0.0
    %vm3563 = vcmp.gt.f32.partialorder %v2639, 0.0
    %vm3564 = vcmp.gt.f32.partialorder %v2641, 0.0
    %vm3565 = vcmp.gt.f32.partialorder %v3411, 0.0
    %vm3566 = vcmp.gt.f32.partialorder %v3413, 0.0
    %vm3567 = vcmp.gt.f32.partialorder %v2645, 0.0
    %vm3568 = vcmp.gt.f32.partialorder %v2647, 0.0
    %vm3569 = vcmp.gt.f32.partialorder %v3417, 0.0
    %vm3570 = vcmp.gt.f32.partialorder %v3419, 0.0
    %vm3571 = vcmp.gt.f32.partialorder %v2649, 0.0
    %vm3572 = vcmp.gt.f32.partialorder %v2651, 0.0
    %vm3573 = vcmp.gt.f32.partialorder %v3421, 0.0
    %vm3574 = vcmp.gt.f32.partialorder %v3423, 0.0
    %vm3575 = vcmp.gt.f32.partialorder %v2655, 0.0
    %vm3576 = vcmp.gt.f32.partialorder %v2657, 0.0
    %vm3577 = vcmp.gt.f32.partialorder %v3427, 0.0
    %vm3578 = vcmp.gt.f32.partialorder %v3429, 0.0
    %vm3579 = vcmp.gt.f32.partialorder %v2659, 0.0
    %vm3580 = vcmp.gt.f32.partialorder %v2661, 0.0
    %vm3581 = vcmp.gt.f32.partialorder %v3431, 0.0
    %vm3582 = vcmp.gt.f32.partialorder %v3433, 0.0
    %vm3583 = vcmp.gt.f32.partialorder %v2665, 0.0
    %vm3584 = vcmp.gt.f32.partialorder %v2667, 0.0
    %vm3585 = vcmp.gt.f32.partialorder %v3437, 0.0
    %vm3586 = vcmp.gt.f32.partialorder %v3439, 0.0
    %vm3587 = vcmp.gt.f32.partialorder %v2669, 0.0
    %vm3588 = vcmp.gt.f32.partialorder %v2671, 0.0
    %vm3589 = vcmp.gt.f32.partialorder %v3441, 0.0
    %vm3590 = vcmp.gt.f32.partialorder %v3443, 0.0
    %vm3591 = vcmp.gt.f32.partialorder %v2675, 0.0
    %vm3592 = vcmp.gt.f32.partialorder %v2677, 0.0
    %vm3593 = vcmp.gt.f32.partialorder %v3447, 0.0
    %vm3594 = vcmp.gt.f32.partialorder %v3449, 0.0
    %vm3595 = vcmp.gt.f32.partialorder %v2679, 0.0
    %vm3596 = vcmp.gt.f32.partialorder %v2681, 0.0
    %vm3597 = vcmp.gt.f32.partialorder %v3451, 0.0
    %vm3598 = vcmp.gt.f32.partialorder %v3453, 0.0
    %vm3599 = vcmp.gt.f32.partialorder %v2685, 0.0
    %vm3600 = vcmp.gt.f32.partialorder %v2687, 0.0
    %vm3601 = vcmp.gt.f32.partialorder %v3457, 0.0
    %vm3602 = vcmp.gt.f32.partialorder %v3459, 0.0
    %vm3603 = vcmp.gt.f32.partialorder %v2689, 0.0
    %vm3604 = vcmp.gt.f32.partialorder %v2691, 0.0
    %vm3605 = vcmp.gt.f32.partialorder %v3461, 0.0
    %vm3606 = vcmp.gt.f32.partialorder %v3463, 0.0
    %vm3607 = vcmp.gt.f32.partialorder %v2695, 0.0
    %vm3608 = vcmp.gt.f32.partialorder %v2697, 0.0
    %vm3609 = vcmp.gt.f32.partialorder %v3467, 0.0
    %vm3610 = vcmp.gt.f32.partialorder %v3469, 0.0
    %vm3611 = vcmp.gt.f32.partialorder %v2699, 0.0
    %vm3612 = vcmp.gt.f32.partialorder %v2701, 0.0
    %vm3613 = vcmp.gt.f32.partialorder %v3471, 0.0
    %vm3614 = vcmp.gt.f32.partialorder %v3473, 0.0
    %vm3615 = vcmp.gt.f32.partialorder %v2705, 0.0
    %vm3616 = vcmp.gt.f32.partialorder %v2707, 0.0
    %vm3617 = vcmp.gt.f32.partialorder %v3477, 0.0
    %vm3618 = vcmp.gt.f32.partialorder %v3479, 0.0
    %vm3619 = vcmp.gt.f32.partialorder %v2709, 0.0
    %vm3620 = vcmp.gt.f32.partialorder %v2711, 0.0
    %vm3621 = vcmp.gt.f32.partialorder %v3481, 0.0
    %vm3622 = vcmp.gt.f32.partialorder %v3483, 0.0
    %vm3623 = vcmp.gt.f32.partialorder %v2715, 0.0
    %vm3624 = vcmp.gt.f32.partialorder %v2717, 0.0
    %vm3625 = vcmp.gt.f32.partialorder %v3487, 0.0
    %vm3626 = vcmp.gt.f32.partialorder %v3489, 0.0
    %vm3627 = vcmp.gt.f32.partialorder %v2719, 0.0
    %vm3628 = vcmp.gt.f32.partialorder %v2721, 0.0
    %vm3629 = vcmp.gt.f32.partialorder %v3491, 0.0
    %vm3630 = vcmp.gt.f32.partialorder %v3493, 0.0
    %vm3631 = vcmp.gt.f32.partialorder %v2725, 0.0
    %vm3632 = vcmp.gt.f32.partialorder %v2727, 0.0
    %vm3633 = vcmp.gt.f32.partialorder %v3497, 0.0
    %vm3634 = vcmp.gt.f32.partialorder %v3499, 0.0
    %vm3635 = vcmp.gt.f32.partialorder %v2729, 0.0
    %vm3636 = vcmp.gt.f32.partialorder %v2731, 0.0
    %vm3637 = vcmp.gt.f32.partialorder %v3501, 0.0
    %vm3638 = vcmp.gt.f32.partialorder %v3503, 0.0
    %vm3639 = vcmp.gt.f32.partialorder %v2735, 0.0
    %vm3640 = vcmp.gt.f32.partialorder %v2737, 0.0
    %vm3641 = vcmp.gt.f32.partialorder %v3507, 0.0
    %vm3642 = vcmp.gt.f32.partialorder %v3509, 0.0
    %vm3643 = vcmp.gt.f32.partialorder %v2739, 0.0
    %vm3644 = vcmp.gt.f32.partialorder %v2741, 0.0
    %vm3645 = vcmp.gt.f32.partialorder %v3511, 0.0
    %vm3646 = vcmp.gt.f32.partialorder %v3513, 0.0
    %vm3647 = vcmp.gt.f32.partialorder %v2745, 0.0
    %vm3648 = vcmp.gt.f32.partialorder %v2747, 0.0
    %vm3649 = vcmp.gt.f32.partialorder %v3517, 0.0
    %vm3650 = vcmp.gt.f32.partialorder %v3519, 0.0
    %vm3651 = vcmp.gt.f32.partialorder %v2749, 0.0
    %vm3652 = vcmp.gt.f32.partialorder %v2751, 0.0
    %vm3653 = vcmp.gt.f32.partialorder %v3521, 0.0
    %vm3654 = vcmp.gt.f32.partialorder %v3523, 0.0
    %vm3655 = vcmp.gt.f32.partialorder %v2755, 0.0
    %vm3656 = vcmp.gt.f32.partialorder %v2757, 0.0
    %vm3657 = vcmp.gt.f32.partialorder %v3527, 0.0
    %vm3658 = vcmp.gt.f32.partialorder %v3529, 0.0
    %vm3659 = vcmp.gt.f32.partialorder %v2759, 0.0
    %vm3660 = vcmp.gt.f32.partialorder %v2761, 0.0
    %vm3661 = vcmp.gt.f32.partialorder %v3531, 0.0
    %vm3662 = vcmp.gt.f32.partialorder %v3533, 0.0
    %v3663 = vmul.f32 %v2605, 0.2
    %v3664 = vmul.f32 %v2607, 0.2
    %v3665 = vmul.f32 %v3377, 0.2
    %v3666 = vmul.f32 %v3379, 0.2
    %v3667 = vmul.f32 %v2609, 0.2
    %v3668 = vmul.f32 %v2611, 0.2
    %v3669 = vmul.f32 %v3381, 0.2
    %v3670 = vmul.f32 %v3383, 0.2
    %v3671 = vmul.f32 %v2615, 0.2
    %v3672 = vmul.f32 %v2617, 0.2
    %v3673 = vmul.f32 %v3387, 0.2
    %v3674 = vmul.f32 %v3389, 0.2
    %v3675 = vmul.f32 %v2619, 0.2
    %v3676 = vmul.f32 %v2621, 0.2
    %v3677 = vmul.f32 %v3391, 0.2
    %v3678 = vmul.f32 %v3393, 0.2
    %v3679 = vmul.f32 %v2625, 0.2
    %v3680 = vmul.f32 %v2627, 0.2
    %v3681 = vmul.f32 %v3397, 0.2
    %v3682 = vmul.f32 %v3399, 0.2
    %v3683 = vmul.f32 %v2629, 0.2
    %v3684 = vmul.f32 %v2631, 0.2
    %v3685 = vmul.f32 %v3401, 0.2
    %v3686 = vmul.f32 %v3403, 0.2
    %v3687 = vmul.f32 %v2635, 0.2
    %v3688 = vmul.f32 %v2637, 0.2
    %v3689 = vmul.f32 %v3407, 0.2
    %v3690 = vmul.f32 %v3409, 0.2
    %v3691 = vmul.f32 %v2639, 0.2
    %v3692 = vmul.f32 %v2641, 0.2
    %v3693 = vmul.f32 %v3411, 0.2
    %v3694 = vmul.f32 %v3413, 0.2
    %v3695 = vmul.f32 %v2645, 0.2
    %v3696 = vmul.f32 %v2647, 0.2
    %v3697 = vmul.f32 %v3417, 0.2
    %v3698 = vmul.f32 %v3419, 0.2
    %v3699 = vmul.f32 %v2649, 0.2
    %v3700 = vmul.f32 %v2651, 0.2
    %v3701 = vmul.f32 %v3421, 0.2
    %v3702 = vmul.f32 %v3423, 0.2
    %v3703 = vmul.f32 %v2655, 0.2
    %v3704 = vmul.f32 %v2657, 0.2
    %v3705 = vmul.f32 %v3427, 0.2
    %v3706 = vmul.f32 %v3429, 0.2
    %v3707 = vmul.f32 %v2659, 0.2
    %v3708 = vmul.f32 %v2661, 0.2
    %v3709 = vmul.f32 %v3431, 0.2
    %v3710 = vmul.f32 %v3433, 0.2
    %v3711 = vmul.f32 %v2665, 0.2
    %v3712 = vmul.f32 %v2667, 0.2
    %v3713 = vmul.f32 %v3437, 0.2
    %v3714 = vmul.f32 %v3439, 0.2
    %v3715 = vmul.f32 %v2669, 0.2
    %v3716 = vmul.f32 %v2671, 0.2
    %v3717 = vmul.f32 %v3441, 0.2
    %v3718 = vmul.f32 %v3443, 0.2
    %v3719 = vmul.f32 %v2675, 0.2
    %v3720 = vmul.f32 %v2677, 0.2
    %v3721 = vmul.f32 %v3447, 0.2
    %v3722 = vmul.f32 %v3449, 0.2
    %v3723 = vmul.f32 %v2679, 0.2
    %v3724 = vmul.f32 %v2681, 0.2
    %v3725 = vmul.f32 %v3451, 0.2
    %v3726 = vmul.f32 %v3453, 0.2
    %v3727 = vmul.f32 %v2685, 0.2
    %v3728 = vmul.f32 %v2687, 0.2
    %v3729 = vmul.f32 %v3457, 0.2
    %v3730 = vmul.f32 %v3459, 0.2
    %v3731 = vmul.f32 %v2689, 0.2
    %v3732 = vmul.f32 %v2691, 0.2
    %v3733 = vmul.f32 %v3461, 0.2
    %v3734 = vmul.f32 %v3463, 0.2
    %v3735 = vmul.f32 %v2695, 0.2
    %v3736 = vmul.f32 %v2697, 0.2
    %v3737 = vmul.f32 %v3467, 0.2
    %v3738 = vmul.f32 %v3469, 0.2
    %v3739 = vmul.f32 %v2699, 0.2
    %v3740 = vmul.f32 %v2701, 0.2
    %v3741 = vmul.f32 %v3471, 0.2
    %v3742 = vmul.f32 %v3473, 0.2
    %v3743 = vmul.f32 %v2705, 0.2
    %v3744 = vmul.f32 %v2707, 0.2
    %v3745 = vmul.f32 %v3477, 0.2
    %v3746 = vmul.f32 %v3479, 0.2
    %v3747 = vmul.f32 %v2709, 0.2
    %v3748 = vmul.f32 %v2711, 0.2
    %v3749 = vmul.f32 %v3481, 0.2
    %v3750 = vmul.f32 %v3483, 0.2
    %v3751 = vmul.f32 %v2715, 0.2
    %v3752 = vmul.f32 %v2717, 0.2
    %v3753 = vmul.f32 %v3487, 0.2
    %v3754 = vmul.f32 %v3489, 0.2
    %v3755 = vmul.f32 %v2719, 0.2
    %v3756 = vmul.f32 %v2721, 0.2
    %v3757 = vmul.f32 %v3491, 0.2
    %v3758 = vmul.f32 %v3493, 0.2
    %v3759 = vmul.f32 %v2725, 0.2
    %v3760 = vmul.f32 %v2727, 0.2
    %v3761 = vmul.f32 %v3497, 0.2
    %v3762 = vmul.f32 %v3499, 0.2
    %v3763 = vmul.f32 %v2729, 0.2
    %v3764 = vmul.f32 %v2731, 0.2
    %v3765 = vmul.f32 %v3501, 0.2
    %v3766 = vmul.f32 %v3503, 0.2
    %v3767 = vmul.f32 %v2735, 0.2
    %v3768 = vmul.f32 %v2737, 0.2
    %v3769 = vmul.f32 %v3507, 0.2
    %v3770 = vmul.f32 %v3509, 0.2
    %v3771 = vmul.f32 %v2739, 0.2
    %v3772 = vmul.f32 %v2741, 0.2
    %v3773 = vmul.f32 %v3511, 0.2
    %v3774 = vmul.f32 %v3513, 0.2
    %v3775 = vmul.f32 %v2745, 0.2
    %v3776 = vmul.f32 %v2747, 0.2
    %v3777 = vmul.f32 %v3517, 0.2
    %v3778 = vmul.f32 %v3519, 0.2
    %v3779 = vmul.f32 %v2749, 0.2
    %v3780 = vmul.f32 %v2751, 0.2
    %v3781 = vmul.f32 %v3521, 0.2
    %v3782 = vmul.f32 %v3523, 0.2
    %v3783 = vmul.f32 %v2755, 0.2
    %v3784 = vmul.f32 %v2757, 0.2
    %v3785 = vmul.f32 %v3527, 0.2
    %v3786 = vmul.f32 %v3529, 0.2
    %v3787 = vmul.f32 %v2759, 0.2
    %v3788 = vmul.f32 %v2761, 0.2
    %v3789 = vmul.f32 %v3531, 0.2
    %v3790 = vmul.f32 %v3533, 0.2
    %v3791 = vsel %vm3535, %v2605, %v3663
    %v3792 = vsel %vm3536, %v2607, %v3664
    %v3793 = vsel %vm3537, %v3377, %v3665
    %v3794 = vsel %vm3538, %v3379, %v3666
    %v3795 = vsel %vm3539, %v2609, %v3667
    %v3796 = vsel %vm3540, %v2611, %v3668
    %v3797 = vsel %vm3541, %v3381, %v3669
    %v3798 = vsel %vm3542, %v3383, %v3670
    %v3799 = vsel %vm3543, %v2615, %v3671
    %v3800 = vsel %vm3544, %v2617, %v3672
    %v3801 = vsel %vm3545, %v3387, %v3673
    %v3802 = vsel %vm3546, %v3389, %v3674
    %v3803 = vsel %vm3547, %v2619, %v3675
    %v3804 = vsel %vm3548, %v2621, %v3676
    %v3805 = vsel %vm3549, %v3391, %v3677
    %v3806 = vsel %vm3550, %v3393, %v3678
    %v3807 = vsel %vm3551, %v2625, %v3679
    %v3808 = vsel %vm3552, %v2627, %v3680
    %v3809 = vsel %vm3553, %v3397, %v3681
    %v3810 = vsel %vm3554, %v3399, %v3682
    %v3811 = vsel %vm3555, %v2629, %v3683
    %v3812 = vsel %vm3556, %v2631, %v3684
    %v3813 = vsel %vm3557, %v3401, %v3685
    %v3814 = vsel %vm3558, %v3403, %v3686
    %v3815 = vsel %vm3559, %v2635, %v3687
    %v3816 = vsel %vm3560, %v2637, %v3688
    %v3817 = vsel %vm3561, %v3407, %v3689
    %v3818 = vsel %vm3562, %v3409, %v3690
    %v3819 = vsel %vm3563, %v2639, %v3691
    %v3820 = vsel %vm3564, %v2641, %v3692
    %v3821 = vsel %vm3565, %v3411, %v3693
    %v3822 = vsel %vm3566, %v3413, %v3694
    %v3823 = vsel %vm3567, %v2645, %v3695
    %v3824 = vsel %vm3568, %v2647, %v3696
    %v3825 = vsel %vm3569, %v3417, %v3697
    %v3826 = vsel %vm3570, %v3419, %v3698
    %v3827 = vsel %vm3571, %v2649, %v3699
    %v3828 = vsel %vm3572, %v2651, %v3700
    %v3829 = vsel %vm3573, %v3421, %v3701
    %v3830 = vsel %vm3574, %v3423, %v3702
    %v3831 = vsel %vm3575, %v2655, %v3703
    %v3832 = vsel %vm3576, %v2657, %v3704
    %v3833 = vsel %vm3577, %v3427, %v3705
    %v3834 = vsel %vm3578, %v3429, %v3706
    %v3835 = vsel %vm3579, %v2659, %v3707
    %v3836 = vsel %vm3580, %v2661, %v3708
    %v3837 = vsel %vm3581, %v3431, %v3709
    %v3838 = vsel %vm3582, %v3433, %v3710
    %v3839 = vsel %vm3583, %v2665, %v3711
    %v3840 = vsel %vm3584, %v2667, %v3712
    %v3841 = vsel %vm3585, %v3437, %v3713
    %v3842 = vsel %vm3586, %v3439, %v3714
    %v3843 = vsel %vm3587, %v2669, %v3715
    %v3844 = vsel %vm3588, %v2671, %v3716
    %v3845 = vsel %vm3589, %v3441, %v3717
    %v3846 = vsel %vm3590, %v3443, %v3718
    %v3847 = vsel %vm3591, %v2675, %v3719
    %v3848 = vsel %vm3592, %v2677, %v3720
    %v3849 = vsel %vm3593, %v3447, %v3721
    %v3850 = vsel %vm3594, %v3449, %v3722
    %v3851 = vsel %vm3595, %v2679, %v3723
    %v3852 = vsel %vm3596, %v2681, %v3724
    %v3853 = vsel %vm3597, %v3451, %v3725
    %v3854 = vsel %vm3598, %v3453, %v3726
    %v3855 = vsel %vm3599, %v2685, %v3727
    %v3856 = vsel %vm3600, %v2687, %v3728
    %v3857 = vsel %vm3601, %v3457, %v3729
    %v3858 = vsel %vm3602, %v3459, %v3730
    %v3859 = vsel %vm3603, %v2689, %v3731
    %v3860 = vsel %vm3604, %v2691, %v3732
    %v3861 = vsel %vm3605, %v3461, %v3733
    %v3862 = vsel %vm3606, %v3463, %v3734
    %v3863 = vsel %vm3607, %v2695, %v3735
    %v3864 = vsel %vm3608, %v2697, %v3736
    %v3865 = vsel %vm3609, %v3467, %v3737
    %v3866 = vsel %vm3610, %v3469, %v3738
    %v3867 = vsel %vm3611, %v2699, %v3739
    %v3868 = vsel %vm3612, %v2701, %v3740
    %v3869 = vsel %vm3613, %v3471, %v3741
    %v3870 = vsel %vm3614, %v3473, %v3742
    %v3871 = vsel %vm3615, %v2705, %v3743
    %v3872 = vsel %vm3616, %v2707, %v3744
    %v3873 = vsel %vm3617, %v3477, %v3745
    %v3874 = vsel %vm3618, %v3479, %v3746
    %v3875 = vsel %vm3619, %v2709, %v3747
    %v3876 = vsel %vm3620, %v2711, %v3748
    %v3877 = vsel %vm3621, %v3481, %v3749
    %v3878 = vsel %vm3622, %v3483, %v3750
    %v3879 = vsel %vm3623, %v2715, %v3751
    %v3880 = vsel %vm3624, %v2717, %v3752
    %v3881 = vsel %vm3625, %v3487, %v3753
    %v3882 = vsel %vm3626, %v3489, %v3754
    %v3883 = vsel %vm3627, %v2719, %v3755
    %v3884 = vsel %vm3628, %v2721, %v3756
    %v3885 = vsel %vm3629, %v3491, %v3757
    %v3886 = vsel %vm3630, %v3493, %v3758
    %v3887 = vsel %vm3631, %v2725, %v3759
    %v3888 = vsel %vm3632, %v2727, %v3760
    %v3889 = vsel %vm3633, %v3497, %v3761
    %v3890 = vsel %vm3634, %v3499, %v3762
    %v3891 = vsel %vm3635, %v2729, %v3763
    %v3892 = vsel %vm3636, %v2731, %v3764
    %v3893 = vsel %vm3637, %v3501, %v3765
    %v3894 = vsel %vm3638, %v3503, %v3766
    %v3895 = vsel %vm3639, %v2735, %v3767
    %v3896 = vsel %vm3640, %v2737, %v3768
    %v3897 = vsel %vm3641, %v3507, %v3769
    %v3898 = vsel %vm3642, %v3509, %v3770
    %v3899 = vsel %vm3643, %v2739, %v3771
    %v3900 = vsel %vm3644, %v2741, %v3772
    %v3901 = vsel %vm3645, %v3511, %v3773
    %v3902 = vsel %vm3646, %v3513, %v3774
    %v3903 = vsel %vm3647, %v2745, %v3775
    %v3904 = vsel %vm3648, %v2747, %v3776
    %v3905 = vsel %vm3649, %v3517, %v3777
    %v3906 = vsel %vm3650, %v3519, %v3778
    %v3907 = vsel %vm3651, %v2749, %v3779
    %v3908 = vsel %vm3652, %v2751, %v3780
    %v3909 = vsel %vm3653, %v3521, %v3781
    %v3910 = vsel %vm3654, %v3523, %v3782
    %v3911 = vsel %vm3655, %v2755, %v3783
    %v3912 = vsel %vm3656, %v2757, %v3784
    %v3913 = vsel %vm3657, %v3527, %v3785
    %v3914 = vsel %vm3658, %v3529, %v3786
    %v3915 = vsel %vm3659, %v2759, %v3787
    %v3916 = vsel %vm3660, %v2761, %v3788
    %v3917 = vsel %vm3661, %v3531, %v3789
    %v3918 = vsel %vm3662, %v3533, %v3790
    %v3919 = vpack.c.bf16 %v3795, %v3791
    %v3920 = vpack.c.bf16 %v3796, %v3792
    %v3921 = vpack.c.bf16 %v3797, %v3793
    %v3922 = vpack.c.bf16 %v3798, %v3794
    %v3923 = vpack.c.bf16 %v3803, %v3799
    %v3924 = vpack.c.bf16 %v3804, %v3800
    %v3925 = vpack.c.bf16 %v3805, %v3801
    %v3926 = vpack.c.bf16 %v3806, %v3802
    %v3927 = vpack.c.bf16 %v3811, %v3807
    %v3928 = vpack.c.bf16 %v3812, %v3808
    %v3929 = vpack.c.bf16 %v3813, %v3809
    %v3930 = vpack.c.bf16 %v3814, %v3810
    %v3931 = vpack.c.bf16 %v3819, %v3815
    %v3932 = vpack.c.bf16 %v3820, %v3816
    %v3933 = vpack.c.bf16 %v3821, %v3817
    %v3934 = vpack.c.bf16 %v3822, %v3818
    %v3935 = vpack.c.bf16 %v3827, %v3823
    %v3936 = vpack.c.bf16 %v3828, %v3824
    %v3937 = vpack.c.bf16 %v3829, %v3825
    %v3938 = vpack.c.bf16 %v3830, %v3826
    %v3939 = vpack.c.bf16 %v3835, %v3831
    %v3940 = vpack.c.bf16 %v3836, %v3832
    %v3941 = vpack.c.bf16 %v3837, %v3833
    %v3942 = vpack.c.bf16 %v3838, %v3834
    %v3943 = vpack.c.bf16 %v3843, %v3839
    %v3944 = vpack.c.bf16 %v3844, %v3840
    %v3945 = vpack.c.bf16 %v3845, %v3841
    %v3946 = vpack.c.bf16 %v3846, %v3842
    %v3947 = vpack.c.bf16 %v3851, %v3847
    %v3948 = vpack.c.bf16 %v3852, %v3848
    %v3949 = vpack.c.bf16 %v3853, %v3849
    %v3950 = vpack.c.bf16 %v3854, %v3850
    %v3951 = vpack.c.bf16 %v3859, %v3855
    %v3952 = vpack.c.bf16 %v3860, %v3856
    %v3953 = vpack.c.bf16 %v3861, %v3857
    %v3954 = vpack.c.bf16 %v3862, %v3858
    %v3955 = vpack.c.bf16 %v3867, %v3863
    %v3956 = vpack.c.bf16 %v3868, %v3864
    %v3957 = vpack.c.bf16 %v3869, %v3865
    %v3958 = vpack.c.bf16 %v3870, %v3866
    %v3959 = vpack.c.bf16 %v3875, %v3871
    %v3960 = vpack.c.bf16 %v3876, %v3872
    %v3961 = vpack.c.bf16 %v3877, %v3873
    %v3962 = vpack.c.bf16 %v3878, %v3874
    %v3963 = vpack.c.bf16 %v3883, %v3879
    %v3964 = vpack.c.bf16 %v3884, %v3880
    %v3965 = vpack.c.bf16 %v3885, %v3881
    %v3966 = vpack.c.bf16 %v3886, %v3882
    %v3967 = vpack.c.bf16 %v3891, %v3887
    %v3968 = vpack.c.bf16 %v3892, %v3888
    %v3969 = vpack.c.bf16 %v3893, %v3889
    %v3970 = vpack.c.bf16 %v3894, %v3890
    %v3971 = vpack.c.bf16 %v3899, %v3895
    %v3972 = vpack.c.bf16 %v3900, %v3896
    %v3973 = vpack.c.bf16 %v3901, %v3897
    %v3974 = vpack.c.bf16 %v3902, %v3898
    %v3975 = vpack.c.bf16 %v3907, %v3903
    %v3976 = vpack.c.bf16 %v3908, %v3904
    %v3977 = vpack.c.bf16 %v3909, %v3905
    %v3978 = vpack.c.bf16 %v3910, %v3906
    %v3979 = vpack.c.bf16 %v3915, %v3911
    %v3980 = vpack.c.bf16 %v3916, %v3912
    %v3981 = vpack.c.bf16 %v3917, %v3913
    %v3982 = vpack.c.bf16 %v3918, %v3914
    %v3983 = vld [vmem:[#allocation2] sm:$0xff]
    %v3984 = vld [vmem:[#allocation2 + $0x8] sm:$0xff]
    %v3985 = vld [vmem:[#allocation2 + $0x10] sm:$0xff]
    %v3986 = vld [vmem:[#allocation2 + $0x18] sm:$0xff]
    %v3987 = vld [vmem:[#allocation2 + $0x20] sm:$0xff]
    %v3988 = vld [vmem:[#allocation2 + $0x28] sm:$0xff]
    %v3989 = vld [vmem:[#allocation2 + $0x30] sm:$0xff]
    %v3990 = vld [vmem:[#allocation2 + $0x38] sm:$0xff]
    %v3991 = vld [vmem:[#allocation2 + $0x40] sm:$0xff]
    %v3992 = vld [vmem:[#allocation2 + $0x48] sm:$0xff]
    %v3993 = vld [vmem:[#allocation2 + $0x50] sm:$0xff]
    %v3994 = vld [vmem:[#allocation2 + $0x58] sm:$0xff]
    %v3995 = vld [vmem:[#allocation2 + $0x60] sm:$0xff]
    %v3996 = vld [vmem:[#allocation2 + $0x68] sm:$0xff]
    %v3997 = vld [vmem:[#allocation2 + $0x70] sm:$0xff]
    %v3998 = vld [vmem:[#allocation2 + $0x78] sm:$0xff]
    %v3999 = vld [vmem:[#allocation2 + $0x80] sm:$0xff]
    %v4000 = vld [vmem:[#allocation2 + $0x88] sm:$0xff]
    %v4001 = vld [vmem:[#allocation2 + $0x90] sm:$0xff]
    %v4002 = vld [vmem:[#allocation2 + $0x98] sm:$0xff]
    %v4003 = vld [vmem:[#allocation2 + $0xa0] sm:$0xff]
    %v4004 = vld [vmem:[#allocation2 + $0xa8] sm:$0xff]
    %v4005 = vld [vmem:[#allocation2 + $0xb0] sm:$0xff]
    %v4006 = vld [vmem:[#allocation2 + $0xb8] sm:$0xff]
    %v4007 = vld [vmem:[#allocation2 + $0xc0] sm:$0xff]
    %v4008 = vld [vmem:[#allocation2 + $0xc8] sm:$0xff]
    %v4009 = vld [vmem:[#allocation2 + $0xd0] sm:$0xff]
    %v4010 = vld [vmem:[#allocation2 + $0xd8] sm:$0xff]
    %v4011 = vld [vmem:[#allocation2 + $0xe0] sm:$0xff]
    %v4012 = vld [vmem:[#allocation2 + $0xe8] sm:$0xff]
    %v4013 = vld [vmem:[#allocation2 + $0xf0] sm:$0xff]
    %v4014 = vld [vmem:[#allocation2 + $0xf8] sm:$0xff]
    %v4015 = vld [vmem:[#allocation2 + $0x100] sm:$0xff]
    %v4016 = vld [vmem:[#allocation2 + $0x108] sm:$0xff]
    %v4017 = vld [vmem:[#allocation2 + $0x110] sm:$0xff]
    %v4018 = vld [vmem:[#allocation2 + $0x118] sm:$0xff]
    %v4019 = vld [vmem:[#allocation2 + $0x120] sm:$0xff]
    %v4020 = vld [vmem:[#allocation2 + $0x128] sm:$0xff]
    %v4021 = vld [vmem:[#allocation2 + $0x130] sm:$0xff]
    %v4022 = vld [vmem:[#allocation2 + $0x138] sm:$0xff]
    %v4023 = vld [vmem:[#allocation2 + $0x140] sm:$0xff]
    %v4024 = vld [vmem:[#allocation2 + $0x148] sm:$0xff]
    %v4025 = vld [vmem:[#allocation2 + $0x150] sm:$0xff]
    %v4026 = vld [vmem:[#allocation2 + $0x158] sm:$0xff]
    %v4027 = vld [vmem:[#allocation2 + $0x160] sm:$0xff]
    %v4028 = vld [vmem:[#allocation2 + $0x168] sm:$0xff]
    %v4029 = vld [vmem:[#allocation2 + $0x170] sm:$0xff]
    %v4030 = vld [vmem:[#allocation2 + $0x178] sm:$0xff]
    %v4031 = vld [vmem:[#allocation2 + $0x180] sm:$0xff]
    %v4032 = vld [vmem:[#allocation2 + $0x188] sm:$0xff]
    %v4033 = vld [vmem:[#allocation2 + $0x190] sm:$0xff]
    %v4034 = vld [vmem:[#allocation2 + $0x198] sm:$0xff]
    %v4035 = vld [vmem:[#allocation2 + $0x1a0] sm:$0xff]
    %v4036 = vld [vmem:[#allocation2 + $0x1a8] sm:$0xff]
    %v4037 = vld [vmem:[#allocation2 + $0x1b0] sm:$0xff]
    %v4038 = vld [vmem:[#allocation2 + $0x1b8] sm:$0xff]
    %v4039 = vld [vmem:[#allocation2 + $0x1c0] sm:$0xff]
    %v4040 = vld [vmem:[#allocation2 + $0x1c8] sm:$0xff]
    %v4041 = vld [vmem:[#allocation2 + $0x1d0] sm:$0xff]
    %v4042 = vld [vmem:[#allocation2 + $0x1d8] sm:$0xff]
    %v4043 = vld [vmem:[#allocation2 + $0x1e0] sm:$0xff]
    %v4044 = vld [vmem:[#allocation2 + $0x1e8] sm:$0xff]
    %v4045 = vld [vmem:[#allocation2 + $0x1f0] sm:$0xff]
    %v4046 = vld [vmem:[#allocation2 + $0x1f8] sm:$0xff]
    %v4047 = vld [vmem:[%s4] sm:$0x3]
    %v4049 = vlaneseq
    %v4050 = vshrl.u32 %v4049, 7
    %v4051 = vsub.s32 0, %v4050
    %v4052 = vrot.slane %v4047, %v4051
    %v4053 = vlaneseq
    %v4054 = vshrl.u32 %v4053, 7
    %v4055 = vsub.s32 1, %v4054
    %v4056 = vrot.slane %v4047, %v4055
    %v4123 = vunpack.c.l.b16 %v3983
    %v4124 = vunpack.c.h.b16 %v3983
    %v4125 = vunpack.c.l.b16 %v3984
    %v4126 = vunpack.c.h.b16 %v3984
    %v4127 = vunpack.c.l.b16 %v3985
    %v4128 = vunpack.c.h.b16 %v3985
    %v4129 = vunpack.c.l.b16 %v3986
    %v4130 = vunpack.c.h.b16 %v3986
    %v4131 = vunpack.c.l.b16 %v3987
    %v4132 = vunpack.c.h.b16 %v3987
    %v4133 = vunpack.c.l.b16 %v3988
    %v4134 = vunpack.c.h.b16 %v3988
    %v4135 = vunpack.c.l.b16 %v3989
    %v4136 = vunpack.c.h.b16 %v3989
    %v4137 = vunpack.c.l.b16 %v3990
    %v4138 = vunpack.c.h.b16 %v3990
    %v4139 = vunpack.c.l.b16 %v3991
    %v4140 = vunpack.c.h.b16 %v3991
    %v4141 = vunpack.c.l.b16 %v3992
    %v4142 = vunpack.c.h.b16 %v3992
    %v4143 = vunpack.c.l.b16 %v3993
    %v4144 = vunpack.c.h.b16 %v3993
    %v4145 = vunpack.c.l.b16 %v3994
    %v4146 = vunpack.c.h.b16 %v3994
    %v4147 = vunpack.c.l.b16 %v3995
    %v4148 = vunpack.c.h.b16 %v3995
    %v4149 = vunpack.c.l.b16 %v3996
    %v4150 = vunpack.c.h.b16 %v3996
    %v4151 = vunpack.c.l.b16 %v3997
    %v4152 = vunpack.c.h.b16 %v3997
    %v4153 = vunpack.c.l.b16 %v3998
    %v4154 = vunpack.c.h.b16 %v3998
    %v4155 = vunpack.c.l.b16 %v3999
    %v4156 = vunpack.c.h.b16 %v3999
    %v4157 = vunpack.c.l.b16 %v4000
    %v4158 = vunpack.c.h.b16 %v4000
    %v4159 = vunpack.c.l.b16 %v4001
    %v4160 = vunpack.c.h.b16 %v4001
    %v4161 = vunpack.c.l.b16 %v4002
    %v4162 = vunpack.c.h.b16 %v4002
    %v4163 = vunpack.c.l.b16 %v4003
    %v4164 = vunpack.c.h.b16 %v4003
    %v4165 = vunpack.c.l.b16 %v4004
    %v4166 = vunpack.c.h.b16 %v4004
    %v4167 = vunpack.c.l.b16 %v4005
    %v4168 = vunpack.c.h.b16 %v4005
    %v4169 = vunpack.c.l.b16 %v4006
    %v4170 = vunpack.c.h.b16 %v4006
    %v4171 = vunpack.c.l.b16 %v4007
    %v4172 = vunpack.c.h.b16 %v4007
    %v4173 = vunpack.c.l.b16 %v4008
    %v4174 = vunpack.c.h.b16 %v4008
    %v4175 = vunpack.c.l.b16 %v4009
    %v4176 = vunpack.c.h.b16 %v4009
    %v4177 = vunpack.c.l.b16 %v4010
    %v4178 = vunpack.c.h.b16 %v4010
    %v4179 = vunpack.c.l.b16 %v4011
    %v4180 = vunpack.c.h.b16 %v4011
    %v4181 = vunpack.c.l.b16 %v4012
    %v4182 = vunpack.c.h.b16 %v4012
    %v4183 = vunpack.c.l.b16 %v4013
    %v4184 = vunpack.c.h.b16 %v4013
    %v4185 = vunpack.c.l.b16 %v4014
    %v4186 = vunpack.c.h.b16 %v4014
    %v4187 = vunpack.c.l.b16 %v4015
    %v4188 = vunpack.c.h.b16 %v4015
    %v4189 = vunpack.c.l.b16 %v4016
    %v4190 = vunpack.c.h.b16 %v4016
    %v4191 = vunpack.c.l.b16 %v4017
    %v4192 = vunpack.c.h.b16 %v4017
    %v4193 = vunpack.c.l.b16 %v4018
    %v4194 = vunpack.c.h.b16 %v4018
    %v4195 = vunpack.c.l.b16 %v4019
    %v4196 = vunpack.c.h.b16 %v4019
    %v4197 = vunpack.c.l.b16 %v4020
    %v4198 = vunpack.c.h.b16 %v4020
    %v4199 = vunpack.c.l.b16 %v4021
    %v4200 = vunpack.c.h.b16 %v4021
    %v4201 = vunpack.c.l.b16 %v4022
    %v4202 = vunpack.c.h.b16 %v4022
    %v4203 = vunpack.c.l.b16 %v4023
    %v4204 = vunpack.c.h.b16 %v4023
    %v4205 = vunpack.c.l.b16 %v4024
    %v4206 = vunpack.c.h.b16 %v4024
    %v4207 = vunpack.c.l.b16 %v4025
    %v4208 = vunpack.c.h.b16 %v4025
    %v4209 = vunpack.c.l.b16 %v4026
    %v4210 = vunpack.c.h.b16 %v4026
    %v4211 = vunpack.c.l.b16 %v4027
    %v4212 = vunpack.c.h.b16 %v4027
    %v4213 = vunpack.c.l.b16 %v4028
    %v4214 = vunpack.c.h.b16 %v4028
    %v4215 = vunpack.c.l.b16 %v4029
    %v4216 = vunpack.c.h.b16 %v4029
    %v4217 = vunpack.c.l.b16 %v4030
    %v4218 = vunpack.c.h.b16 %v4030
    %v4219 = vunpack.c.l.b16 %v4031
    %v4220 = vunpack.c.h.b16 %v4031
    %v4221 = vunpack.c.l.b16 %v4032
    %v4222 = vunpack.c.h.b16 %v4032
    %v4223 = vunpack.c.l.b16 %v4033
    %v4224 = vunpack.c.h.b16 %v4033
    %v4225 = vunpack.c.l.b16 %v4034
    %v4226 = vunpack.c.h.b16 %v4034
    %v4227 = vunpack.c.l.b16 %v4035
    %v4228 = vunpack.c.h.b16 %v4035
    %v4229 = vunpack.c.l.b16 %v4036
    %v4230 = vunpack.c.h.b16 %v4036
    %v4231 = vunpack.c.l.b16 %v4037
    %v4232 = vunpack.c.h.b16 %v4037
    %v4233 = vunpack.c.l.b16 %v4038
    %v4234 = vunpack.c.h.b16 %v4038
    %v4235 = vunpack.c.l.b16 %v4039
    %v4236 = vunpack.c.h.b16 %v4039
    %v4237 = vunpack.c.l.b16 %v4040
    %v4238 = vunpack.c.h.b16 %v4040
    %v4239 = vunpack.c.l.b16 %v4041
    %v4240 = vunpack.c.h.b16 %v4041
    %v4241 = vunpack.c.l.b16 %v4042
    %v4242 = vunpack.c.h.b16 %v4042
    %v4243 = vunpack.c.l.b16 %v4043
    %v4244 = vunpack.c.h.b16 %v4043
    %v4245 = vunpack.c.l.b16 %v4044
    %v4246 = vunpack.c.h.b16 %v4044
    %v4247 = vunpack.c.l.b16 %v4045
    %v4248 = vunpack.c.h.b16 %v4045
    %v4249 = vunpack.c.l.b16 %v4046
    %v4250 = vunpack.c.h.b16 %v4046
    %v4251 = vpack.c.b16 %v4125, %v4123
    %v4252 = vpack.c.b16 %v4126, %v4124
    %v4253 = vpack.c.b16 %v4129, %v4127
    %v4254 = vpack.c.b16 %v4130, %v4128
    %v4255 = vpack.c.b16 %v4133, %v4131
    %v4256 = vpack.c.b16 %v4134, %v4132
    %v4257 = vpack.c.b16 %v4137, %v4135
    %v4258 = vpack.c.b16 %v4138, %v4136
    %v4259 = vpack.c.b16 %v4141, %v4139
    %v4260 = vpack.c.b16 %v4142, %v4140
    %v4261 = vpack.c.b16 %v4145, %v4143
    %v4262 = vpack.c.b16 %v4146, %v4144
    %v4263 = vpack.c.b16 %v4149, %v4147
    %v4264 = vpack.c.b16 %v4150, %v4148
    %v4265 = vpack.c.b16 %v4153, %v4151
    %v4266 = vpack.c.b16 %v4154, %v4152
    %v4267 = vpack.c.b16 %v4157, %v4155
    %v4268 = vpack.c.b16 %v4158, %v4156
    %v4269 = vpack.c.b16 %v4161, %v4159
    %v4270 = vpack.c.b16 %v4162, %v4160
    %v4271 = vpack.c.b16 %v4165, %v4163
    %v4272 = vpack.c.b16 %v4166, %v4164
    %v4273 = vpack.c.b16 %v4169, %v4167
    %v4274 = vpack.c.b16 %v4170, %v4168
    %v4275 = vpack.c.b16 %v4173, %v4171
    %v4276 = vpack.c.b16 %v4174, %v4172
    %v4277 = vpack.c.b16 %v4177, %v4175
    %v4278 = vpack.c.b16 %v4178, %v4176
    %v4279 = vpack.c.b16 %v4181, %v4179
    %v4280 = vpack.c.b16 %v4182, %v4180
    %v4281 = vpack.c.b16 %v4185, %v4183
    %v4282 = vpack.c.b16 %v4186, %v4184
    %v4283 = vpack.c.b16 %v4189, %v4187
    %v4284 = vpack.c.b16 %v4190, %v4188
    %v4285 = vpack.c.b16 %v4193, %v4191
    %v4286 = vpack.c.b16 %v4194, %v4192
    %v4287 = vpack.c.b16 %v4197, %v4195
    %v4288 = vpack.c.b16 %v4198, %v4196
    %v4289 = vpack.c.b16 %v4201, %v4199
    %v4290 = vpack.c.b16 %v4202, %v4200
    %v4291 = vpack.c.b16 %v4205, %v4203
    %v4292 = vpack.c.b16 %v4206, %v4204
    %v4293 = vpack.c.b16 %v4209, %v4207
    %v4294 = vpack.c.b16 %v4210, %v4208
    %v4295 = vpack.c.b16 %v4213, %v4211
    %v4296 = vpack.c.b16 %v4214, %v4212
    %v4297 = vpack.c.b16 %v4217, %v4215
    %v4298 = vpack.c.b16 %v4218, %v4216
    %v4299 = vpack.c.b16 %v4221, %v4219
    %v4300 = vpack.c.b16 %v4222, %v4220
    %v4301 = vpack.c.b16 %v4225, %v4223
    %v4302 = vpack.c.b16 %v4226, %v4224
    %v4303 = vpack.c.b16 %v4229, %v4227
    %v4304 = vpack.c.b16 %v4230, %v4228
    %v4305 = vpack.c.b16 %v4233, %v4231
    %v4306 = vpack.c.b16 %v4234, %v4232
    %v4307 = vpack.c.b16 %v4237, %v4235
    %v4308 = vpack.c.b16 %v4238, %v4236
    %v4309 = vpack.c.b16 %v4241, %v4239
    %v4310 = vpack.c.b16 %v4242, %v4240
    %v4311 = vpack.c.b16 %v4245, %v4243
    %v4312 = vpack.c.b16 %v4246, %v4244
    %v4313 = vpack.c.b16 %v4249, %v4247
    %v4314 = vpack.c.b16 %v4250, %v4248
    %4379 = vmatprep.subr.bf16.mxu0 %v4266
    %4380 = vmatpush1.bf16.msra.mxu0 %v4265
    %4381 = vmatprep.subr.bf16.mxu0 %v4264
    %4382 = vmatpush1.bf16.msra.mxu0 %v4263
    %4383 = vmatprep.subr.bf16.mxu0 %v4262
    %4384 = vmatpush1.bf16.msra.mxu0 %v4261
    %4385 = vmatprep.subr.bf16.mxu0 %v4260
    %4386 = vmatpush1.bf16.msra.mxu0 %v4259
    %4387 = vmatprep.subr.bf16.mxu0 %v4258
    %4388 = vmatpush1.bf16.msra.mxu0 %v4257
    %4389 = vmatprep.subr.bf16.mxu0 %v4256
    %4390 = vmatpush1.bf16.msra.mxu0 %v4255
    %4391 = vmatprep.subr.bf16.mxu0 %v4254
    %4392 = vmatpush1.bf16.msra.mxu0 %v4253
    %4393 = vmatprep.subr.bf16.mxu0 %v4252
    %4394 = vmatpush1.bf16.msra.mxu0 %v4251
    %4395 = vmatprep.subr.bf16.mxu0 %v4282
    %4396 = vmatpush2.bf16.msra.mxu0 %v4281
    %4397 = vmatprep.subr.bf16.mxu0 %v4280
    %4398 = vmatpush2.bf16.msra.mxu0 %v4279
    %4399 = vmatprep.subr.bf16.mxu0 %v4278
    %4400 = vmatpush2.bf16.msra.mxu0 %v4277
    %4401 = vmatprep.subr.bf16.mxu0 %v4276
    %4402 = vmatpush2.bf16.msra.mxu0 %v4275
    %4403 = vmatprep.subr.bf16.mxu0 %v4274
    %4404 = vmatpush2.bf16.msra.mxu0 %v4273
    %4405 = vmatprep.subr.bf16.mxu0 %v4272
    %4406 = vmatpush2.bf16.msra.mxu0 %v4271
    %4407 = vmatprep.subr.bf16.mxu0 %v4270
    %4408 = vmatpush2.bf16.msra.mxu0 %v4269
    %4409 = vmatprep.subr.bf16.mxu0 %v4268
    %4410 = vmatpush2.bf16.msra.mxu0 %v4267
    %4411 = vmatprep.mubr.bf16.mxu0 %v3920
    %4412 = vmatmul.mubr.bf16.gmra.mxu0 %v3919
    %v4413 = vpop.f32.mrf.mxu0
    %v4414 = vadd.f32 %v4052, %v4413
    %v4415 = vpop.f32.mrf.mxu0
    %v4416 = vadd.f32 %v4056, %v4415
    %v4417 = vpop.f32.mrf.mxu0
    %v4418 = vadd.f32 %v4052, %v4417
    %v4419 = vpop.f32.mrf.mxu0
    %v4420 = vadd.f32 %v4056, %v4419
    %4421 = vmatprep.mubr.bf16.mxu0 %v3924
    %4422 = vmatmul.mubr.bf16.gmra.mxu0 %v3923
    %v4423 = vpop.f32.mrf.mxu0
    %v4424 = vadd.f32 %v4052, %v4423
    %v4425 = vpop.f32.mrf.mxu0
    %v4426 = vadd.f32 %v4056, %v4425
    %v4427 = vpop.f32.mrf.mxu0
    %v4428 = vadd.f32 %v4052, %v4427
    %v4429 = vpop.f32.mrf.mxu0
    %v4430 = vadd.f32 %v4056, %v4429
    %4431 = vmatprep.mubr.bf16.mxu0 %v3928
    %4432 = vmatmul.mubr.bf16.gmra.mxu0 %v3927
    %v4433 = vpop.f32.mrf.mxu0
    %v4434 = vadd.f32 %v4052, %v4433
    %v4435 = vpop.f32.mrf.mxu0
    %v4436 = vadd.f32 %v4056, %v4435
    %v4437 = vpop.f32.mrf.mxu0
    %v4438 = vadd.f32 %v4052, %v4437
    %v4439 = vpop.f32.mrf.mxu0
    %v4440 = vadd.f32 %v4056, %v4439
    %4441 = vmatprep.mubr.bf16.mxu0 %v3932
    %4442 = vmatmul.mubr.bf16.gmra.mxu0 %v3931
    %v4443 = vpop.f32.mrf.mxu0
    %v4444 = vadd.f32 %v4052, %v4443
    %v4445 = vpop.f32.mrf.mxu0
    %v4446 = vadd.f32 %v4056, %v4445
    %v4447 = vpop.f32.mrf.mxu0
    %v4448 = vadd.f32 %v4052, %v4447
    %v4449 = vpop.f32.mrf.mxu0
    %v4450 = vadd.f32 %v4056, %v4449
    %4451 = vmatprep.mubr.bf16.mxu0 %v3936
    %4452 = vmatmul.mubr.bf16.gmra.mxu0 %v3935
    %v4453 = vpop.f32.mrf.mxu0
    %v4454 = vadd.f32 %v4052, %v4453
    %v4455 = vpop.f32.mrf.mxu0
    %v4456 = vadd.f32 %v4056, %v4455
    %v4457 = vpop.f32.mrf.mxu0
    %v4458 = vadd.f32 %v4052, %v4457
    %v4459 = vpop.f32.mrf.mxu0
    %v4460 = vadd.f32 %v4056, %v4459
    %4461 = vmatprep.mubr.bf16.mxu0 %v3940
    %4462 = vmatmul.mubr.bf16.gmra.mxu0 %v3939
    %v4463 = vpop.f32.mrf.mxu0
    %v4464 = vadd.f32 %v4052, %v4463
    %v4465 = vpop.f32.mrf.mxu0
    %v4466 = vadd.f32 %v4056, %v4465
    %v4467 = vpop.f32.mrf.mxu0
    %v4468 = vadd.f32 %v4052, %v4467
    %v4469 = vpop.f32.mrf.mxu0
    %v4470 = vadd.f32 %v4056, %v4469
    %4471 = vmatprep.mubr.bf16.mxu0 %v3944
    %4472 = vmatmul.mubr.bf16.gmra.mxu0 %v3943
    %v4473 = vpop.f32.mrf.mxu0
    %v4474 = vadd.f32 %v4052, %v4473
    %v4475 = vpop.f32.mrf.mxu0
    %v4476 = vadd.f32 %v4056, %v4475
    %v4477 = vpop.f32.mrf.mxu0
    %v4478 = vadd.f32 %v4052, %v4477
    %v4479 = vpop.f32.mrf.mxu0
    %v4480 = vadd.f32 %v4056, %v4479
    %4481 = vmatprep.mubr.bf16.mxu0 %v3948
    %4482 = vmatmul.mubr.bf16.gmra.mxu0 %v3947
    %v4483 = vpop.f32.mrf.mxu0
    %v4484 = vadd.f32 %v4052, %v4483
    %v4485 = vpop.f32.mrf.mxu0
    %v4486 = vadd.f32 %v4056, %v4485
    %v4487 = vpop.f32.mrf.mxu0
    %v4488 = vadd.f32 %v4052, %v4487
    %v4489 = vpop.f32.mrf.mxu0
    %v4490 = vadd.f32 %v4056, %v4489
    %4491 = vmatprep.mubr.bf16.mxu0 %v3952
    %4492 = vmatmul.mubr.bf16.gmra.mxu0 %v3951
    %v4493 = vpop.f32.mrf.mxu0
    %v4494 = vadd.f32 %v4052, %v4493
    %v4495 = vpop.f32.mrf.mxu0
    %v4496 = vadd.f32 %v4056, %v4495
    %v4497 = vpop.f32.mrf.mxu0
    %v4498 = vadd.f32 %v4052, %v4497
    %v4499 = vpop.f32.mrf.mxu0
    %v4500 = vadd.f32 %v4056, %v4499
    %4501 = vmatprep.mubr.bf16.mxu0 %v3956
    %4502 = vmatmul.mubr.bf16.gmra.mxu0 %v3955
    %v4503 = vpop.f32.mrf.mxu0
    %v4504 = vadd.f32 %v4052, %v4503
    %v4505 = vpop.f32.mrf.mxu0
    %v4506 = vadd.f32 %v4056, %v4505
    %v4507 = vpop.f32.mrf.mxu0
    %v4508 = vadd.f32 %v4052, %v4507
    %v4509 = vpop.f32.mrf.mxu0
    %v4510 = vadd.f32 %v4056, %v4509
    %4511 = vmatprep.mubr.bf16.mxu0 %v3960
    %4512 = vmatmul.mubr.bf16.gmra.mxu0 %v3959
    %v4513 = vpop.f32.mrf.mxu0
    %v4514 = vadd.f32 %v4052, %v4513
    %v4515 = vpop.f32.mrf.mxu0
    %v4516 = vadd.f32 %v4056, %v4515
    %v4517 = vpop.f32.mrf.mxu0
    %v4518 = vadd.f32 %v4052, %v4517
    %v4519 = vpop.f32.mrf.mxu0
    %v4520 = vadd.f32 %v4056, %v4519
    %4521 = vmatprep.mubr.bf16.mxu0 %v3964
    %4522 = vmatmul.mubr.bf16.gmra.mxu0 %v3963
    %v4523 = vpop.f32.mrf.mxu0
    %v4524 = vadd.f32 %v4052, %v4523
    %v4525 = vpop.f32.mrf.mxu0
    %v4526 = vadd.f32 %v4056, %v4525
    %v4527 = vpop.f32.mrf.mxu0
    %v4528 = vadd.f32 %v4052, %v4527
    %v4529 = vpop.f32.mrf.mxu0
    %v4530 = vadd.f32 %v4056, %v4529
    %4531 = vmatprep.mubr.bf16.mxu0 %v3968
    %4532 = vmatmul.mubr.bf16.gmra.mxu0 %v3967
    %v4533 = vpop.f32.mrf.mxu0
    %v4534 = vadd.f32 %v4052, %v4533
    %v4535 = vpop.f32.mrf.mxu0
    %v4536 = vadd.f32 %v4056, %v4535
    %v4537 = vpop.f32.mrf.mxu0
    %v4538 = vadd.f32 %v4052, %v4537
    %v4539 = vpop.f32.mrf.mxu0
    %v4540 = vadd.f32 %v4056, %v4539
    %4541 = vmatprep.mubr.bf16.mxu0 %v3972
    %4542 = vmatmul.mubr.bf16.gmra.mxu0 %v3971
    %v4543 = vpop.f32.mrf.mxu0
    %v4544 = vadd.f32 %v4052, %v4543
    %v4545 = vpop.f32.mrf.mxu0
    %v4546 = vadd.f32 %v4056, %v4545
    %v4547 = vpop.f32.mrf.mxu0
    %v4548 = vadd.f32 %v4052, %v4547
    %v4549 = vpop.f32.mrf.mxu0
    %v4550 = vadd.f32 %v4056, %v4549
    %4551 = vmatprep.mubr.bf16.mxu0 %v3976
    %4552 = vmatmul.mubr.bf16.gmra.mxu0 %v3975
    %v4553 = vpop.f32.mrf.mxu0
    %v4554 = vadd.f32 %v4052, %v4553
    %v4555 = vpop.f32.mrf.mxu0
    %v4556 = vadd.f32 %v4056, %v4555
    %v4557 = vpop.f32.mrf.mxu0
    %v4558 = vadd.f32 %v4052, %v4557
    %v4559 = vpop.f32.mrf.mxu0
    %v4560 = vadd.f32 %v4056, %v4559
    %4561 = vmatprep.mubr.bf16.mxu0 %v3980
    %4562 = vmatmul.mubr.bf16.gmra.mxu0 %v3979
    %v4563 = vpop.f32.mrf.mxu0
    %v4564 = vadd.f32 %v4052, %v4563
    %v4565 = vpop.f32.mrf.mxu0
    %v4566 = vadd.f32 %v4056, %v4565
    %v4567 = vpop.f32.mrf.mxu0
    %v4568 = vadd.f32 %v4052, %v4567
    %v4569 = vpop.f32.mrf.mxu0
    %v4570 = vadd.f32 %v4056, %v4569
    %4571 = vdwg.mxu0
    %4572 = vmatprep.subr.bf16.mxu0 %v4298
    %4573 = vmatpush1.bf16.msra.mxu0 %v4297
    %4574 = vmatprep.subr.bf16.mxu0 %v4296
    %4575 = vmatpush1.bf16.msra.mxu0 %v4295
    %4576 = vmatprep.subr.bf16.mxu0 %v4294
    %4577 = vmatpush1.bf16.msra.mxu0 %v4293
    %4578 = vmatprep.subr.bf16.mxu0 %v4292
    %4579 = vmatpush1.bf16.msra.mxu0 %v4291
    %4580 = vmatprep.subr.bf16.mxu0 %v4290
    %4581 = vmatpush1.bf16.msra.mxu0 %v4289
    %4582 = vmatprep.subr.bf16.mxu0 %v4288
    %4583 = vmatpush1.bf16.msra.mxu0 %v4287
    %4584 = vmatprep.subr.bf16.mxu0 %v4286
    %4585 = vmatpush1.bf16.msra.mxu0 %v4285
    %4586 = vmatprep.subr.bf16.mxu0 %v4284
    %4587 = vmatpush1.bf16.msra.mxu0 %v4283
    %4588 = vmatprep.subr.bf16.mxu0 %v4314
    %4589 = vmatpush2.bf16.msra.mxu0 %v4313
    %4590 = vmatprep.subr.bf16.mxu0 %v4312
    %4591 = vmatpush2.bf16.msra.mxu0 %v4311
    %4592 = vmatprep.subr.bf16.mxu0 %v4310
    %4593 = vmatpush2.bf16.msra.mxu0 %v4309
    %4594 = vmatprep.subr.bf16.mxu0 %v4308
    %4595 = vmatpush2.bf16.msra.mxu0 %v4307
    %4596 = vmatprep.subr.bf16.mxu0 %v4306
    %4597 = vmatpush2.bf16.msra.mxu0 %v4305
    %4598 = vmatprep.subr.bf16.mxu0 %v4304
    %4599 = vmatpush2.bf16.msra.mxu0 %v4303
    %4600 = vmatprep.subr.bf16.mxu0 %v4302
    %4601 = vmatpush2.bf16.msra.mxu0 %v4301
    %4602 = vmatprep.subr.bf16.mxu0 %v4300
    %4603 = vmatpush2.bf16.msra.mxu0 %v4299
    %4604 = vmatprep.mubr.bf16.mxu0 %v3922
    %4605 = vmatmul.mubr.bf16.gmra.mxu0 %v3921
    %v4606 = vpop.f32.mrf.mxu0
    %v4607 = vadd.f32 %v4414, %v4606
    %v4608 = vpop.f32.mrf.mxu0
    %v4609 = vadd.f32 %v4416, %v4608
    %v4610 = vpop.f32.mrf.mxu0
    %v4611 = vadd.f32 %v4418, %v4610
    %v4612 = vpop.f32.mrf.mxu0
    %v4613 = vadd.f32 %v4420, %v4612
    %4614 = vmatprep.mubr.bf16.mxu0 %v3926
    %4615 = vmatmul.mubr.bf16.gmra.mxu0 %v3925
    %v4616 = vpop.f32.mrf.mxu0
    %v4617 = vadd.f32 %v4424, %v4616
    %v4618 = vpop.f32.mrf.mxu0
    %v4619 = vadd.f32 %v4426, %v4618
    %v4620 = vpop.f32.mrf.mxu0
    %v4621 = vadd.f32 %v4428, %v4620
    %v4622 = vpop.f32.mrf.mxu0
    %v4623 = vadd.f32 %v4430, %v4622
    %4624 = vmatprep.mubr.bf16.mxu0 %v3930
    %4625 = vmatmul.mubr.bf16.gmra.mxu0 %v3929
    %v4626 = vpop.f32.mrf.mxu0
    %v4627 = vadd.f32 %v4434, %v4626
    %v4628 = vpop.f32.mrf.mxu0
    %v4629 = vadd.f32 %v4436, %v4628
    %v4630 = vpop.f32.mrf.mxu0
    %v4631 = vadd.f32 %v4438, %v4630
    %v4632 = vpop.f32.mrf.mxu0
    %v4633 = vadd.f32 %v4440, %v4632
    %4634 = vmatprep.mubr.bf16.mxu0 %v3934
    %4635 = vmatmul.mubr.bf16.gmra.mxu0 %v3933
    %v4636 = vpop.f32.mrf.mxu0
    %v4637 = vadd.f32 %v4444, %v4636
    %v4638 = vpop.f32.mrf.mxu0
    %v4639 = vadd.f32 %v4446, %v4638
    %v4640 = vpop.f32.mrf.mxu0
    %v4641 = vadd.f32 %v4448, %v4640
    %v4642 = vpop.f32.mrf.mxu0
    %v4643 = vadd.f32 %v4450, %v4642
    %4644 = vmatprep.mubr.bf16.mxu0 %v3938
    %4645 = vmatmul.mubr.bf16.gmra.mxu0 %v3937
    %v4646 = vpop.f32.mrf.mxu0
    %v4647 = vadd.f32 %v4454, %v4646
    %v4648 = vpop.f32.mrf.mxu0
    %v4649 = vadd.f32 %v4456, %v4648
    %v4650 = vpop.f32.mrf.mxu0
    %v4651 = vadd.f32 %v4458, %v4650
    %v4652 = vpop.f32.mrf.mxu0
    %v4653 = vadd.f32 %v4460, %v4652
    %4654 = vmatprep.mubr.bf16.mxu0 %v3942
    %4655 = vmatmul.mubr.bf16.gmra.mxu0 %v3941
    %v4656 = vpop.f32.mrf.mxu0
    %v4657 = vadd.f32 %v4464, %v4656
    %v4658 = vpop.f32.mrf.mxu0
    %v4659 = vadd.f32 %v4466, %v4658
    %v4660 = vpop.f32.mrf.mxu0
    %v4661 = vadd.f32 %v4468, %v4660
    %v4662 = vpop.f32.mrf.mxu0
    %v4663 = vadd.f32 %v4470, %v4662
    %4664 = vmatprep.mubr.bf16.mxu0 %v3946
    %4665 = vmatmul.mubr.bf16.gmra.mxu0 %v3945
    %v4666 = vpop.f32.mrf.mxu0
    %v4667 = vadd.f32 %v4474, %v4666
    %v4668 = vpop.f32.mrf.mxu0
    %v4669 = vadd.f32 %v4476, %v4668
    %v4670 = vpop.f32.mrf.mxu0
    %v4671 = vadd.f32 %v4478, %v4670
    %v4672 = vpop.f32.mrf.mxu0
    %v4673 = vadd.f32 %v4480, %v4672
    %4674 = vmatprep.mubr.bf16.mxu0 %v3950
    %4675 = vmatmul.mubr.bf16.gmra.mxu0 %v3949
    %v4676 = vpop.f32.mrf.mxu0
    %v4677 = vadd.f32 %v4484, %v4676
    %v4678 = vpop.f32.mrf.mxu0
    %v4679 = vadd.f32 %v4486, %v4678
    %v4680 = vpop.f32.mrf.mxu0
    %v4681 = vadd.f32 %v4488, %v4680
    %v4682 = vpop.f32.mrf.mxu0
    %v4683 = vadd.f32 %v4490, %v4682
    %4684 = vmatprep.mubr.bf16.mxu0 %v3954
    %4685 = vmatmul.mubr.bf16.gmra.mxu0 %v3953
    %v4686 = vpop.f32.mrf.mxu0
    %v4687 = vadd.f32 %v4494, %v4686
    %v4688 = vpop.f32.mrf.mxu0
    %v4689 = vadd.f32 %v4496, %v4688
    %v4690 = vpop.f32.mrf.mxu0
    %v4691 = vadd.f32 %v4498, %v4690
    %v4692 = vpop.f32.mrf.mxu0
    %v4693 = vadd.f32 %v4500, %v4692
    %4694 = vmatprep.mubr.bf16.mxu0 %v3958
    %4695 = vmatmul.mubr.bf16.gmra.mxu0 %v3957
    %v4696 = vpop.f32.mrf.mxu0
    %v4697 = vadd.f32 %v4504, %v4696
    %v4698 = vpop.f32.mrf.mxu0
    %v4699 = vadd.f32 %v4506, %v4698
    %v4700 = vpop.f32.mrf.mxu0
    %v4701 = vadd.f32 %v4508, %v4700
    %v4702 = vpop.f32.mrf.mxu0
    %v4703 = vadd.f32 %v4510, %v4702
    %4704 = vmatprep.mubr.bf16.mxu0 %v3962
    %4705 = vmatmul.mubr.bf16.gmra.mxu0 %v3961
    %v4706 = vpop.f32.mrf.mxu0
    %v4707 = vadd.f32 %v4514, %v4706
    %v4708 = vpop.f32.mrf.mxu0
    %v4709 = vadd.f32 %v4516, %v4708
    %v4710 = vpop.f32.mrf.mxu0
    %v4711 = vadd.f32 %v4518, %v4710
    %v4712 = vpop.f32.mrf.mxu0
    %v4713 = vadd.f32 %v4520, %v4712
    %4714 = vmatprep.mubr.bf16.mxu0 %v3966
    %4715 = vmatmul.mubr.bf16.gmra.mxu0 %v3965
    %v4716 = vpop.f32.mrf.mxu0
    %v4717 = vadd.f32 %v4524, %v4716
    %v4718 = vpop.f32.mrf.mxu0
    %v4719 = vadd.f32 %v4526, %v4718
    %v4720 = vpop.f32.mrf.mxu0
    %v4721 = vadd.f32 %v4528, %v4720
    %v4722 = vpop.f32.mrf.mxu0
    %v4723 = vadd.f32 %v4530, %v4722
    %4724 = vmatprep.mubr.bf16.mxu0 %v3970
    %4725 = vmatmul.mubr.bf16.gmra.mxu0 %v3969
    %v4726 = vpop.f32.mrf.mxu0
    %v4727 = vadd.f32 %v4534, %v4726
    %v4728 = vpop.f32.mrf.mxu0
    %v4729 = vadd.f32 %v4536, %v4728
    %v4730 = vpop.f32.mrf.mxu0
    %v4731 = vadd.f32 %v4538, %v4730
    %v4732 = vpop.f32.mrf.mxu0
    %v4733 = vadd.f32 %v4540, %v4732
    %4734 = vmatprep.mubr.bf16.mxu0 %v3974
    %4735 = vmatmul.mubr.bf16.gmra.mxu0 %v3973
    %v4736 = vpop.f32.mrf.mxu0
    %v4737 = vadd.f32 %v4544, %v4736
    %v4738 = vpop.f32.mrf.mxu0
    %v4739 = vadd.f32 %v4546, %v4738
    %v4740 = vpop.f32.mrf.mxu0
    %v4741 = vadd.f32 %v4548, %v4740
    %v4742 = vpop.f32.mrf.mxu0
    %v4743 = vadd.f32 %v4550, %v4742
    %4744 = vmatprep.mubr.bf16.mxu0 %v3978
    %4745 = vmatmul.mubr.bf16.gmra.mxu0 %v3977
    %v4746 = vpop.f32.mrf.mxu0
    %v4747 = vadd.f32 %v4554, %v4746
    %v4748 = vpop.f32.mrf.mxu0
    %v4749 = vadd.f32 %v4556, %v4748
    %v4750 = vpop.f32.mrf.mxu0
    %v4751 = vadd.f32 %v4558, %v4750
    %v4752 = vpop.f32.mrf.mxu0
    %v4753 = vadd.f32 %v4560, %v4752
    %4754 = vmatprep.mubr.bf16.mxu0 %v3982
    %4755 = vmatmul.mubr.bf16.gmra.mxu0 %v3981
    %v4756 = vpop.f32.mrf.mxu0
    %v4757 = vadd.f32 %v4564, %v4756
    %v4758 = vpop.f32.mrf.mxu0
    %v4759 = vadd.f32 %v4566, %v4758
    %v4760 = vpop.f32.mrf.mxu0
    %v4761 = vadd.f32 %v4568, %v4760
    %v4762 = vpop.f32.mrf.mxu0
    %v4763 = vadd.f32 %v4570, %v4762
    %4764 = vdwg.mxu0
    %vm4765 = vcmp.gt.f32.partialorder %v4607, 0.0
    %vm4766 = vcmp.gt.f32.partialorder %v4609, 0.0
    %vm4767 = vcmp.gt.f32.partialorder %v4611, 0.0
    %vm4768 = vcmp.gt.f32.partialorder %v4613, 0.0
    %vm4769 = vcmp.gt.f32.partialorder %v4617, 0.0
    %vm4770 = vcmp.gt.f32.partialorder %v4619, 0.0
    %vm4771 = vcmp.gt.f32.partialorder %v4621, 0.0
    %vm4772 = vcmp.gt.f32.partialorder %v4623, 0.0
    %vm4773 = vcmp.gt.f32.partialorder %v4627, 0.0
    %vm4774 = vcmp.gt.f32.partialorder %v4629, 0.0
    %vm4775 = vcmp.gt.f32.partialorder %v4631, 0.0
    %vm4776 = vcmp.gt.f32.partialorder %v4633, 0.0
    %vm4777 = vcmp.gt.f32.partialorder %v4637, 0.0
    %vm4778 = vcmp.gt.f32.partialorder %v4639, 0.0
    %vm4779 = vcmp.gt.f32.partialorder %v4641, 0.0
    %vm4780 = vcmp.gt.f32.partialorder %v4643, 0.0
    %vm4781 = vcmp.gt.f32.partialorder %v4647, 0.0
    %vm4782 = vcmp.gt.f32.partialorder %v4649, 0.0
    %vm4783 = vcmp.gt.f32.partialorder %v4651, 0.0
    %vm4784 = vcmp.gt.f32.partialorder %v4653, 0.0
    %vm4785 = vcmp.gt.f32.partialorder %v4657, 0.0
    %vm4786 = vcmp.gt.f32.partialorder %v4659, 0.0
    %vm4787 = vcmp.gt.f32.partialorder %v4661, 0.0
    %vm4788 = vcmp.gt.f32.partialorder %v4663, 0.0
    %vm4789 = vcmp.gt.f32.partialorder %v4667, 0.0
    %vm4790 = vcmp.gt.f32.partialorder %v4669, 0.0
    %vm4791 = vcmp.gt.f32.partialorder %v4671, 0.0
    %vm4792 = vcmp.gt.f32.partialorder %v4673, 0.0
    %vm4793 = vcmp.gt.f32.partialorder %v4677, 0.0
    %vm4794 = vcmp.gt.f32.partialorder %v4679, 0.0
    %vm4795 = vcmp.gt.f32.partialorder %v4681, 0.0
    %vm4796 = vcmp.gt.f32.partialorder %v4683, 0.0
    %vm4797 = vcmp.gt.f32.partialorder %v4687, 0.0
    %vm4798 = vcmp.gt.f32.partialorder %v4689, 0.0
    %vm4799 = vcmp.gt.f32.partialorder %v4691, 0.0
    %vm4800 = vcmp.gt.f32.partialorder %v4693, 0.0
    %vm4801 = vcmp.gt.f32.partialorder %v4697, 0.0
    %vm4802 = vcmp.gt.f32.partialorder %v4699, 0.0
    %vm4803 = vcmp.gt.f32.partialorder %v4701, 0.0
    %vm4804 = vcmp.gt.f32.partialorder %v4703, 0.0
    %vm4805 = vcmp.gt.f32.partialorder %v4707, 0.0
    %vm4806 = vcmp.gt.f32.partialorder %v4709, 0.0
    %vm4807 = vcmp.gt.f32.partialorder %v4711, 0.0
    %vm4808 = vcmp.gt.f32.partialorder %v4713, 0.0
    %vm4809 = vcmp.gt.f32.partialorder %v4717, 0.0
    %vm4810 = vcmp.gt.f32.partialorder %v4719, 0.0
    %vm4811 = vcmp.gt.f32.partialorder %v4721, 0.0
    %vm4812 = vcmp.gt.f32.partialorder %v4723, 0.0
    %vm4813 = vcmp.gt.f32.partialorder %v4727, 0.0
    %vm4814 = vcmp.gt.f32.partialorder %v4729, 0.0
    %vm4815 = vcmp.gt.f32.partialorder %v4731, 0.0
    %vm4816 = vcmp.gt.f32.partialorder %v4733, 0.0
    %vm4817 = vcmp.gt.f32.partialorder %v4737, 0.0
    %vm4818 = vcmp.gt.f32.partialorder %v4739, 0.0
    %vm4819 = vcmp.gt.f32.partialorder %v4741, 0.0
    %vm4820 = vcmp.gt.f32.partialorder %v4743, 0.0
    %vm4821 = vcmp.gt.f32.partialorder %v4747, 0.0
    %vm4822 = vcmp.gt.f32.partialorder %v4749, 0.0
    %vm4823 = vcmp.gt.f32.partialorder %v4751, 0.0
    %vm4824 = vcmp.gt.f32.partialorder %v4753, 0.0
    %vm4825 = vcmp.gt.f32.partialorder %v4757, 0.0
    %vm4826 = vcmp.gt.f32.partialorder %v4759, 0.0
    %vm4827 = vcmp.gt.f32.partialorder %v4761, 0.0
    %vm4828 = vcmp.gt.f32.partialorder %v4763, 0.0
    %v4829 = vmul.f32 %v4607, 0.2
    %v4830 = vmul.f32 %v4609, 0.2
    %v4831 = vmul.f32 %v4611, 0.2
    %v4832 = vmul.f32 %v4613, 0.2
    %v4833 = vmul.f32 %v4617, 0.2
    %v4834 = vmul.f32 %v4619, 0.2
    %v4835 = vmul.f32 %v4621, 0.2
    %v4836 = vmul.f32 %v4623, 0.2
    %v4837 = vmul.f32 %v4627, 0.2
    %v4838 = vmul.f32 %v4629, 0.2
    %v4839 = vmul.f32 %v4631, 0.2
    %v4840 = vmul.f32 %v4633, 0.2
    %v4841 = vmul.f32 %v4637, 0.2
    %v4842 = vmul.f32 %v4639, 0.2
    %v4843 = vmul.f32 %v4641, 0.2
    %v4844 = vmul.f32 %v4643, 0.2
    %v4845 = vmul.f32 %v4647, 0.2
    %v4846 = vmul.f32 %v4649, 0.2
    %v4847 = vmul.f32 %v4651, 0.2
    %v4848 = vmul.f32 %v4653, 0.2
    %v4849 = vmul.f32 %v4657, 0.2
    %v4850 = vmul.f32 %v4659, 0.2
    %v4851 = vmul.f32 %v4661, 0.2
    %v4852 = vmul.f32 %v4663, 0.2
    %v4853 = vmul.f32 %v4667, 0.2
    %v4854 = vmul.f32 %v4669, 0.2
    %v4855 = vmul.f32 %v4671, 0.2
    %v4856 = vmul.f32 %v4673, 0.2
    %v4857 = vmul.f32 %v4677, 0.2
    %v4858 = vmul.f32 %v4679, 0.2
    %v4859 = vmul.f32 %v4681, 0.2
    %v4860 = vmul.f32 %v4683, 0.2
    %v4861 = vmul.f32 %v4687, 0.2
    %v4862 = vmul.f32 %v4689, 0.2
    %v4863 = vmul.f32 %v4691, 0.2
    %v4864 = vmul.f32 %v4693, 0.2
    %v4865 = vmul.f32 %v4697, 0.2
    %v4866 = vmul.f32 %v4699, 0.2
    %v4867 = vmul.f32 %v4701, 0.2
    %v4868 = vmul.f32 %v4703, 0.2
    %v4869 = vmul.f32 %v4707, 0.2
    %v4870 = vmul.f32 %v4709, 0.2
    %v4871 = vmul.f32 %v4711, 0.2
    %v4872 = vmul.f32 %v4713, 0.2
    %v4873 = vmul.f32 %v4717, 0.2
    %v4874 = vmul.f32 %v4719, 0.2
    %v4875 = vmul.f32 %v4721, 0.2
    %v4876 = vmul.f32 %v4723, 0.2
    %v4877 = vmul.f32 %v4727, 0.2
    %v4878 = vmul.f32 %v4729, 0.2
    %v4879 = vmul.f32 %v4731, 0.2
    %v4880 = vmul.f32 %v4733, 0.2
    %v4881 = vmul.f32 %v4737, 0.2
    %v4882 = vmul.f32 %v4739, 0.2
    %v4883 = vmul.f32 %v4741, 0.2
    %v4884 = vmul.f32 %v4743, 0.2
    %v4885 = vmul.f32 %v4747, 0.2
    %v4886 = vmul.f32 %v4749, 0.2
    %v4887 = vmul.f32 %v4751, 0.2
    %v4888 = vmul.f32 %v4753, 0.2
    %v4889 = vmul.f32 %v4757, 0.2
    %v4890 = vmul.f32 %v4759, 0.2
    %v4891 = vmul.f32 %v4761, 0.2
    %v4892 = vmul.f32 %v4763, 0.2
    %v4893 = vsel %vm4765, %v4607, %v4829
    %v4894 = vsel %vm4766, %v4609, %v4830
    %v4895 = vsel %vm4767, %v4611, %v4831
    %v4896 = vsel %vm4768, %v4613, %v4832
    %v4897 = vsel %vm4769, %v4617, %v4833
    %v4898 = vsel %vm4770, %v4619, %v4834
    %v4899 = vsel %vm4771, %v4621, %v4835
    %v4900 = vsel %vm4772, %v4623, %v4836
    %v4901 = vsel %vm4773, %v4627, %v4837
    %v4902 = vsel %vm4774, %v4629, %v4838
    %v4903 = vsel %vm4775, %v4631, %v4839
    %v4904 = vsel %vm4776, %v4633, %v4840
    %v4905 = vsel %vm4777, %v4637, %v4841
    %v4906 = vsel %vm4778, %v4639, %v4842
    %v4907 = vsel %vm4779, %v4641, %v4843
    %v4908 = vsel %vm4780, %v4643, %v4844
    %v4909 = vsel %vm4781, %v4647, %v4845
    %v4910 = vsel %vm4782, %v4649, %v4846
    %v4911 = vsel %vm4783, %v4651, %v4847
    %v4912 = vsel %vm4784, %v4653, %v4848
    %v4913 = vsel %vm4785, %v4657, %v4849
    %v4914 = vsel %vm4786, %v4659, %v4850
    %v4915 = vsel %vm4787, %v4661, %v4851
    %v4916 = vsel %vm4788, %v4663, %v4852
    %v4917 = vsel %vm4789, %v4667, %v4853
    %v4918 = vsel %vm4790, %v4669, %v4854
    %v4919 = vsel %vm4791, %v4671, %v4855
    %v4920 = vsel %vm4792, %v4673, %v4856
    %v4921 = vsel %vm4793, %v4677, %v4857
    %v4922 = vsel %vm4794, %v4679, %v4858
    %v4923 = vsel %vm4795, %v4681, %v4859
    %v4924 = vsel %vm4796, %v4683, %v4860
    %v4925 = vsel %vm4797, %v4687, %v4861
    %v4926 = vsel %vm4798, %v4689, %v4862
    %v4927 = vsel %vm4799, %v4691, %v4863
    %v4928 = vsel %vm4800, %v4693, %v4864
    %v4929 = vsel %vm4801, %v4697, %v4865
    %v4930 = vsel %vm4802, %v4699, %v4866
    %v4931 = vsel %vm4803, %v4701, %v4867
    %v4932 = vsel %vm4804, %v4703, %v4868
    %v4933 = vsel %vm4805, %v4707, %v4869
    %v4934 = vsel %vm4806, %v4709, %v4870
    %v4935 = vsel %vm4807, %v4711, %v4871
    %v4936 = vsel %vm4808, %v4713, %v4872
    %v4937 = vsel %vm4809, %v4717, %v4873
    %v4938 = vsel %vm4810, %v4719, %v4874
    %v4939 = vsel %vm4811, %v4721, %v4875
    %v4940 = vsel %vm4812, %v4723, %v4876
    %v4941 = vsel %vm4813, %v4727, %v4877
    %v4942 = vsel %vm4814, %v4729, %v4878
    %v4943 = vsel %vm4815, %v4731, %v4879
    %v4944 = vsel %vm4816, %v4733, %v4880
    %v4945 = vsel %vm4817, %v4737, %v4881
    %v4946 = vsel %vm4818, %v4739, %v4882
    %v4947 = vsel %vm4819, %v4741, %v4883
    %v4948 = vsel %vm4820, %v4743, %v4884
    %v4949 = vsel %vm4821, %v4747, %v4885
    %v4950 = vsel %vm4822, %v4749, %v4886
    %v4951 = vsel %vm4823, %v4751, %v4887
    %v4952 = vsel %vm4824, %v4753, %v4888
    %v4953 = vsel %vm4825, %v4757, %v4889
    %v4954 = vsel %vm4826, %v4759, %v4890
    %v4955 = vsel %vm4827, %v4761, %v4891
    %v4956 = vsel %vm4828, %v4763, %v4892
    %v4957 = vpack.c.bf16 %v4895, %v4893
    %v4958 = vpack.c.bf16 %v4896, %v4894
    %v4959 = vpack.c.bf16 %v4899, %v4897
    %v4960 = vpack.c.bf16 %v4900, %v4898
    %v4961 = vpack.c.bf16 %v4903, %v4901
    %v4962 = vpack.c.bf16 %v4904, %v4902
    %v4963 = vpack.c.bf16 %v4907, %v4905
    %v4964 = vpack.c.bf16 %v4908, %v4906
    %v4965 = vpack.c.bf16 %v4911, %v4909
    %v4966 = vpack.c.bf16 %v4912, %v4910
    %v4967 = vpack.c.bf16 %v4915, %v4913
    %v4968 = vpack.c.bf16 %v4916, %v4914
    %v4969 = vpack.c.bf16 %v4919, %v4917
    %v4970 = vpack.c.bf16 %v4920, %v4918
    %v4971 = vpack.c.bf16 %v4923, %v4921
    %v4972 = vpack.c.bf16 %v4924, %v4922
    %v4973 = vpack.c.bf16 %v4927, %v4925
    %v4974 = vpack.c.bf16 %v4928, %v4926
    %v4975 = vpack.c.bf16 %v4931, %v4929
    %v4976 = vpack.c.bf16 %v4932, %v4930
    %v4977 = vpack.c.bf16 %v4935, %v4933
    %v4978 = vpack.c.bf16 %v4936, %v4934
    %v4979 = vpack.c.bf16 %v4939, %v4937
    %v4980 = vpack.c.bf16 %v4940, %v4938
    %v4981 = vpack.c.bf16 %v4943, %v4941
    %v4982 = vpack.c.bf16 %v4944, %v4942
    %v4983 = vpack.c.bf16 %v4947, %v4945
    %v4984 = vpack.c.bf16 %v4948, %v4946
    %v4985 = vpack.c.bf16 %v4951, %v4949
    %v4986 = vpack.c.bf16 %v4952, %v4950
    %v4987 = vpack.c.bf16 %v4955, %v4953
    %v4988 = vpack.c.bf16 %v4956, %v4954
    %v4989 = vld [vmem:[#allocation5] sm:$0xf]
    %v4990 = vld [vmem:[#allocation5 + $0x4] sm:$0xf]
    %v4991 = vld [vmem:[#allocation5 + $0x8] sm:$0xf]
    %v4992 = vld [vmem:[#allocation5 + $0xc] sm:$0xf]
    %v4993 = vld [vmem:[#allocation5 + $0x10] sm:$0xf]
    %v4994 = vld [vmem:[#allocation5 + $0x14] sm:$0xf]
    %v4995 = vld [vmem:[#allocation5 + $0x18] sm:$0xf]
    %v4996 = vld [vmem:[#allocation5 + $0x1c] sm:$0xf]
    %v4997 = vld [vmem:[#allocation5 + $0x20] sm:$0xf]
    %v4998 = vld [vmem:[#allocation5 + $0x24] sm:$0xf]
    %v4999 = vld [vmem:[#allocation5 + $0x28] sm:$0xf]
    %v5000 = vld [vmem:[#allocation5 + $0x2c] sm:$0xf]
    %v5001 = vld [vmem:[#allocation5 + $0x30] sm:$0xf]
    %v5002 = vld [vmem:[#allocation5 + $0x34] sm:$0xf]
    %v5003 = vld [vmem:[#allocation5 + $0x38] sm:$0xf]
    %v5004 = vld [vmem:[#allocation5 + $0x3c] sm:$0xf]
    %v5005 = vld [vmem:[#allocation5 + $0x40] sm:$0xf]
    %v5006 = vld [vmem:[#allocation5 + $0x44] sm:$0xf]
    %v5007 = vld [vmem:[#allocation5 + $0x48] sm:$0xf]
    %v5008 = vld [vmem:[#allocation5 + $0x4c] sm:$0xf]
    %v5009 = vld [vmem:[#allocation5 + $0x50] sm:$0xf]
    %v5010 = vld [vmem:[#allocation5 + $0x54] sm:$0xf]
    %v5011 = vld [vmem:[#allocation5 + $0x58] sm:$0xf]
    %v5012 = vld [vmem:[#allocation5 + $0x5c] sm:$0xf]
    %v5013 = vld [vmem:[#allocation5 + $0x60] sm:$0xf]
    %v5014 = vld [vmem:[#allocation5 + $0x64] sm:$0xf]
    %v5015 = vld [vmem:[#allocation5 + $0x68] sm:$0xf]
    %v5016 = vld [vmem:[#allocation5 + $0x6c] sm:$0xf]
    %v5017 = vld [vmem:[#allocation5 + $0x70] sm:$0xf]
    %v5018 = vld [vmem:[#allocation5 + $0x74] sm:$0xf]
    %v5019 = vld [vmem:[#allocation5 + $0x78] sm:$0xf]
    %v5020 = vld [vmem:[#allocation5 + $0x7c] sm:$0xf]
    %v5021 = vld [vmem:[%s6] sm:$0x1]
    %v5023 = vlaneseq
    %v5024 = vshrl.u32 %v5023, 7
    %v5025 = vsub.s32 0, %v5024
    %v5026 = vrot.slane %v5021, %v5025
    %v5060 = vunpack.c.l.b16 %v4989
    %v5061 = vunpack.c.l.b16 %v4990
    %v5062 = vunpack.c.l.b16 %v4991
    %v5063 = vunpack.c.l.b16 %v4992
    %v5064 = vunpack.c.l.b16 %v4993
    %v5065 = vunpack.c.l.b16 %v4994
    %v5066 = vunpack.c.l.b16 %v4995
    %v5067 = vunpack.c.l.b16 %v4996
    %v5068 = vunpack.c.l.b16 %v4997
    %v5069 = vunpack.c.l.b16 %v4998
    %v5070 = vunpack.c.l.b16 %v4999
    %v5071 = vunpack.c.l.b16 %v5000
    %v5072 = vunpack.c.l.b16 %v5001
    %v5073 = vunpack.c.l.b16 %v5002
    %v5074 = vunpack.c.l.b16 %v5003
    %v5075 = vunpack.c.l.b16 %v5004
    %v5076 = vunpack.c.l.b16 %v5005
    %v5077 = vunpack.c.l.b16 %v5006
    %v5078 = vunpack.c.l.b16 %v5007
    %v5079 = vunpack.c.l.b16 %v5008
    %v5080 = vunpack.c.l.b16 %v5009
    %v5081 = vunpack.c.l.b16 %v5010
    %v5082 = vunpack.c.l.b16 %v5011
    %v5083 = vunpack.c.l.b16 %v5012
    %v5084 = vunpack.c.l.b16 %v5013
    %v5085 = vunpack.c.l.b16 %v5014
    %v5086 = vunpack.c.l.b16 %v5015
    %v5087 = vunpack.c.l.b16 %v5016
    %v5088 = vunpack.c.l.b16 %v5017
    %v5089 = vunpack.c.l.b16 %v5018
    %v5090 = vunpack.c.l.b16 %v5019
    %v5091 = vunpack.c.l.b16 %v5020
    %v5092 = vpack.c.b16 %v5061, %v5060
    %v5093 = vpack.c.b16 %v5063, %v5062
    %v5094 = vpack.c.b16 %v5065, %v5064
    %v5095 = vpack.c.b16 %v5067, %v5066
    %v5096 = vpack.c.b16 %v5069, %v5068
    %v5097 = vpack.c.b16 %v5071, %v5070
    %v5098 = vpack.c.b16 %v5073, %v5072
    %v5099 = vpack.c.b16 %v5075, %v5074
    %v5100 = vpack.c.b16 %v5077, %v5076
    %v5101 = vpack.c.b16 %v5079, %v5078
    %v5102 = vpack.c.b16 %v5081, %v5080
    %v5103 = vpack.c.b16 %v5083, %v5082
    %v5104 = vpack.c.b16 %v5085, %v5084
    %v5105 = vpack.c.b16 %v5087, %v5086
    %v5106 = vpack.c.b16 %v5089, %v5088
    %v5107 = vpack.c.b16 %v5091, %v5090
    %5124 = vmatprep.subr.bf16.mxu0 0
    %5125 = vmatpush1.bf16.msra.mxu0 %v5099
    %5126 = vmatprep.subr.bf16.mxu0 0
    %5127 = vmatpush1.bf16.msra.mxu0 %v5098
    %5128 = vmatprep.subr.bf16.mxu0 0
    %5129 = vmatpush1.bf16.msra.mxu0 %v5097
    %5130 = vmatprep.subr.bf16.mxu0 0
    %5131 = vmatpush1.bf16.msra.mxu0 %v5096
    %5132 = vmatprep.subr.bf16.mxu0 0
    %5133 = vmatpush1.bf16.msra.mxu0 %v5095
    %5134 = vmatprep.subr.bf16.mxu0 0
    %5135 = vmatpush1.bf16.msra.mxu0 %v5094
    %5136 = vmatprep.subr.bf16.mxu0 0
    %5137 = vmatpush1.bf16.msra.mxu0 %v5093
    %5138 = vmatprep.subr.bf16.mxu0 0
    %5139 = vmatpush1.bf16.msra.mxu0 %v5092
    %5140 = vmatprep.subr.bf16.mxu0 0
    %5141 = vmatpush2.bf16.msra.mxu0 %v5107
    %5142 = vmatprep.subr.bf16.mxu0 0
    %5143 = vmatpush2.bf16.msra.mxu0 %v5106
    %5144 = vmatprep.subr.bf16.mxu0 0
    %5145 = vmatpush2.bf16.msra.mxu0 %v5105
    %5146 = vmatprep.subr.bf16.mxu0 0
    %5147 = vmatpush2.bf16.msra.mxu0 %v5104
    %5148 = vmatprep.subr.bf16.mxu0 0
    %5149 = vmatpush2.bf16.msra.mxu0 %v5103
    %5150 = vmatprep.subr.bf16.mxu0 0
    %5151 = vmatpush2.bf16.msra.mxu0 %v5102
    %5152 = vmatprep.subr.bf16.mxu0 0
    %5153 = vmatpush2.bf16.msra.mxu0 %v5101
    %5154 = vmatprep.subr.bf16.mxu0 0
    %5155 = vmatpush2.bf16.msra.mxu0 %v5100
    %5156 = vmatprep.mubr.bf16.mxu0 %v4958
    %5157 = vmatmul.mubr.bf16.gmra.mxu0 %v4957
    %v5158 = vpop.f32.mrf.mxu0
    %v5159 = vadd.f32 %v5026, %v5158
    %v5160 = vpop.f32.mrf.mxu0
    %v5161 = vpop.f32.mrf.mxu0
    %v5162 = vadd.f32 %v5026, %v5161
    %v5163 = vpop.f32.mrf.mxu0
    %5164 = vmatprep.mubr.bf16.mxu0 %v4960
    %5165 = vmatmul.mubr.bf16.gmra.mxu0 %v4959
    %v5166 = vpop.f32.mrf.mxu0
    %v5167 = vadd.f32 %v5026, %v5166
    %v5168 = vpop.f32.mrf.mxu0
    %v5169 = vpop.f32.mrf.mxu0
    %v5170 = vadd.f32 %v5026, %v5169
    %v5171 = vpop.f32.mrf.mxu0
    %5172 = vmatprep.mubr.bf16.mxu0 %v4962
    %5173 = vmatmul.mubr.bf16.gmra.mxu0 %v4961
    %v5174 = vpop.f32.mrf.mxu0
    %v5175 = vadd.f32 %v5026, %v5174
    %v5176 = vpop.f32.mrf.mxu0
    %v5177 = vpop.f32.mrf.mxu0
    %v5178 = vadd.f32 %v5026, %v5177
    %v5179 = vpop.f32.mrf.mxu0
    %5180 = vmatprep.mubr.bf16.mxu0 %v4964
    %5181 = vmatmul.mubr.bf16.gmra.mxu0 %v4963
    %v5182 = vpop.f32.mrf.mxu0
    %v5183 = vadd.f32 %v5026, %v5182
    %v5184 = vpop.f32.mrf.mxu0
    %v5185 = vpop.f32.mrf.mxu0
    %v5186 = vadd.f32 %v5026, %v5185
    %v5187 = vpop.f32.mrf.mxu0
    %5188 = vmatprep.mubr.bf16.mxu0 %v4966
    %5189 = vmatmul.mubr.bf16.gmra.mxu0 %v4965
    %v5190 = vpop.f32.mrf.mxu0
    %v5191 = vadd.f32 %v5026, %v5190
    %v5192 = vpop.f32.mrf.mxu0
    %v5193 = vpop.f32.mrf.mxu0
    %v5194 = vadd.f32 %v5026, %v5193
    %v5195 = vpop.f32.mrf.mxu0
    %5196 = vmatprep.mubr.bf16.mxu0 %v4968
    %5197 = vmatmul.mubr.bf16.gmra.mxu0 %v4967
    %v5198 = vpop.f32.mrf.mxu0
    %v5199 = vadd.f32 %v5026, %v5198
    %v5200 = vpop.f32.mrf.mxu0
    %v5201 = vpop.f32.mrf.mxu0
    %v5202 = vadd.f32 %v5026, %v5201
    %v5203 = vpop.f32.mrf.mxu0
    %5204 = vmatprep.mubr.bf16.mxu0 %v4970
    %5205 = vmatmul.mubr.bf16.gmra.mxu0 %v4969
    %v5206 = vpop.f32.mrf.mxu0
    %v5207 = vadd.f32 %v5026, %v5206
    %v5208 = vpop.f32.mrf.mxu0
    %v5209 = vpop.f32.mrf.mxu0
    %v5210 = vadd.f32 %v5026, %v5209
    %v5211 = vpop.f32.mrf.mxu0
    %5212 = vmatprep.mubr.bf16.mxu0 %v4972
    %5213 = vmatmul.mubr.bf16.gmra.mxu0 %v4971
    %v5214 = vpop.f32.mrf.mxu0
    %v5215 = vadd.f32 %v5026, %v5214
    %v5216 = vpop.f32.mrf.mxu0
    %v5217 = vpop.f32.mrf.mxu0
    %v5218 = vadd.f32 %v5026, %v5217
    %v5219 = vpop.f32.mrf.mxu0
    %5220 = vmatprep.mubr.bf16.mxu0 %v4974
    %5221 = vmatmul.mubr.bf16.gmra.mxu0 %v4973
    %v5222 = vpop.f32.mrf.mxu0
    %v5223 = vadd.f32 %v5026, %v5222
    %v5224 = vpop.f32.mrf.mxu0
    %v5225 = vpop.f32.mrf.mxu0
    %v5226 = vadd.f32 %v5026, %v5225
    %v5227 = vpop.f32.mrf.mxu0
    %5228 = vmatprep.mubr.bf16.mxu0 %v4976
    %5229 = vmatmul.mubr.bf16.gmra.mxu0 %v4975
    %v5230 = vpop.f32.mrf.mxu0
    %v5231 = vadd.f32 %v5026, %v5230
    %v5232 = vpop.f32.mrf.mxu0
    %v5233 = vpop.f32.mrf.mxu0
    %v5234 = vadd.f32 %v5026, %v5233
    %v5235 = vpop.f32.mrf.mxu0
    %5236 = vmatprep.mubr.bf16.mxu0 %v4978
    %5237 = vmatmul.mubr.bf16.gmra.mxu0 %v4977
    %v5238 = vpop.f32.mrf.mxu0
    %v5239 = vadd.f32 %v5026, %v5238
    %v5240 = vpop.f32.mrf.mxu0
    %v5241 = vpop.f32.mrf.mxu0
    %v5242 = vadd.f32 %v5026, %v5241
    %v5243 = vpop.f32.mrf.mxu0
    %5244 = vmatprep.mubr.bf16.mxu0 %v4980
    %5245 = vmatmul.mubr.bf16.gmra.mxu0 %v4979
    %v5246 = vpop.f32.mrf.mxu0
    %v5247 = vadd.f32 %v5026, %v5246
    %v5248 = vpop.f32.mrf.mxu0
    %v5249 = vpop.f32.mrf.mxu0
    %v5250 = vadd.f32 %v5026, %v5249
    %v5251 = vpop.f32.mrf.mxu0
    %5252 = vmatprep.mubr.bf16.mxu0 %v4982
    %5253 = vmatmul.mubr.bf16.gmra.mxu0 %v4981
    %v5254 = vpop.f32.mrf.mxu0
    %v5255 = vadd.f32 %v5026, %v5254
    %v5256 = vpop.f32.mrf.mxu0
    %v5257 = vpop.f32.mrf.mxu0
    %v5258 = vadd.f32 %v5026, %v5257
    %v5259 = vpop.f32.mrf.mxu0
    %5260 = vmatprep.mubr.bf16.mxu0 %v4984
    %5261 = vmatmul.mubr.bf16.gmra.mxu0 %v4983
    %v5262 = vpop.f32.mrf.mxu0
    %v5263 = vadd.f32 %v5026, %v5262
    %v5264 = vpop.f32.mrf.mxu0
    %v5265 = vpop.f32.mrf.mxu0
    %v5266 = vadd.f32 %v5026, %v5265
    %v5267 = vpop.f32.mrf.mxu0
    %5268 = vmatprep.mubr.bf16.mxu0 %v4986
    %5269 = vmatmul.mubr.bf16.gmra.mxu0 %v4985
    %v5270 = vpop.f32.mrf.mxu0
    %v5271 = vadd.f32 %v5026, %v5270
    %v5272 = vpop.f32.mrf.mxu0
    %v5273 = vpop.f32.mrf.mxu0
    %v5274 = vadd.f32 %v5026, %v5273
    %v5275 = vpop.f32.mrf.mxu0
    %5276 = vmatprep.mubr.bf16.mxu0 %v4988
    %5277 = vmatmul.mubr.bf16.gmra.mxu0 %v4987
    %v5278 = vpop.f32.mrf.mxu0
    %v5279 = vadd.f32 %v5026, %v5278
    %v5280 = vpop.f32.mrf.mxu0
    %v5281 = vpop.f32.mrf.mxu0
    %v5282 = vadd.f32 %v5026, %v5281
    %v5283 = vpop.f32.mrf.mxu0
    %5284 = vdwg.mxu0
    %v5285 = vxor.u32 %v5159, 2147483648
    %v5286 = vxor.u32 %v5162, 2147483648
    %v5287 = vxor.u32 %v5167, 2147483648
    %v5288 = vxor.u32 %v5170, 2147483648
    %v5289 = vxor.u32 %v5175, 2147483648
    %v5290 = vxor.u32 %v5178, 2147483648
    %v5291 = vxor.u32 %v5183, 2147483648
    %v5292 = vxor.u32 %v5186, 2147483648
    %v5293 = vxor.u32 %v5191, 2147483648
    %v5294 = vxor.u32 %v5194, 2147483648
    %v5295 = vxor.u32 %v5199, 2147483648
    %v5296 = vxor.u32 %v5202, 2147483648
    %v5297 = vxor.u32 %v5207, 2147483648
    %v5298 = vxor.u32 %v5210, 2147483648
    %v5299 = vxor.u32 %v5215, 2147483648
    %v5300 = vxor.u32 %v5218, 2147483648
    %v5301 = vxor.u32 %v5223, 2147483648
    %v5302 = vxor.u32 %v5226, 2147483648
    %v5303 = vxor.u32 %v5231, 2147483648
    %v5304 = vxor.u32 %v5234, 2147483648
    %v5305 = vxor.u32 %v5239, 2147483648
    %v5306 = vxor.u32 %v5242, 2147483648
    %v5307 = vxor.u32 %v5247, 2147483648
    %v5308 = vxor.u32 %v5250, 2147483648
    %v5309 = vxor.u32 %v5255, 2147483648
    %v5310 = vxor.u32 %v5258, 2147483648
    %v5311 = vxor.u32 %v5263, 2147483648
    %v5312 = vxor.u32 %v5266, 2147483648
    %v5313 = vxor.u32 %v5271, 2147483648
    %v5314 = vxor.u32 %v5274, 2147483648
    %v5315 = vxor.u32 %v5279, 2147483648
    %v5316 = vxor.u32 %v5282, 2147483648
    %v5317 = vmul.f32 %v5285, 1.442695
    %v5318 = vpow.pop %v5317
    %v5319 = vmul.f32 %v5286, 1.442695
    %v5320 = vpow.pop %v5319
    %v5321 = vmul.f32 %v5287, 1.442695
    %v5322 = vpow.pop %v5321
    %v5323 = vmul.f32 %v5288, 1.442695
    %v5324 = vpow.pop %v5323
    %v5325 = vmul.f32 %v5289, 1.442695
    %v5326 = vpow.pop %v5325
    %v5327 = vmul.f32 %v5290, 1.442695
    %v5328 = vpow.pop %v5327
    %v5329 = vmul.f32 %v5291, 1.442695
    %v5330 = vpow.pop %v5329
    %v5331 = vmul.f32 %v5292, 1.442695
    %v5332 = vpow.pop %v5331
    %v5333 = vmul.f32 %v5293, 1.442695
    %v5334 = vpow.pop %v5333
    %v5335 = vmul.f32 %v5294, 1.442695
    %v5336 = vpow.pop %v5335
    %v5337 = vmul.f32 %v5295, 1.442695
    %v5338 = vpow.pop %v5337
    %v5339 = vmul.f32 %v5296, 1.442695
    %v5340 = vpow.pop %v5339
    %v5341 = vmul.f32 %v5297, 1.442695
    %v5342 = vpow.pop %v5341
    %v5343 = vmul.f32 %v5298, 1.442695
    %v5344 = vpow.pop %v5343
    %v5345 = vmul.f32 %v5299, 1.442695
    %v5346 = vpow.pop %v5345
    %v5347 = vmul.f32 %v5300, 1.442695
    %v5348 = vpow.pop %v5347
    %v5349 = vmul.f32 %v5301, 1.442695
    %v5350 = vpow.pop %v5349
    %v5351 = vmul.f32 %v5302, 1.442695
    %v5352 = vpow.pop %v5351
    %v5353 = vmul.f32 %v5303, 1.442695
    %v5354 = vpow.pop %v5353
    %v5355 = vmul.f32 %v5304, 1.442695
    %v5356 = vpow.pop %v5355
    %v5357 = vmul.f32 %v5305, 1.442695
    %v5358 = vpow.pop %v5357
    %v5359 = vmul.f32 %v5306, 1.442695
    %v5360 = vpow.pop %v5359
    %v5361 = vmul.f32 %v5307, 1.442695
    %v5362 = vpow.pop %v5361
    %v5363 = vmul.f32 %v5308, 1.442695
    %v5364 = vpow.pop %v5363
    %v5365 = vmul.f32 %v5309, 1.442695
    %v5366 = vpow.pop %v5365
    %v5367 = vmul.f32 %v5310, 1.442695
    %v5368 = vpow.pop %v5367
    %v5369 = vmul.f32 %v5311, 1.442695
    %v5370 = vpow.pop %v5369
    %v5371 = vmul.f32 %v5312, 1.442695
    %v5372 = vpow.pop %v5371
    %v5373 = vmul.f32 %v5313, 1.442695
    %v5374 = vpow.pop %v5373
    %v5375 = vmul.f32 %v5314, 1.442695
    %v5376 = vpow.pop %v5375
    %v5377 = vmul.f32 %v5315, 1.442695
    %v5378 = vpow.pop %v5377
    %v5379 = vmul.f32 %v5316, 1.442695
    %v5380 = vpow.pop %v5379
    %v5381 = vadd.f32 %v5318, 1.0
    %v5382 = vadd.f32 %v5320, 1.0
    %v5383 = vadd.f32 %v5322, 1.0
    %v5384 = vadd.f32 %v5324, 1.0
    %v5385 = vadd.f32 %v5326, 1.0
    %v5386 = vadd.f32 %v5328, 1.0
    %v5387 = vadd.f32 %v5330, 1.0
    %v5388 = vadd.f32 %v5332, 1.0
    %v5389 = vadd.f32 %v5334, 1.0
    %v5390 = vadd.f32 %v5336, 1.0
    %v5391 = vadd.f32 %v5338, 1.0
    %v5392 = vadd.f32 %v5340, 1.0
    %v5393 = vadd.f32 %v5342, 1.0
    %v5394 = vadd.f32 %v5344, 1.0
    %v5395 = vadd.f32 %v5346, 1.0
    %v5396 = vadd.f32 %v5348, 1.0
    %v5397 = vadd.f32 %v5350, 1.0
    %v5398 = vadd.f32 %v5352, 1.0
    %v5399 = vadd.f32 %v5354, 1.0
    %v5400 = vadd.f32 %v5356, 1.0
    %v5401 = vadd.f32 %v5358, 1.0
    %v5402 = vadd.f32 %v5360, 1.0
    %v5403 = vadd.f32 %v5362, 1.0
    %v5404 = vadd.f32 %v5364, 1.0
    %v5405 = vadd.f32 %v5366, 1.0
    %v5406 = vadd.f32 %v5368, 1.0
    %v5407 = vadd.f32 %v5370, 1.0
    %v5408 = vadd.f32 %v5372, 1.0
    %v5409 = vadd.f32 %v5374, 1.0
    %v5410 = vadd.f32 %v5376, 1.0
    %v5411 = vadd.f32 %v5378, 1.0
    %v5412 = vadd.f32 %v5380, 1.0
    %v5413 = vrcp.pop %v5381
    %v5414 = vmul.f32 1.0, %v5413
    %v5415 = vrcp.pop %v5382
    %v5416 = vmul.f32 1.0, %v5415
    %v5417 = vrcp.pop %v5383
    %v5418 = vmul.f32 1.0, %v5417
    %v5419 = vrcp.pop %v5384
    %v5420 = vmul.f32 1.0, %v5419
    %v5421 = vrcp.pop %v5385
    %v5422 = vmul.f32 1.0, %v5421
    %v5423 = vrcp.pop %v5386
    %v5424 = vmul.f32 1.0, %v5423
    %v5425 = vrcp.pop %v5387
    %v5426 = vmul.f32 1.0, %v5425
    %v5427 = vrcp.pop %v5388
    %v5428 = vmul.f32 1.0, %v5427
    %v5429 = vrcp.pop %v5389
    %v5430 = vmul.f32 1.0, %v5429
    %v5431 = vrcp.pop %v5390
    %v5432 = vmul.f32 1.0, %v5431
    %v5433 = vrcp.pop %v5391
    %v5434 = vmul.f32 1.0, %v5433
    %v5435 = vrcp.pop %v5392
    %v5436 = vmul.f32 1.0, %v5435
    %v5437 = vrcp.pop %v5393
    %v5438 = vmul.f32 1.0, %v5437
    %v5439 = vrcp.pop %v5394
    %v5440 = vmul.f32 1.0, %v5439
    %v5441 = vrcp.pop %v5395
    %v5442 = vmul.f32 1.0, %v5441
    %v5443 = vrcp.pop %v5396
    %v5444 = vmul.f32 1.0, %v5443
    %v5445 = vrcp.pop %v5397
    %v5446 = vmul.f32 1.0, %v5445
    %v5447 = vrcp.pop %v5398
    %v5448 = vmul.f32 1.0, %v5447
    %v5449 = vrcp.pop %v5399
    %v5450 = vmul.f32 1.0, %v5449
    %v5451 = vrcp.pop %v5400
    %v5452 = vmul.f32 1.0, %v5451
    %v5453 = vrcp.pop %v5401
    %v5454 = vmul.f32 1.0, %v5453
    %v5455 = vrcp.pop %v5402
    %v5456 = vmul.f32 1.0, %v5455
    %v5457 = vrcp.pop %v5403
    %v5458 = vmul.f32 1.0, %v5457
    %v5459 = vrcp.pop %v5404
    %v5460 = vmul.f32 1.0, %v5459
    %v5461 = vrcp.pop %v5405
    %v5462 = vmul.f32 1.0, %v5461
    %v5463 = vrcp.pop %v5406
    %v5464 = vmul.f32 1.0, %v5463
    %v5465 = vrcp.pop %v5407
    %v5466 = vmul.f32 1.0, %v5465
    %v5467 = vrcp.pop %v5408
    %v5468 = vmul.f32 1.0, %v5467
    %v5469 = vrcp.pop %v5409
    %v5470 = vmul.f32 1.0, %v5469
    %v5471 = vrcp.pop %v5410
    %v5472 = vmul.f32 1.0, %v5471
    %v5473 = vrcp.pop %v5411
    %v5474 = vmul.f32 1.0, %v5473
    %v5475 = vrcp.pop %v5412
    %v5476 = vmul.f32 1.0, %v5475
    %5477 = vst [vmem:[#allocation7] sm:$0xff] %v5414
    %5478 = vst [vmem:[#allocation7 + $0x8] sm:$0xff] %v5416
    %5479 = vst [vmem:[#allocation7 + $0x10] sm:$0xff] %v5418
    %5480 = vst [vmem:[#allocation7 + $0x18] sm:$0xff] %v5420
    %5481 = vst [vmem:[#allocation7 + $0x20] sm:$0xff] %v5422
    %5482 = vst [vmem:[#allocation7 + $0x28] sm:$0xff] %v5424
    %5483 = vst [vmem:[#allocation7 + $0x30] sm:$0xff] %v5426
    %5484 = vst [vmem:[#allocation7 + $0x38] sm:$0xff] %v5428
    %5485 = vst [vmem:[#allocation7 + $0x40] sm:$0xff] %v5430
    %5486 = vst [vmem:[#allocation7 + $0x48] sm:$0xff] %v5432
    %5487 = vst [vmem:[#allocation7 + $0x50] sm:$0xff] %v5434
    %5488 = vst [vmem:[#allocation7 + $0x58] sm:$0xff] %v5436
    %5489 = vst [vmem:[#allocation7 + $0x60] sm:$0xff] %v5438
    %5490 = vst [vmem:[#allocation7 + $0x68] sm:$0xff] %v5440
    %5491 = vst [vmem:[#allocation7 + $0x70] sm:$0xff] %v5442
    %5492 = vst [vmem:[#allocation7 + $0x78] sm:$0xff] %v5444
    %5493 = vst [vmem:[#allocation7 + $0x80] sm:$0xff] %v5446
    %5494 = vst [vmem:[#allocation7 + $0x88] sm:$0xff] %v5448
    %5495 = vst [vmem:[#allocation7 + $0x90] sm:$0xff] %v5450
    %5496 = vst [vmem:[#allocation7 + $0x98] sm:$0xff] %v5452
    %5497 = vst [vmem:[#allocation7 + $0xa0] sm:$0xff] %v5454
    %5498 = vst [vmem:[#allocation7 + $0xa8] sm:$0xff] %v5456
    %5499 = vst [vmem:[#allocation7 + $0xb0] sm:$0xff] %v5458
    %5500 = vst [vmem:[#allocation7 + $0xb8] sm:$0xff] %v5460
    %5501 = vst [vmem:[#allocation7 + $0xc0] sm:$0xff] %v5462
    %5502 = vst [vmem:[#allocation7 + $0xc8] sm:$0xff] %v5464
    %5503 = vst [vmem:[#allocation7 + $0xd0] sm:$0xff] %v5466
    %5504 = vst [vmem:[#allocation7 + $0xd8] sm:$0xff] %v5468
    %5505 = vst [vmem:[#allocation7 + $0xe0] sm:$0xff] %v5470
    %5506 = vst [vmem:[#allocation7 + $0xe8] sm:$0xff] %v5472
    %5507 = vst [vmem:[#allocation7 + $0xf0] sm:$0xff] %v5474
    %5508 = vst [vmem:[#allocation7 + $0xf8] sm:$0xff] %v5476
    // Predicated region
    $region38: #{tpu_custom_call.1} parent=1 // pred_check
      _
    $region39: #{tpu_custom_call.1} parent=1 // pred_check_branch
      %5510 = sbr.rel (0) target = $region41
    $region40: #{tpu_custom_call.1} parent=1 // pred_region
      %s5512 = ssub.s32 4096, 4096
      %5513 = vsyncadd [#allocation4], %s5512
      %s5514 = sshll.u32 [#allocation7], 4
      %s5515 = int_to_ptr.vmem [resolvable:$true] %s5514
      %5520 = dma.vmem_to_hbm [thread:$0]  %s5515, 4096, %s7, [#allocation4], 128, 128, 8
    $region41: #{tpu_custom_call.1} parent=1 // pred_fallthru
      _
    // Predicated region
    $region42: #{tpu_custom_call.1} parent=1 // pred_check
      _
    $region43: #{tpu_custom_call.1} parent=1 // pred_check_branch
      %5522 = sbr.rel (0) target = $region45
    $region44: #{tpu_custom_call.1} parent=1 // pred_region
      %5523 = dma.done [#allocation4], 4096
    $region45: #{tpu_custom_call.1} parent=1 // pred_fallthru
      _
    %5524 = vsyncpa [#allocation3], 1
    %5525 = vsyncpa [#allocation6], 1
    %5526 = vsyncpa [#allocation4], 1

</llo_original>
